<compile_context>
chip_gen: v7x
topology: tpu7x:2x2x1
jax: 0.10.0
libtpu: 0.0.40
codegen_flags: <defaults>
</compile_context>

<pallas_src>
import jax
import jax.numpy as jnp
from jax.experimental import pallas as pl
from jax.experimental.pallas import tpu as pltpu

# ---- small, module-consistent shapes -------------------------------------
GENOME_DIM = 16
EMBED_DIM = 32
NUM_HEADS = 4
HEAD_DIM = EMBED_DIM // NUM_HEADS
M_BASES = 16
HIDDEN_DIM = 32            # 4 * HIDDEN_DIM = 128 -> lane-dense hypernet hidden
FF_DIM = 4 * EMBED_DIM
B = 2
T = 8
LN_EPS = 1e-5


# ---- in-kernel helpers -----------------------------------------------------
def _erf(x):
    # Abramowitz & Stegun 7.1.26 rational approximation (max abs err ~1.5e-7),
    # i.e. fp32-exact for our purposes; used for torch's exact (erf-based) nn.GELU().
    a1, a2, a3, a4, a5 = 0.254829592, -0.284496736, 1.421413741, -1.453152027, 1.061405429
    pc = 0.3275911
    ax = jnp.abs(x)
    t = 1.0 / (1.0 + pc * ax)
    poly = ((((a5 * t + a4) * t + a3) * t + a2) * t + a1) * t
    y = 1.0 - poly * jnp.exp(-ax * ax)
    return jnp.where(x >= 0, y, -y)


def _gelu(x):
    return 0.5 * x * (1.0 + _erf(x * 0.7071067811865476))


def _layernorm(v, g, b):
    mu = jnp.mean(v, axis=-1, keepdims=True)
    c = v - mu
    var = jnp.mean(c * c, axis=-1, keepdims=True)
    return c * jax.lax.rsqrt(var + LN_EPS) * g + b


# ---- the fused kernel -------------------------------------------------------
def fused_kernel(z_ref, x_ref,
                 w1c_ref, b1c_ref, whyp_ref, bhyp_ref, bases_ref,
                 wff1_ref, bff1_ref, wff2_ref, bff2_ref,
                 g1_ref, be1_ref, g2_ref, be2_ref,
                 o_ref):
    bb, Tn, E = x_ref.shape          # static batch-block (1 on multi-TC, B on single-TC)
    M, D, H = M_BASES, HEAD_DIM, NUM_HEADS
    E4 = 4 * E
    scale = 1.0 / (D ** 0.5)

    # ---- hypernetwork stage: all 4 projections (q,k,v,o), whole batch block, 2 matmuls ----
    z_all = jnp.concatenate([z_ref[b] for b in range(bb)], axis=0)          # (bb, G)
    h = jnp.maximum(
        jnp.dot(z_all, w1c_ref[...], preferred_element_type=jnp.float32) + b1c_ref[...],
        0.0)                                                                 # (bb, 4H=128)
    hyp = jnp.dot(h, whyp_ref[...], preferred_element_type=jnp.float32) + bhyp_ref[...]
    # hyp row layout: [ bq|bk|bv|bo  (4E lanes) | coef-rows (M*4E lanes) ]
    # coef-rows[m*4E + k*E + i] == coef_k[m]; the m-major permutation + lane expansion were
    # folded into whyp at init (mathematically identical: it only duplicates output columns).

    xa_list = []
    for b in range(bb):                      # static unroll over batch elements in this block
        bias = hyp[b:b + 1, 0:E4]                                            # (1, 4E)
        crep = hyp[b:b + 1, E4:]                                             # (1, M*4E)

        # ---- lane-dense weight generation: W_all = [Wq|Wk|Wv|Wo] built as one (E,4E) slab ----
        # 16 full-128-lane multiply-accumulates; lands directly in (contract sublane, out lane)
        # layout for the x @ W_all matmul below — no in-kernel relayout anywhere.
        W_all = crep[:, 0:E4] * bases_ref[0]
        for m in range(1, M):
            W_all = W_all + crep[:, m * E4:(m + 1) * E4] * bases_ref[m]      # (E, 4E)

        # ---- fused Q|K|V projection: one MXU matmul (the x@Wo columns are simply unused) ----
        x = x_ref[b]                                                         # (T, E)
        # torch einsum 'bei,bte->bti'  <=>  x @ W (contract over W's first axis)
        qkv = jnp.dot(x, W_all, preferred_element_type=jnp.float32) + bias   # (T, 4E)
        Wo = W_all[:, 3 * E:E4]                                              # (E, E)
        bo = bias[:, 3 * E:E4]                                               # (1, E)

        # ---- per-head attention; heads re-assemble at their natural lane offsets ----
        hv_list = []
        for hh in range(H):
            lo = hh * D
            qh = qkv[:, lo:lo + D]
            kh = qkv[:, E + lo:E + lo + D]
            vh = qkv[:, 2 * E + lo:2 * E + lo + D]
            s = jax.lax.dot_general(qh, kh, (((1,), (1,)), ((), ())),
                                    preferred_element_type=jnp.float32) * scale   # (T, T)
            s = s - jnp.max(s, axis=-1, keepdims=True)
            p = jnp.exp(s)
            p = p * pl.reciprocal(jnp.sum(p, axis=-1, keepdims=True), approx=True)
            hv_list.append(jnp.dot(p, vh, preferred_element_type=jnp.float32))     # (T, D)
        hv = jnp.concatenate(hv_list, axis=1)                                # (T, E) concat-heads
        attn = jnp.dot(hv, Wo, preferred_element_type=jnp.float32) + bo      # (T, E)
        xa_list.append(x + attn)

    # ---- batch-shared LayerNorm1 + FFN (exact GELU) + LayerNorm2, once on (bb*T, E) ----
    xa = jnp.concatenate(xa_list, axis=0) if bb > 1 else xa_list[0]
    x1 = _layernorm(xa, g1_ref[...], be1_ref[...])
    f = jnp.dot(x1, wff1_ref[...], preferred_element_type=jnp.float32) + bff1_ref[...]
    f = _gelu(f)
    f = jnp.dot(f, wff2_ref[...], preferred_element_type=jnp.float32) + bff2_ref[...]
    y = _layernorm(x1 + f, g2_ref[...], be2_ref[...])
    for b in range(bb):
        o_ref[b] = y[b * Tn:(b + 1) * Tn]


# ---- wrappers ---------------------------------------------------------------
def _bcast_spec(a):
    r = a.ndim
    return pl.BlockSpec(a.shape, lambda i, _r=r: (0,) * _r)


def _num_tensorcores():
    """TensorCores per device. Perf dispatch only; numerics are unaffected by the answer."""
    try:
        info = pltpu.get_tpu_info()
        for a in ("num_cores", "num_tensorcores", "tensorcores_per_chip",
                  "tensor_cores_per_chip", "cores_per_chip", "core_count"):
            try:
                v = int(getattr(info, a))
            except Exception:
                continue
            if v > 0:
                return v
    except Exception:
        pass
    kind = ""
    try:
        dev = jax.devices()[0]
        for a in ("num_cores", "core_count"):
            try:
                v = int(getattr(dev, a))
            except Exception:
                continue
            if v > 0:
                return v
        kind = dev.device_kind.lower()
    except Exception:
        pass
    # v4 megacore / v7x expose 2 TensorCores per device; match loosely ("TPU7x", "TPU v4", ...).
    if any(s in kind for s in ("v7", "7x", "tpu7", "v4")):
        return 2
    return 1


def _batch_block(Bn):
    # Multi-TC chips (v7x, v4 megacore): per-batch "parallel" grid so each core takes one
    # element.  Single-TC v5e/v6e: fold the whole batch into one grid step (no per-step tax).
    # TODO(synk): on real v7x, also benchmark the folded bb=B variant — at ~1-2 us of work per
    # element the 2-core split may be a wash; keep whichever the xprof trace prefers.
    return 1 if (_num_tensorcores() >= 2 and Bn > 1) else Bn


def pack_params(p):
    """Init-time repack of the per-layer hyper params into a kernel-friendly, lane-dense layout."""
    G, H, E, MM = GENOME_DIM, HIDDEN_DIM, EMBED_DIM, M_BASES
    # fc1 of the 4 hyper layers (q,k,v,o), concatenated along the output axis -> (G, 4H)
    w1c = jnp.transpose(p['w1'], (1, 0, 2)).reshape(G, 4 * H)
    b1c = p['b1'].reshape(1, 4 * H)
    # block-diagonal fc_bias / fc_coef heads
    wbb = jnp.zeros((4 * H, 4 * E), jnp.float32)
    wcb = jnp.zeros((4 * H, 4 * MM), jnp.float32)
    for k in range(4):
        wbb = wbb.at[k * H:(k + 1) * H, k * E:(k + 1) * E].set(p['wb'][k])
        wcb = wcb.at[k * H:(k + 1) * H, k * MM:(k + 1) * MM].set(p['wc'][k])
    bbb = p['bb'].reshape(1, 4 * E)
    bcb = p['bc'].reshape(1, 4 * MM)
    # coef columns -> m-major order (col = m*4 + k), then lane-expand every column E times so
    # the hypernet head directly emits the per-term (1, 4E) coefficient rows used by the
    # in-kernel weight generation (duplicating output columns is numerically identical).
    perm = jnp.array([k * MM + m for m in range(MM) for k in range(4)], jnp.int32)
    wcrep = jnp.repeat(wcb[:, perm], E, axis=1)                     # (4H, MM*4E) = (128, 2048)
    bcrep = jnp.repeat(bcb[:, perm], E, axis=1)                     # (1,  MM*4E)
    w_hyp = jnp.concatenate([wbb, wcrep], axis=1)                   # (128, 4E + MM*4E) = (128, 2176)
    b_hyp = jnp.concatenate([bbb, bcrep], axis=1)                   # (1, 2176)
    # bases packed lane-dense: (M, E_out, 4*E_in) with q|k|v|o concatenated along lanes
    bases4 = p['bases'].reshape(4, MM, E, E)
    bases_pack = jnp.transpose(bases4, (1, 2, 0, 3)).reshape(MM, E, 4 * E)
    return dict(w1c=w1c, b1c=b1c, w_hyp=w_hyp, b_hyp=b_hyp, bases_pack=bases_pack)


def tiny_transformer_layer(x, z, params, packed):
    Bn, Tn, E = x.shape
    bb = _batch_block(Bn)
    grid = (Bn // bb,)
    z3 = z.reshape(Bn, 1, GENOME_DIM)
    consts = [packed['w1c'], packed['b1c'], packed['w_hyp'], packed['b_hyp'],
              packed['bases_pack'],
              params['wff1'], params['bff1'], params['wff2'], params['bff2'],
              params['g1'], params['be1'], params['g2'], params['be2']]
    sem = ("arbitrary",) if grid[0] == 1 else ("parallel",)
    return pl.pallas_call(
        fused_kernel,
        out_shape=jax.ShapeDtypeStruct((Bn, Tn, E), jnp.float32),
        grid_spec=pltpu.PrefetchScalarGridSpec(
            num_scalar_prefetch=0,
            grid=grid,
            in_specs=[pl.BlockSpec((bb, 1, GENOME_DIM), lambda i: (i, 0, 0)),
                      pl.BlockSpec((bb, Tn, E), lambda i: (i, 0, 0))]
                     + [_bcast_spec(a) for a in consts],
            out_specs=pl.BlockSpec((bb, Tn, E), lambda i: (i, 0, 0)),
        ),
        compiler_params=pltpu.CompilerParams(dimension_semantics=sem),
    )(z3, x, *consts)


# ---- deterministic parameter init (synthetic; shapes from module __init__) --
def init_params(key):
    ks = jax.random.split(key, 12)
    G, H, E, MM, F = GENOME_DIM, HIDDEN_DIM, EMBED_DIM, M_BASES, FF_DIM
    n = lambda k, shape, s: (jax.random.normal(k, shape, jnp.float32) * s)
    return dict(
        # one set of hypernetwork params per projection (q, k, v, o) stacked on axis 0
        w1=n(ks[0], (4, G, H), 1.0 / (G ** 0.5)),
        b1=n(ks[1], (4, H), 0.02),
        wc=n(ks[2], (4, H, MM), 1.0 / (H ** 0.5)),
        bc=n(ks[3], (4, MM), 0.02),
        wb=n(ks[4], (4, H, E), 1.0 / (H ** 0.5)),
        bb=n(ks[5], (4, E), 0.02),
        bases=n(ks[6], (4, MM, E * E), 0.02),      # randn * 0.02, flattened (out,in)
        wff1=n(ks[7], (E, F), 1.0 / (E ** 0.5)),
        bff1=n(ks[8], (1, F), 0.02),
        wff2=n(ks[9], (F, E), 1.0 / (F ** 0.5)),
        bff2=n(ks[10], (1, E), 0.02),
        g1=jnp.ones((1, E), jnp.float32),
        be1=jnp.zeros((1, E), jnp.float32),
        g2=jnp.ones((1, E), jnp.float32),
        be2=jnp.zeros((1, E), jnp.float32),
    )


# ---- pure-JAX reference (mirrors the torch forward exactly) ------------------
def reference(x, z, p):
    Bn, Tn, E = x.shape
    Ws, bs = [], []
    for k in range(4):
        h = jax.nn.relu(z @ p['w1'][k] + p['b1'][k])
        coef = h @ p['wc'][k] + p['bc'][k]
        bias = h @ p['wb'][k] + p['bb'][k]
        bases = p['bases'][k].reshape(M_BASES, E, E)
        Ws.append(jnp.einsum('bm,moi->boi', coef, bases))
        bs.append(bias)
    Wq, Wk, Wv, Wo = Ws
    bq, bk, bv, bo = bs
    Q = jnp.einsum('bei,bte->bti', Wq, x) + bq[:, None, :]
    K = jnp.einsum('bei,bte->bti', Wk, x) + bk[:, None, :]
    V = jnp.einsum('bei,bte->bti', Wv, x) + bv[:, None, :]
    split = lambda t: t.reshape(Bn, Tn, NUM_HEADS, HEAD_DIM).transpose(0, 2, 1, 3)
    Qh, Kh, Vh = split(Q), split(K), split(V)
    scores = Qh @ Kh.transpose(0, 1, 3, 2) / (HEAD_DIM ** 0.5)
    w = jax.nn.softmax(scores, axis=-1)
    out = (w @ Vh).transpose(0, 2, 1, 3).reshape(Bn, Tn, E)
    out = jnp.einsum('bei,bte->bti', Wo, out) + bo[:, None, :]

    def ln(v, g, b):
        mu = v.mean(-1, keepdims=True)
        var = ((v - mu) ** 2).mean(-1, keepdims=True)
        return (v - mu) / jnp.sqrt(var + LN_EPS) * g + b

    x1 = ln(x + out, p['g1'][0], p['be1'][0])
    f = jax.nn.gelu(x1 @ p['wff1'] + p['bff1'], approximate=False)
    f = f @ p['wff2'] + p['bff2']
    return ln(x1 + f, p['g2'][0], p['be2'][0])


if __name__ == "__main__":
    key = jax.random.PRNGKey(0)
    kx, kz, kp = jax.random.split(key, 3)
    x = jax.random.normal(kx, (B, T, EMBED_DIM), jnp.float32)
    z = jax.random.normal(kz, (B, GENOME_DIM), jnp.float32)
    params = init_params(kp)
    packed = pack_params(params)

    out = tiny_transformer_layer(x, z, params, packed)
    out = jax.block_until_ready(out)

    ref = reference(x, z, params)
    assert out.shape == (B, T, EMBED_DIM)
    assert bool(jnp.all(jnp.isfinite(out)))
    err = float(jnp.max(jnp.abs(out - ref)))
    assert err < 5e-3, f"max abs err too large: {err}"
    print("KERNEL_OK")
</pallas_src>

<mosaic_0001>
module attributes {stable_mosaic.version = 11 : i64} {
  func.func @fused_kernel(%arg0: i32, %arg1: memref<2x1x16xf32, #tpu.memory_space<vmem>>, %arg2: memref<2x8x32xf32, #tpu.memory_space<vmem>>, %arg3: memref<16x128xf32, #tpu.memory_space<vmem>>, %arg4: memref<1x128xf32, #tpu.memory_space<vmem>>, %arg5: memref<128x2176xf32, #tpu.memory_space<vmem>>, %arg6: memref<1x2176xf32, #tpu.memory_space<vmem>>, %arg7: memref<16x32x128xf32, #tpu.memory_space<vmem>>, %arg8: memref<32x128xf32, #tpu.memory_space<vmem>>, %arg9: memref<1x128xf32, #tpu.memory_space<vmem>>, %arg10: memref<128x32xf32, #tpu.memory_space<vmem>>, %arg11: memref<1x32xf32, #tpu.memory_space<vmem>>, %arg12: memref<1x32xf32, #tpu.memory_space<vmem>>, %arg13: memref<1x32xf32, #tpu.memory_space<vmem>>, %arg14: memref<1x32xf32, #tpu.memory_space<vmem>>, %arg15: memref<1x32xf32, #tpu.memory_space<vmem>>, %arg16: memref<2x8x32xf32, #tpu.memory_space<vmem>>) attributes {dimension_semantics = [#tpu.dimension_semantics<arbitrary>], iteration_bounds = array<i64: 1>, scalar_prefetch = 0 : i64, scratch_operands = 0 : i64, tpu.core_type = #tpu.core_type<tc>, window_params = [{transform_indices = @transform_0, window_bounds = array<i64: 2, 1, 16>}, {transform_indices = @transform_1, window_bounds = array<i64: 2, 8, 32>}, {pipeline_mode = #tpu.pipeline_mode<synchronous>, transform_indices = @transform_2, window_bounds = array<i64: 16, 128>}, {pipeline_mode = #tpu.pipeline_mode<synchronous>, transform_indices = @transform_3, window_bounds = array<i64: 1, 128>}, {pipeline_mode = #tpu.pipeline_mode<synchronous>, transform_indices = @transform_4, window_bounds = array<i64: 128, 2176>}, {pipeline_mode = #tpu.pipeline_mode<synchronous>, transform_indices = @transform_5, window_bounds = array<i64: 1, 2176>}, {pipeline_mode = #tpu.pipeline_mode<synchronous>, transform_indices = @transform_6, window_bounds = array<i64: 16, 32, 128>}, {pipeline_mode = #tpu.pipeline_mode<synchronous>, transform_indices = @transform_7, window_bounds = array<i64: 32, 128>}, {pipeline_mode = #tpu.pipeline_mode<synchronous>, transform_indices = @transform_8, window_bounds = array<i64: 1, 128>}, {pipeline_mode = #tpu.pipeline_mode<synchronous>, transform_indices = @transform_9, window_bounds = array<i64: 128, 32>}, {pipeline_mode = #tpu.pipeline_mode<synchronous>, transform_indices = @transform_10, window_bounds = array<i64: 1, 32>}, {pipeline_mode = #tpu.pipeline_mode<synchronous>, transform_indices = @transform_11, window_bounds = array<i64: 1, 32>}, {pipeline_mode = #tpu.pipeline_mode<synchronous>, transform_indices = @transform_12, window_bounds = array<i64: 1, 32>}, {pipeline_mode = #tpu.pipeline_mode<synchronous>, transform_indices = @transform_13, window_bounds = array<i64: 1, 32>}, {pipeline_mode = #tpu.pipeline_mode<synchronous>, transform_indices = @transform_14, window_bounds = array<i64: 1, 32>}, {transform_indices = @transform_15, window_bounds = array<i64: 2, 8, 32>}]} {
    %c0 = arith.constant 0 : index
    %c0_0 = arith.constant 0 : index
    %c0_1 = arith.constant 0 : index
    %0 = vector.load %arg1[%c0, %c0_0, %c0_1] : memref<2x1x16xf32, #tpu.memory_space<vmem>>, vector<1x1x16xf32>
    %1 = vector.shape_cast %0 : vector<1x1x16xf32> to vector<1x16xf32>
    %c1 = arith.constant 1 : index
    %c0_2 = arith.constant 0 : index
    %c0_3 = arith.constant 0 : index
    %2 = vector.load %arg1[%c1, %c0_2, %c0_3] : memref<2x1x16xf32, #tpu.memory_space<vmem>>, vector<1x1x16xf32>
    %3 = vector.shape_cast %2 : vector<1x1x16xf32> to vector<1x16xf32>
    %4 = tpu.concatenate %1, %3 in 0 : vector<1x16xf32>, vector<1x16xf32> -> vector<2x16xf32>
    %c0_4 = arith.constant 0 : index
    %c0_5 = arith.constant 0 : index
    %5 = vector.load %arg3[%c0_4, %c0_5] : memref<16x128xf32, #tpu.memory_space<vmem>>, vector<16x128xf32>
    %cst = arith.constant dense<0.000000e+00> : vector<2x128xf32>
    %6 = tpu.matmul %4, %5, %cst {dimension_numbers = #tpu.dot_dimension_numbers<[1], [0], [0], [1], [0, 0, 1, 1], [], []>} : vector<2x16xf32>, vector<16x128xf32>, vector<2x128xf32> -> vector<2x128xf32>
    %c0_6 = arith.constant 0 : index
    %c0_7 = arith.constant 0 : index
    %7 = vector.load %arg4[%c0_6, %c0_7] : memref<1x128xf32, #tpu.memory_space<vmem>>, vector<1x128xf32>
    %8 = vector.broadcast %7 : vector<1x128xf32> to vector<2x128xf32>
    %9 = arith.addf %6, %8 : vector<2x128xf32>
    %cst_8 = arith.constant 0.000000e+00 : f32
    %10 = vector.broadcast %cst_8 : f32 to vector<2x128xf32>
    %11 = arith.maximumf %9, %10 : vector<2x128xf32>
    %c0_9 = arith.constant 0 : index
    %c0_10 = arith.constant 0 : index
    %12 = vector.load %arg5[%c0_9, %c0_10] : memref<128x2176xf32, #tpu.memory_space<vmem>>, vector<128x2176xf32>
    %cst_11 = arith.constant dense<0.000000e+00> : vector<2x2176xf32>
    %13 = tpu.matmul %11, %12, %cst_11 {dimension_numbers = #tpu.dot_dimension_numbers<[1], [0], [0], [1], [0, 0, 1, 1], [], []>} : vector<2x128xf32>, vector<128x2176xf32>, vector<2x2176xf32> -> vector<2x2176xf32>
    %c0_12 = arith.constant 0 : index
    %c0_13 = arith.constant 0 : index
    %14 = vector.load %arg6[%c0_12, %c0_13] : memref<1x2176xf32, #tpu.memory_space<vmem>>, vector<1x2176xf32>
    %15 = vector.broadcast %14 : vector<1x2176xf32> to vector<2x2176xf32>
    %16 = arith.addf %13, %15 : vector<2x2176xf32>
    %17 = vector.extract_strided_slice %16 {offsets = [0, 0], sizes = [1, 128], strides = [1, 1]} : vector<2x2176xf32> to vector<1x128xf32>
    %18 = vector.extract_strided_slice %16 {offsets = [0, 128], sizes = [1, 2048], strides = [1, 1]} : vector<2x2176xf32> to vector<1x2048xf32>
    %19 = vector.extract_strided_slice %18 {offsets = [0, 0], sizes = [1, 128], strides = [1, 1]} : vector<1x2048xf32> to vector<1x128xf32>
    %c0_14 = arith.constant 0 : index
    %c0_15 = arith.constant 0 : index
    %c0_16 = arith.constant 0 : index
    %20 = vector.load %arg7[%c0_14, %c0_15, %c0_16] : memref<16x32x128xf32, #tpu.memory_space<vmem>>, vector<1x32x128xf32>
    %21 = vector.shape_cast %20 : vector<1x32x128xf32> to vector<32x128xf32>
    %22 = vector.broadcast %19 : vector<1x128xf32> to vector<32x128xf32>
    %23 = arith.mulf %22, %21 : vector<32x128xf32>
    %24 = vector.extract_strided_slice %18 {offsets = [0, 128], sizes = [1, 128], strides = [1, 1]} : vector<1x2048xf32> to vector<1x128xf32>
    %c1_17 = arith.constant 1 : index
    %c0_18 = arith.constant 0 : index
    %c0_19 = arith.constant 0 : index
    %25 = vector.load %arg7[%c1_17, %c0_18, %c0_19] : memref<16x32x128xf32, #tpu.memory_space<vmem>>, vector<1x32x128xf32>
    %26 = vector.shape_cast %25 : vector<1x32x128xf32> to vector<32x128xf32>
    %27 = vector.broadcast %24 : vector<1x128xf32> to vector<32x128xf32>
    %28 = arith.mulf %27, %26 : vector<32x128xf32>
    %29 = arith.addf %23, %28 : vector<32x128xf32>
    %30 = vector.extract_strided_slice %18 {offsets = [0, 256], sizes = [1, 128], strides = [1, 1]} : vector<1x2048xf32> to vector<1x128xf32>
    %c2 = arith.constant 2 : index
    %c0_20 = arith.constant 0 : index
    %c0_21 = arith.constant 0 : index
    %31 = vector.load %arg7[%c2, %c0_20, %c0_21] : memref<16x32x128xf32, #tpu.memory_space<vmem>>, vector<1x32x128xf32>
    %32 = vector.shape_cast %31 : vector<1x32x128xf32> to vector<32x128xf32>
    %33 = vector.broadcast %30 : vector<1x128xf32> to vector<32x128xf32>
    %34 = arith.mulf %33, %32 : vector<32x128xf32>
    %35 = arith.addf %29, %34 : vector<32x128xf32>
    %36 = vector.extract_strided_slice %18 {offsets = [0, 384], sizes = [1, 128], strides = [1, 1]} : vector<1x2048xf32> to vector<1x128xf32>
    %c3 = arith.constant 3 : index
    %c0_22 = arith.constant 0 : index
    %c0_23 = arith.constant 0 : index
    %37 = vector.load %arg7[%c3, %c0_22, %c0_23] : memref<16x32x128xf32, #tpu.memory_space<vmem>>, vector<1x32x128xf32>
    %38 = vector.shape_cast %37 : vector<1x32x128xf32> to vector<32x128xf32>
    %39 = vector.broadcast %36 : vector<1x128xf32> to vector<32x128xf32>
    %40 = arith.mulf %39, %38 : vector<32x128xf32>
    %41 = arith.addf %35, %40 : vector<32x128xf32>
    %42 = vector.extract_strided_slice %18 {offsets = [0, 512], sizes = [1, 128], strides = [1, 1]} : vector<1x2048xf32> to vector<1x128xf32>
    %c4 = arith.constant 4 : index
    %c0_24 = arith.constant 0 : index
    %c0_25 = arith.constant 0 : index
    %43 = vector.load %arg7[%c4, %c0_24, %c0_25] : memref<16x32x128xf32, #tpu.memory_space<vmem>>, vector<1x32x128xf32>
    %44 = vector.shape_cast %43 : vector<1x32x128xf32> to vector<32x128xf32>
    %45 = vector.broadcast %42 : vector<1x128xf32> to vector<32x128xf32>
    %46 = arith.mulf %45, %44 : vector<32x128xf32>
    %47 = arith.addf %41, %46 : vector<32x128xf32>
    %48 = vector.extract_strided_slice %18 {offsets = [0, 640], sizes = [1, 128], strides = [1, 1]} : vector<1x2048xf32> to vector<1x128xf32>
    %c5 = arith.constant 5 : index
    %c0_26 = arith.constant 0 : index
    %c0_27 = arith.constant 0 : index
    %49 = vector.load %arg7[%c5, %c0_26, %c0_27] : memref<16x32x128xf32, #tpu.memory_space<vmem>>, vector<1x32x128xf32>
    %50 = vector.shape_cast %49 : vector<1x32x128xf32> to vector<32x128xf32>
    %51 = vector.broadcast %48 : vector<1x128xf32> to vector<32x128xf32>
    %52 = arith.mulf %51, %50 : vector<32x128xf32>
    %53 = arith.addf %47, %52 : vector<32x128xf32>
    %54 = vector.extract_strided_slice %18 {offsets = [0, 768], sizes = [1, 128], strides = [1, 1]} : vector<1x2048xf32> to vector<1x128xf32>
    %c6 = arith.constant 6 : index
    %c0_28 = arith.constant 0 : index
    %c0_29 = arith.constant 0 : index
    %55 = vector.load %arg7[%c6, %c0_28, %c0_29] : memref<16x32x128xf32, #tpu.memory_space<vmem>>, vector<1x32x128xf32>
    %56 = vector.shape_cast %55 : vector<1x32x128xf32> to vector<32x128xf32>
    %57 = vector.broadcast %54 : vector<1x128xf32> to vector<32x128xf32>
    %58 = arith.mulf %57, %56 : vector<32x128xf32>
    %59 = arith.addf %53, %58 : vector<32x128xf32>
    %60 = vector.extract_strided_slice %18 {offsets = [0, 896], sizes = [1, 128], strides = [1, 1]} : vector<1x2048xf32> to vector<1x128xf32>
    %c7 = arith.constant 7 : index
    %c0_30 = arith.constant 0 : index
    %c0_31 = arith.constant 0 : index
    %61 = vector.load %arg7[%c7, %c0_30, %c0_31] : memref<16x32x128xf32, #tpu.memory_space<vmem>>, vector<1x32x128xf32>
    %62 = vector.shape_cast %61 : vector<1x32x128xf32> to vector<32x128xf32>
    %63 = vector.broadcast %60 : vector<1x128xf32> to vector<32x128xf32>
    %64 = arith.mulf %63, %62 : vector<32x128xf32>
    %65 = arith.addf %59, %64 : vector<32x128xf32>
    %66 = vector.extract_strided_slice %18 {offsets = [0, 1024], sizes = [1, 128], strides = [1, 1]} : vector<1x2048xf32> to vector<1x128xf32>
    %c8 = arith.constant 8 : index
    %c0_32 = arith.constant 0 : index
    %c0_33 = arith.constant 0 : index
    %67 = vector.load %arg7[%c8, %c0_32, %c0_33] : memref<16x32x128xf32, #tpu.memory_space<vmem>>, vector<1x32x128xf32>
    %68 = vector.shape_cast %67 : vector<1x32x128xf32> to vector<32x128xf32>
    %69 = vector.broadcast %66 : vector<1x128xf32> to vector<32x128xf32>
    %70 = arith.mulf %69, %68 : vector<32x128xf32>
    %71 = arith.addf %65, %70 : vector<32x128xf32>
    %72 = vector.extract_strided_slice %18 {offsets = [0, 1152], sizes = [1, 128], strides = [1, 1]} : vector<1x2048xf32> to vector<1x128xf32>
    %c9 = arith.constant 9 : index
    %c0_34 = arith.constant 0 : index
    %c0_35 = arith.constant 0 : index
    %73 = vector.load %arg7[%c9, %c0_34, %c0_35] : memref<16x32x128xf32, #tpu.memory_space<vmem>>, vector<1x32x128xf32>
    %74 = vector.shape_cast %73 : vector<1x32x128xf32> to vector<32x128xf32>
    %75 = vector.broadcast %72 : vector<1x128xf32> to vector<32x128xf32>
    %76 = arith.mulf %75, %74 : vector<32x128xf32>
    %77 = arith.addf %71, %76 : vector<32x128xf32>
    %78 = vector.extract_strided_slice %18 {offsets = [0, 1280], sizes = [1, 128], strides = [1, 1]} : vector<1x2048xf32> to vector<1x128xf32>
    %c10 = arith.constant 10 : index
    %c0_36 = arith.constant 0 : index
    %c0_37 = arith.constant 0 : index
    %79 = vector.load %arg7[%c10, %c0_36, %c0_37] : memref<16x32x128xf32, #tpu.memory_space<vmem>>, vector<1x32x128xf32>
    %80 = vector.shape_cast %79 : vector<1x32x128xf32> to vector<32x128xf32>
    %81 = vector.broadcast %78 : vector<1x128xf32> to vector<32x128xf32>
    %82 = arith.mulf %81, %80 : vector<32x128xf32>
    %83 = arith.addf %77, %82 : vector<32x128xf32>
    %84 = vector.extract_strided_slice %18 {offsets = [0, 1408], sizes = [1, 128], strides = [1, 1]} : vector<1x2048xf32> to vector<1x128xf32>
    %c11 = arith.constant 11 : index
    %c0_38 = arith.constant 0 : index
    %c0_39 = arith.constant 0 : index
    %85 = vector.load %arg7[%c11, %c0_38, %c0_39] : memref<16x32x128xf32, #tpu.memory_space<vmem>>, vector<1x32x128xf32>
    %86 = vector.shape_cast %85 : vector<1x32x128xf32> to vector<32x128xf32>
    %87 = vector.broadcast %84 : vector<1x128xf32> to vector<32x128xf32>
    %88 = arith.mulf %87, %86 : vector<32x128xf32>
    %89 = arith.addf %83, %88 : vector<32x128xf32>
    %90 = vector.extract_strided_slice %18 {offsets = [0, 1536], sizes = [1, 128], strides = [1, 1]} : vector<1x2048xf32> to vector<1x128xf32>
    %c12 = arith.constant 12 : index
    %c0_40 = arith.constant 0 : index
    %c0_41 = arith.constant 0 : index
    %91 = vector.load %arg7[%c12, %c0_40, %c0_41] : memref<16x32x128xf32, #tpu.memory_space<vmem>>, vector<1x32x128xf32>
    %92 = vector.shape_cast %91 : vector<1x32x128xf32> to vector<32x128xf32>
    %93 = vector.broadcast %90 : vector<1x128xf32> to vector<32x128xf32>
    %94 = arith.mulf %93, %92 : vector<32x128xf32>
    %95 = arith.addf %89, %94 : vector<32x128xf32>
    %96 = vector.extract_strided_slice %18 {offsets = [0, 1664], sizes = [1, 128], strides = [1, 1]} : vector<1x2048xf32> to vector<1x128xf32>
    %c13 = arith.constant 13 : index
    %c0_42 = arith.constant 0 : index
    %c0_43 = arith.constant 0 : index
    %97 = vector.load %arg7[%c13, %c0_42, %c0_43] : memref<16x32x128xf32, #tpu.memory_space<vmem>>, vector<1x32x128xf32>
    %98 = vector.shape_cast %97 : vector<1x32x128xf32> to vector<32x128xf32>
    %99 = vector.broadcast %96 : vector<1x128xf32> to vector<32x128xf32>
    %100 = arith.mulf %99, %98 : vector<32x128xf32>
    %101 = arith.addf %95, %100 : vector<32x128xf32>
    %102 = vector.extract_strided_slice %18 {offsets = [0, 1792], sizes = [1, 128], strides = [1, 1]} : vector<1x2048xf32> to vector<1x128xf32>
    %c14 = arith.constant 14 : index
    %c0_44 = arith.constant 0 : index
    %c0_45 = arith.constant 0 : index
    %103 = vector.load %arg7[%c14, %c0_44, %c0_45] : memref<16x32x128xf32, #tpu.memory_space<vmem>>, vector<1x32x128xf32>
    %104 = vector.shape_cast %103 : vector<1x32x128xf32> to vector<32x128xf32>
    %105 = vector.broadcast %102 : vector<1x128xf32> to vector<32x128xf32>
    %106 = arith.mulf %105, %104 : vector<32x128xf32>
    %107 = arith.addf %101, %106 : vector<32x128xf32>
    %108 = vector.extract_strided_slice %18 {offsets = [0, 1920], sizes = [1, 128], strides = [1, 1]} : vector<1x2048xf32> to vector<1x128xf32>
    %c15 = arith.constant 15 : index
    %c0_46 = arith.constant 0 : index
    %c0_47 = arith.constant 0 : index
    %109 = vector.load %arg7[%c15, %c0_46, %c0_47] : memref<16x32x128xf32, #tpu.memory_space<vmem>>, vector<1x32x128xf32>
    %110 = vector.shape_cast %109 : vector<1x32x128xf32> to vector<32x128xf32>
    %111 = vector.broadcast %108 : vector<1x128xf32> to vector<32x128xf32>
    %112 = arith.mulf %111, %110 : vector<32x128xf32>
    %113 = arith.addf %107, %112 : vector<32x128xf32>
    %c0_48 = arith.constant 0 : index
    %c0_49 = arith.constant 0 : index
    %c0_50 = arith.constant 0 : index
    %114 = vector.load %arg2[%c0_48, %c0_49, %c0_50] : memref<2x8x32xf32, #tpu.memory_space<vmem>>, vector<1x8x32xf32>
    %115 = vector.shape_cast %114 : vector<1x8x32xf32> to vector<8x32xf32>
    %cst_51 = arith.constant dense<0.000000e+00> : vector<8x128xf32>
    %116 = tpu.matmul %115, %113, %cst_51 {dimension_numbers = #tpu.dot_dimension_numbers<[1], [0], [0], [1], [0, 0, 1, 1], [], []>} : vector<8x32xf32>, vector<32x128xf32>, vector<8x128xf32> -> vector<8x128xf32>
    %117 = vector.broadcast %17 : vector<1x128xf32> to vector<8x128xf32>
    %118 = arith.addf %116, %117 : vector<8x128xf32>
    %119 = vector.extract_strided_slice %113 {offsets = [0, 96], sizes = [32, 32], strides = [1, 1]} : vector<32x128xf32> to vector<32x32xf32>
    %120 = vector.extract_strided_slice %17 {offsets = [0, 96], sizes = [1, 32], strides = [1, 1]} : vector<1x128xf32> to vector<1x32xf32>
    %121 = vector.extract_strided_slice %118 {offsets = [0, 0], sizes = [8, 8], strides = [1, 1]} : vector<8x128xf32> to vector<8x8xf32>
    %122 = vector.extract_strided_slice %118 {offsets = [0, 32], sizes = [8, 8], strides = [1, 1]} : vector<8x128xf32> to vector<8x8xf32>
    %123 = vector.extract_strided_slice %118 {offsets = [0, 64], sizes = [8, 8], strides = [1, 1]} : vector<8x128xf32> to vector<8x8xf32>
    %cst_52 = arith.constant dense<0.000000e+00> : vector<8x8xf32>
    %124 = tpu.matmul %121, %122, %cst_52 {dimension_numbers = #tpu.dot_dimension_numbers<[1], [1], [0], [0], [0, 0, 1, 0], [], []>} : vector<8x8xf32>, vector<8x8xf32>, vector<8x8xf32> -> vector<8x8xf32>
    %cst_53 = arith.constant 0.353553385 : f32
    %125 = vector.broadcast %cst_53 : f32 to vector<8x8xf32>
    %126 = arith.mulf %124, %125 : vector<8x8xf32>
    %cst_54 = arith.constant dense<0xFF800000> : vector<8xf32>
    %127 = vector.multi_reduction <maximumf>, %126, %cst_54 [1] : vector<8x8xf32> to vector<8xf32>
    %128 = vector.shape_cast %127 : vector<8xf32> to vector<8x1xf32>
    %129 = vector.broadcast %128 : vector<8x1xf32> to vector<8x8xf32>
    %130 = arith.subf %126, %129 : vector<8x8xf32>
    %131 = math.exp %130 : vector<8x8xf32>
    %cst_55 = arith.constant dense<0.000000e+00> : vector<8xf32>
    %132 = vector.multi_reduction <add>, %131, %cst_55 [1] : vector<8x8xf32> to vector<8xf32>
    %133 = vector.shape_cast %132 : vector<8xf32> to vector<8x1xf32>
    %134 = tpu.reciprocal %133 {approx = true} : vector<8x1xf32> -> vector<8x1xf32>
    %135 = vector.broadcast %134 : vector<8x1xf32> to vector<8x8xf32>
    %136 = arith.mulf %131, %135 : vector<8x8xf32>
    %cst_56 = arith.constant dense<0.000000e+00> : vector<8x8xf32>
    %137 = tpu.matmul %136, %123, %cst_56 {dimension_numbers = #tpu.dot_dimension_numbers<[1], [0], [0], [1], [0, 0, 1, 1], [], []>} : vector<8x8xf32>, vector<8x8xf32>, vector<8x8xf32> -> vector<8x8xf32>
    %138 = vector.extract_strided_slice %118 {offsets = [0, 8], sizes = [8, 8], strides = [1, 1]} : vector<8x128xf32> to vector<8x8xf32>
    %139 = vector.extract_strided_slice %118 {offsets = [0, 40], sizes = [8, 8], strides = [1, 1]} : vector<8x128xf32> to vector<8x8xf32>
    %140 = vector.extract_strided_slice %118 {offsets = [0, 72], sizes = [8, 8], strides = [1, 1]} : vector<8x128xf32> to vector<8x8xf32>
    %cst_57 = arith.constant dense<0.000000e+00> : vector<8x8xf32>
    %141 = tpu.matmul %138, %139, %cst_57 {dimension_numbers = #tpu.dot_dimension_numbers<[1], [1], [0], [0], [0, 0, 1, 0], [], []>} : vector<8x8xf32>, vector<8x8xf32>, vector<8x8xf32> -> vector<8x8xf32>
    %cst_58 = arith.constant 0.353553385 : f32
    %142 = vector.broadcast %cst_58 : f32 to vector<8x8xf32>
    %143 = arith.mulf %141, %142 : vector<8x8xf32>
    %cst_59 = arith.constant dense<0xFF800000> : vector<8xf32>
    %144 = vector.multi_reduction <maximumf>, %143, %cst_59 [1] : vector<8x8xf32> to vector<8xf32>
    %145 = vector.shape_cast %144 : vector<8xf32> to vector<8x1xf32>
    %146 = vector.broadcast %145 : vector<8x1xf32> to vector<8x8xf32>
    %147 = arith.subf %143, %146 : vector<8x8xf32>
    %148 = math.exp %147 : vector<8x8xf32>
    %cst_60 = arith.constant dense<0.000000e+00> : vector<8xf32>
    %149 = vector.multi_reduction <add>, %148, %cst_60 [1] : vector<8x8xf32> to vector<8xf32>
    %150 = vector.shape_cast %149 : vector<8xf32> to vector<8x1xf32>
    %151 = tpu.reciprocal %150 {approx = true} : vector<8x1xf32> -> vector<8x1xf32>
    %152 = vector.broadcast %151 : vector<8x1xf32> to vector<8x8xf32>
    %153 = arith.mulf %148, %152 : vector<8x8xf32>
    %cst_61 = arith.constant dense<0.000000e+00> : vector<8x8xf32>
    %154 = tpu.matmul %153, %140, %cst_61 {dimension_numbers = #tpu.dot_dimension_numbers<[1], [0], [0], [1], [0, 0, 1, 1], [], []>} : vector<8x8xf32>, vector<8x8xf32>, vector<8x8xf32> -> vector<8x8xf32>
    %155 = vector.extract_strided_slice %118 {offsets = [0, 16], sizes = [8, 8], strides = [1, 1]} : vector<8x128xf32> to vector<8x8xf32>
    %156 = vector.extract_strided_slice %118 {offsets = [0, 48], sizes = [8, 8], strides = [1, 1]} : vector<8x128xf32> to vector<8x8xf32>
    %157 = vector.extract_strided_slice %118 {offsets = [0, 80], sizes = [8, 8], strides = [1, 1]} : vector<8x128xf32> to vector<8x8xf32>
    %cst_62 = arith.constant dense<0.000000e+00> : vector<8x8xf32>
    %158 = tpu.matmul %155, %156, %cst_62 {dimension_numbers = #tpu.dot_dimension_numbers<[1], [1], [0], [0], [0, 0, 1, 0], [], []>} : vector<8x8xf32>, vector<8x8xf32>, vector<8x8xf32> -> vector<8x8xf32>
    %cst_63 = arith.constant 0.353553385 : f32
    %159 = vector.broadcast %cst_63 : f32 to vector<8x8xf32>
    %160 = arith.mulf %158, %159 : vector<8x8xf32>
    %cst_64 = arith.constant dense<0xFF800000> : vector<8xf32>
    %161 = vector.multi_reduction <maximumf>, %160, %cst_64 [1] : vector<8x8xf32> to vector<8xf32>
    %162 = vector.shape_cast %161 : vector<8xf32> to vector<8x1xf32>
    %163 = vector.broadcast %162 : vector<8x1xf32> to vector<8x8xf32>
    %164 = arith.subf %160, %163 : vector<8x8xf32>
    %165 = math.exp %164 : vector<8x8xf32>
    %cst_65 = arith.constant dense<0.000000e+00> : vector<8xf32>
    %166 = vector.multi_reduction <add>, %165, %cst_65 [1] : vector<8x8xf32> to vector<8xf32>
    %167 = vector.shape_cast %166 : vector<8xf32> to vector<8x1xf32>
    %168 = tpu.reciprocal %167 {approx = true} : vector<8x1xf32> -> vector<8x1xf32>
    %169 = vector.broadcast %168 : vector<8x1xf32> to vector<8x8xf32>
    %170 = arith.mulf %165, %169 : vector<8x8xf32>
    %cst_66 = arith.constant dense<0.000000e+00> : vector<8x8xf32>
    %171 = tpu.matmul %170, %157, %cst_66 {dimension_numbers = #tpu.dot_dimension_numbers<[1], [0], [0], [1], [0, 0, 1, 1], [], []>} : vector<8x8xf32>, vector<8x8xf32>, vector<8x8xf32> -> vector<8x8xf32>
    %172 = vector.extract_strided_slice %118 {offsets = [0, 24], sizes = [8, 8], strides = [1, 1]} : vector<8x128xf32> to vector<8x8xf32>
    %173 = vector.extract_strided_slice %118 {offsets = [0, 56], sizes = [8, 8], strides = [1, 1]} : vector<8x128xf32> to vector<8x8xf32>
    %174 = vector.extract_strided_slice %118 {offsets = [0, 88], sizes = [8, 8], strides = [1, 1]} : vector<8x128xf32> to vector<8x8xf32>
    %cst_67 = arith.constant dense<0.000000e+00> : vector<8x8xf32>
    %175 = tpu.matmul %172, %173, %cst_67 {dimension_numbers = #tpu.dot_dimension_numbers<[1], [1], [0], [0], [0, 0, 1, 0], [], []>} : vector<8x8xf32>, vector<8x8xf32>, vector<8x8xf32> -> vector<8x8xf32>
    %cst_68 = arith.constant 0.353553385 : f32
    %176 = vector.broadcast %cst_68 : f32 to vector<8x8xf32>
    %177 = arith.mulf %175, %176 : vector<8x8xf32>
    %cst_69 = arith.constant dense<0xFF800000> : vector<8xf32>
    %178 = vector.multi_reduction <maximumf>, %177, %cst_69 [1] : vector<8x8xf32> to vector<8xf32>
    %179 = vector.shape_cast %178 : vector<8xf32> to vector<8x1xf32>
    %180 = vector.broadcast %179 : vector<8x1xf32> to vector<8x8xf32>
    %181 = arith.subf %177, %180 : vector<8x8xf32>
    %182 = math.exp %181 : vector<8x8xf32>
    %cst_70 = arith.constant dense<0.000000e+00> : vector<8xf32>
    %183 = vector.multi_reduction <add>, %182, %cst_70 [1] : vector<8x8xf32> to vector<8xf32>
    %184 = vector.shape_cast %183 : vector<8xf32> to vector<8x1xf32>
    %185 = tpu.reciprocal %184 {approx = true} : vector<8x1xf32> -> vector<8x1xf32>
    %186 = vector.broadcast %185 : vector<8x1xf32> to vector<8x8xf32>
    %187 = arith.mulf %182, %186 : vector<8x8xf32>
    %cst_71 = arith.constant dense<0.000000e+00> : vector<8x8xf32>
    %188 = tpu.matmul %187, %174, %cst_71 {dimension_numbers = #tpu.dot_dimension_numbers<[1], [0], [0], [1], [0, 0, 1, 1], [], []>} : vector<8x8xf32>, vector<8x8xf32>, vector<8x8xf32> -> vector<8x8xf32>
    %189 = tpu.concatenate %137, %154, %171, %188 in 1 : vector<8x8xf32>, vector<8x8xf32>, vector<8x8xf32>, vector<8x8xf32> -> vector<8x32xf32>
    %cst_72 = arith.constant dense<0.000000e+00> : vector<8x32xf32>
    %190 = tpu.matmul %189, %119, %cst_72 {dimension_numbers = #tpu.dot_dimension_numbers<[1], [0], [0], [1], [0, 0, 1, 1], [], []>} : vector<8x32xf32>, vector<32x32xf32>, vector<8x32xf32> -> vector<8x32xf32>
    %191 = vector.broadcast %120 : vector<1x32xf32> to vector<8x32xf32>
    %192 = arith.addf %190, %191 : vector<8x32xf32>
    %193 = arith.addf %115, %192 : vector<8x32xf32>
    %194 = vector.extract_strided_slice %16 {offsets = [1, 0], sizes = [1, 128], strides = [1, 1]} : vector<2x2176xf32> to vector<1x128xf32>
    %195 = vector.extract_strided_slice %16 {offsets = [1, 128], sizes = [1, 2048], strides = [1, 1]} : vector<2x2176xf32> to vector<1x2048xf32>
    %196 = vector.extract_strided_slice %195 {offsets = [0, 0], sizes = [1, 128], strides = [1, 1]} : vector<1x2048xf32> to vector<1x128xf32>
    %c0_73 = arith.constant 0 : index
    %c0_74 = arith.constant 0 : index
    %c0_75 = arith.constant 0 : index
    %197 = vector.load %arg7[%c0_73, %c0_74, %c0_75] : memref<16x32x128xf32, #tpu.memory_space<vmem>>, vector<1x32x128xf32>
    %198 = vector.shape_cast %197 : vector<1x32x128xf32> to vector<32x128xf32>
    %199 = vector.broadcast %196 : vector<1x128xf32> to vector<32x128xf32>
    %200 = arith.mulf %199, %198 : vector<32x128xf32>
    %201 = vector.extract_strided_slice %195 {offsets = [0, 128], sizes = [1, 128], strides = [1, 1]} : vector<1x2048xf32> to vector<1x128xf32>
    %c1_76 = arith.constant 1 : index
    %c0_77 = arith.constant 0 : index
    %c0_78 = arith.constant 0 : index
    %202 = vector.load %arg7[%c1_76, %c0_77, %c0_78] : memref<16x32x128xf32, #tpu.memory_space<vmem>>, vector<1x32x128xf32>
    %203 = vector.shape_cast %202 : vector<1x32x128xf32> to vector<32x128xf32>
    %204 = vector.broadcast %201 : vector<1x128xf32> to vector<32x128xf32>
    %205 = arith.mulf %204, %203 : vector<32x128xf32>
    %206 = arith.addf %200, %205 : vector<32x128xf32>
    %207 = vector.extract_strided_slice %195 {offsets = [0, 256], sizes = [1, 128], strides = [1, 1]} : vector<1x2048xf32> to vector<1x128xf32>
    %c2_79 = arith.constant 2 : index
    %c0_80 = arith.constant 0 : index
    %c0_81 = arith.constant 0 : index
    %208 = vector.load %arg7[%c2_79, %c0_80, %c0_81] : memref<16x32x128xf32, #tpu.memory_space<vmem>>, vector<1x32x128xf32>
    %209 = vector.shape_cast %208 : vector<1x32x128xf32> to vector<32x128xf32>
    %210 = vector.broadcast %207 : vector<1x128xf32> to vector<32x128xf32>
    %211 = arith.mulf %210, %209 : vector<32x128xf32>
    %212 = arith.addf %206, %211 : vector<32x128xf32>
    %213 = vector.extract_strided_slice %195 {offsets = [0, 384], sizes = [1, 128], strides = [1, 1]} : vector<1x2048xf32> to vector<1x128xf32>
    %c3_82 = arith.constant 3 : index
    %c0_83 = arith.constant 0 : index
    %c0_84 = arith.constant 0 : index
    %214 = vector.load %arg7[%c3_82, %c0_83, %c0_84] : memref<16x32x128xf32, #tpu.memory_space<vmem>>, vector<1x32x128xf32>
    %215 = vector.shape_cast %214 : vector<1x32x128xf32> to vector<32x128xf32>
    %216 = vector.broadcast %213 : vector<1x128xf32> to vector<32x128xf32>
    %217 = arith.mulf %216, %215 : vector<32x128xf32>
    %218 = arith.addf %212, %217 : vector<32x128xf32>
    %219 = vector.extract_strided_slice %195 {offsets = [0, 512], sizes = [1, 128], strides = [1, 1]} : vector<1x2048xf32> to vector<1x128xf32>
    %c4_85 = arith.constant 4 : index
    %c0_86 = arith.constant 0 : index
    %c0_87 = arith.constant 0 : index
    %220 = vector.load %arg7[%c4_85, %c0_86, %c0_87] : memref<16x32x128xf32, #tpu.memory_space<vmem>>, vector<1x32x128xf32>
    %221 = vector.shape_cast %220 : vector<1x32x128xf32> to vector<32x128xf32>
    %222 = vector.broadcast %219 : vector<1x128xf32> to vector<32x128xf32>
    %223 = arith.mulf %222, %221 : vector<32x128xf32>
    %224 = arith.addf %218, %223 : vector<32x128xf32>
    %225 = vector.extract_strided_slice %195 {offsets = [0, 640], sizes = [1, 128], strides = [1, 1]} : vector<1x2048xf32> to vector<1x128xf32>
    %c5_88 = arith.constant 5 : index
    %c0_89 = arith.constant 0 : index
    %c0_90 = arith.constant 0 : index
    %226 = vector.load %arg7[%c5_88, %c0_89, %c0_90] : memref<16x32x128xf32, #tpu.memory_space<vmem>>, vector<1x32x128xf32>
    %227 = vector.shape_cast %226 : vector<1x32x128xf32> to vector<32x128xf32>
    %228 = vector.broadcast %225 : vector<1x128xf32> to vector<32x128xf32>
    %229 = arith.mulf %228, %227 : vector<32x128xf32>
    %230 = arith.addf %224, %229 : vector<32x128xf32>
    %231 = vector.extract_strided_slice %195 {offsets = [0, 768], sizes = [1, 128], strides = [1, 1]} : vector<1x2048xf32> to vector<1x128xf32>
    %c6_91 = arith.constant 6 : index
    %c0_92 = arith.constant 0 : index
    %c0_93 = arith.constant 0 : index
    %232 = vector.load %arg7[%c6_91, %c0_92, %c0_93] : memref<16x32x128xf32, #tpu.memory_space<vmem>>, vector<1x32x128xf32>
    %233 = vector.shape_cast %232 : vector<1x32x128xf32> to vector<32x128xf32>
    %234 = vector.broadcast %231 : vector<1x128xf32> to vector<32x128xf32>
    %235 = arith.mulf %234, %233 : vector<32x128xf32>
    %236 = arith.addf %230, %235 : vector<32x128xf32>
    %237 = vector.extract_strided_slice %195 {offsets = [0, 896], sizes = [1, 128], strides = [1, 1]} : vector<1x2048xf32> to vector<1x128xf32>
    %c7_94 = arith.constant 7 : index
    %c0_95 = arith.constant 0 : index
    %c0_96 = arith.constant 0 : index
    %238 = vector.load %arg7[%c7_94, %c0_95, %c0_96] : memref<16x32x128xf32, #tpu.memory_space<vmem>>, vector<1x32x128xf32>
    %239 = vector.shape_cast %238 : vector<1x32x128xf32> to vector<32x128xf32>
    %240 = vector.broadcast %237 : vector<1x128xf32> to vector<32x128xf32>
    %241 = arith.mulf %240, %239 : vector<32x128xf32>
    %242 = arith.addf %236, %241 : vector<32x128xf32>
    %243 = vector.extract_strided_slice %195 {offsets = [0, 1024], sizes = [1, 128], strides = [1, 1]} : vector<1x2048xf32> to vector<1x128xf32>
    %c8_97 = arith.constant 8 : index
    %c0_98 = arith.constant 0 : index
    %c0_99 = arith.constant 0 : index
    %244 = vector.load %arg7[%c8_97, %c0_98, %c0_99] : memref<16x32x128xf32, #tpu.memory_space<vmem>>, vector<1x32x128xf32>
    %245 = vector.shape_cast %244 : vector<1x32x128xf32> to vector<32x128xf32>
    %246 = vector.broadcast %243 : vector<1x128xf32> to vector<32x128xf32>
    %247 = arith.mulf %246, %245 : vector<32x128xf32>
    %248 = arith.addf %242, %247 : vector<32x128xf32>
    %249 = vector.extract_strided_slice %195 {offsets = [0, 1152], sizes = [1, 128], strides = [1, 1]} : vector<1x2048xf32> to vector<1x128xf32>
    %c9_100 = arith.constant 9 : index
    %c0_101 = arith.constant 0 : index
    %c0_102 = arith.constant 0 : index
    %250 = vector.load %arg7[%c9_100, %c0_101, %c0_102] : memref<16x32x128xf32, #tpu.memory_space<vmem>>, vector<1x32x128xf32>
    %251 = vector.shape_cast %250 : vector<1x32x128xf32> to vector<32x128xf32>
    %252 = vector.broadcast %249 : vector<1x128xf32> to vector<32x128xf32>
    %253 = arith.mulf %252, %251 : vector<32x128xf32>
    %254 = arith.addf %248, %253 : vector<32x128xf32>
    %255 = vector.extract_strided_slice %195 {offsets = [0, 1280], sizes = [1, 128], strides = [1, 1]} : vector<1x2048xf32> to vector<1x128xf32>
    %c10_103 = arith.constant 10 : index
    %c0_104 = arith.constant 0 : index
    %c0_105 = arith.constant 0 : index
    %256 = vector.load %arg7[%c10_103, %c0_104, %c0_105] : memref<16x32x128xf32, #tpu.memory_space<vmem>>, vector<1x32x128xf32>
    %257 = vector.shape_cast %256 : vector<1x32x128xf32> to vector<32x128xf32>
    %258 = vector.broadcast %255 : vector<1x128xf32> to vector<32x128xf32>
    %259 = arith.mulf %258, %257 : vector<32x128xf32>
    %260 = arith.addf %254, %259 : vector<32x128xf32>
    %261 = vector.extract_strided_slice %195 {offsets = [0, 1408], sizes = [1, 128], strides = [1, 1]} : vector<1x2048xf32> to vector<1x128xf32>
    %c11_106 = arith.constant 11 : index
    %c0_107 = arith.constant 0 : index
    %c0_108 = arith.constant 0 : index
    %262 = vector.load %arg7[%c11_106, %c0_107, %c0_108] : memref<16x32x128xf32, #tpu.memory_space<vmem>>, vector<1x32x128xf32>
    %263 = vector.shape_cast %262 : vector<1x32x128xf32> to vector<32x128xf32>
    %264 = vector.broadcast %261 : vector<1x128xf32> to vector<32x128xf32>
    %265 = arith.mulf %264, %263 : vector<32x128xf32>
    %266 = arith.addf %260, %265 : vector<32x128xf32>
    %267 = vector.extract_strided_slice %195 {offsets = [0, 1536], sizes = [1, 128], strides = [1, 1]} : vector<1x2048xf32> to vector<1x128xf32>
    %c12_109 = arith.constant 12 : index
    %c0_110 = arith.constant 0 : index
    %c0_111 = arith.constant 0 : index
    %268 = vector.load %arg7[%c12_109, %c0_110, %c0_111] : memref<16x32x128xf32, #tpu.memory_space<vmem>>, vector<1x32x128xf32>
    %269 = vector.shape_cast %268 : vector<1x32x128xf32> to vector<32x128xf32>
    %270 = vector.broadcast %267 : vector<1x128xf32> to vector<32x128xf32>
    %271 = arith.mulf %270, %269 : vector<32x128xf32>
    %272 = arith.addf %266, %271 : vector<32x128xf32>
    %273 = vector.extract_strided_slice %195 {offsets = [0, 1664], sizes = [1, 128], strides = [1, 1]} : vector<1x2048xf32> to vector<1x128xf32>
    %c13_112 = arith.constant 13 : index
    %c0_113 = arith.constant 0 : index
    %c0_114 = arith.constant 0 : index
    %274 = vector.load %arg7[%c13_112, %c0_113, %c0_114] : memref<16x32x128xf32, #tpu.memory_space<vmem>>, vector<1x32x128xf32>
    %275 = vector.shape_cast %274 : vector<1x32x128xf32> to vector<32x128xf32>
    %276 = vector.broadcast %273 : vector<1x128xf32> to vector<32x128xf32>
    %277 = arith.mulf %276, %275 : vector<32x128xf32>
    %278 = arith.addf %272, %277 : vector<32x128xf32>
    %279 = vector.extract_strided_slice %195 {offsets = [0, 1792], sizes = [1, 128], strides = [1, 1]} : vector<1x2048xf32> to vector<1x128xf32>
    %c14_115 = arith.constant 14 : index
    %c0_116 = arith.constant 0 : index
    %c0_117 = arith.constant 0 : index
    %280 = vector.load %arg7[%c14_115, %c0_116, %c0_117] : memref<16x32x128xf32, #tpu.memory_space<vmem>>, vector<1x32x128xf32>
    %281 = vector.shape_cast %280 : vector<1x32x128xf32> to vector<32x128xf32>
    %282 = vector.broadcast %279 : vector<1x128xf32> to vector<32x128xf32>
    %283 = arith.mulf %282, %281 : vector<32x128xf32>
    %284 = arith.addf %278, %283 : vector<32x128xf32>
    %285 = vector.extract_strided_slice %195 {offsets = [0, 1920], sizes = [1, 128], strides = [1, 1]} : vector<1x2048xf32> to vector<1x128xf32>
    %c15_118 = arith.constant 15 : index
    %c0_119 = arith.constant 0 : index
    %c0_120 = arith.constant 0 : index
    %286 = vector.load %arg7[%c15_118, %c0_119, %c0_120] : memref<16x32x128xf32, #tpu.memory_space<vmem>>, vector<1x32x128xf32>
    %287 = vector.shape_cast %286 : vector<1x32x128xf32> to vector<32x128xf32>
    %288 = vector.broadcast %285 : vector<1x128xf32> to vector<32x128xf32>
    %289 = arith.mulf %288, %287 : vector<32x128xf32>
    %290 = arith.addf %284, %289 : vector<32x128xf32>
    %c1_121 = arith.constant 1 : index
    %c0_122 = arith.constant 0 : index
    %c0_123 = arith.constant 0 : index
    %291 = vector.load %arg2[%c1_121, %c0_122, %c0_123] : memref<2x8x32xf32, #tpu.memory_space<vmem>>, vector<1x8x32xf32>
    %292 = vector.shape_cast %291 : vector<1x8x32xf32> to vector<8x32xf32>
    %cst_124 = arith.constant dense<0.000000e+00> : vector<8x128xf32>
    %293 = tpu.matmul %292, %290, %cst_124 {dimension_numbers = #tpu.dot_dimension_numbers<[1], [0], [0], [1], [0, 0, 1, 1], [], []>} : vector<8x32xf32>, vector<32x128xf32>, vector<8x128xf32> -> vector<8x128xf32>
    %294 = vector.broadcast %194 : vector<1x128xf32> to vector<8x128xf32>
    %295 = arith.addf %293, %294 : vector<8x128xf32>
    %296 = vector.extract_strided_slice %290 {offsets = [0, 96], sizes = [32, 32], strides = [1, 1]} : vector<32x128xf32> to vector<32x32xf32>
    %297 = vector.extract_strided_slice %194 {offsets = [0, 96], sizes = [1, 32], strides = [1, 1]} : vector<1x128xf32> to vector<1x32xf32>
    %298 = vector.extract_strided_slice %295 {offsets = [0, 0], sizes = [8, 8], strides = [1, 1]} : vector<8x128xf32> to vector<8x8xf32>
    %299 = vector.extract_strided_slice %295 {offsets = [0, 32], sizes = [8, 8], strides = [1, 1]} : vector<8x128xf32> to vector<8x8xf32>
    %300 = vector.extract_strided_slice %295 {offsets = [0, 64], sizes = [8, 8], strides = [1, 1]} : vector<8x128xf32> to vector<8x8xf32>
    %cst_125 = arith.constant dense<0.000000e+00> : vector<8x8xf32>
    %301 = tpu.matmul %298, %299, %cst_125 {dimension_numbers = #tpu.dot_dimension_numbers<[1], [1], [0], [0], [0, 0, 1, 0], [], []>} : vector<8x8xf32>, vector<8x8xf32>, vector<8x8xf32> -> vector<8x8xf32>
    %cst_126 = arith.constant 0.353553385 : f32
    %302 = vector.broadcast %cst_126 : f32 to vector<8x8xf32>
    %303 = arith.mulf %301, %302 : vector<8x8xf32>
    %cst_127 = arith.constant dense<0xFF800000> : vector<8xf32>
    %304 = vector.multi_reduction <maximumf>, %303, %cst_127 [1] : vector<8x8xf32> to vector<8xf32>
    %305 = vector.shape_cast %304 : vector<8xf32> to vector<8x1xf32>
    %306 = vector.broadcast %305 : vector<8x1xf32> to vector<8x8xf32>
    %307 = arith.subf %303, %306 : vector<8x8xf32>
    %308 = math.exp %307 : vector<8x8xf32>
    %cst_128 = arith.constant dense<0.000000e+00> : vector<8xf32>
    %309 = vector.multi_reduction <add>, %308, %cst_128 [1] : vector<8x8xf32> to vector<8xf32>
    %310 = vector.shape_cast %309 : vector<8xf32> to vector<8x1xf32>
    %311 = tpu.reciprocal %310 {approx = true} : vector<8x1xf32> -> vector<8x1xf32>
    %312 = vector.broadcast %311 : vector<8x1xf32> to vector<8x8xf32>
    %313 = arith.mulf %308, %312 : vector<8x8xf32>
    %cst_129 = arith.constant dense<0.000000e+00> : vector<8x8xf32>
    %314 = tpu.matmul %313, %300, %cst_129 {dimension_numbers = #tpu.dot_dimension_numbers<[1], [0], [0], [1], [0, 0, 1, 1], [], []>} : vector<8x8xf32>, vector<8x8xf32>, vector<8x8xf32> -> vector<8x8xf32>
    %315 = vector.extract_strided_slice %295 {offsets = [0, 8], sizes = [8, 8], strides = [1, 1]} : vector<8x128xf32> to vector<8x8xf32>
    %316 = vector.extract_strided_slice %295 {offsets = [0, 40], sizes = [8, 8], strides = [1, 1]} : vector<8x128xf32> to vector<8x8xf32>
    %317 = vector.extract_strided_slice %295 {offsets = [0, 72], sizes = [8, 8], strides = [1, 1]} : vector<8x128xf32> to vector<8x8xf32>
    %cst_130 = arith.constant dense<0.000000e+00> : vector<8x8xf32>
    %318 = tpu.matmul %315, %316, %cst_130 {dimension_numbers = #tpu.dot_dimension_numbers<[1], [1], [0], [0], [0, 0, 1, 0], [], []>} : vector<8x8xf32>, vector<8x8xf32>, vector<8x8xf32> -> vector<8x8xf32>
    %cst_131 = arith.constant 0.353553385 : f32
    %319 = vector.broadcast %cst_131 : f32 to vector<8x8xf32>
    %320 = arith.mulf %318, %319 : vector<8x8xf32>
    %cst_132 = arith.constant dense<0xFF800000> : vector<8xf32>
    %321 = vector.multi_reduction <maximumf>, %320, %cst_132 [1] : vector<8x8xf32> to vector<8xf32>
    %322 = vector.shape_cast %321 : vector<8xf32> to vector<8x1xf32>
    %323 = vector.broadcast %322 : vector<8x1xf32> to vector<8x8xf32>
    %324 = arith.subf %320, %323 : vector<8x8xf32>
    %325 = math.exp %324 : vector<8x8xf32>
    %cst_133 = arith.constant dense<0.000000e+00> : vector<8xf32>
    %326 = vector.multi_reduction <add>, %325, %cst_133 [1] : vector<8x8xf32> to vector<8xf32>
    %327 = vector.shape_cast %326 : vector<8xf32> to vector<8x1xf32>
    %328 = tpu.reciprocal %327 {approx = true} : vector<8x1xf32> -> vector<8x1xf32>
    %329 = vector.broadcast %328 : vector<8x1xf32> to vector<8x8xf32>
    %330 = arith.mulf %325, %329 : vector<8x8xf32>
    %cst_134 = arith.constant dense<0.000000e+00> : vector<8x8xf32>
    %331 = tpu.matmul %330, %317, %cst_134 {dimension_numbers = #tpu.dot_dimension_numbers<[1], [0], [0], [1], [0, 0, 1, 1], [], []>} : vector<8x8xf32>, vector<8x8xf32>, vector<8x8xf32> -> vector<8x8xf32>
    %332 = vector.extract_strided_slice %295 {offsets = [0, 16], sizes = [8, 8], strides = [1, 1]} : vector<8x128xf32> to vector<8x8xf32>
    %333 = vector.extract_strided_slice %295 {offsets = [0, 48], sizes = [8, 8], strides = [1, 1]} : vector<8x128xf32> to vector<8x8xf32>
    %334 = vector.extract_strided_slice %295 {offsets = [0, 80], sizes = [8, 8], strides = [1, 1]} : vector<8x128xf32> to vector<8x8xf32>
    %cst_135 = arith.constant dense<0.000000e+00> : vector<8x8xf32>
    %335 = tpu.matmul %332, %333, %cst_135 {dimension_numbers = #tpu.dot_dimension_numbers<[1], [1], [0], [0], [0, 0, 1, 0], [], []>} : vector<8x8xf32>, vector<8x8xf32>, vector<8x8xf32> -> vector<8x8xf32>
    %cst_136 = arith.constant 0.353553385 : f32
    %336 = vector.broadcast %cst_136 : f32 to vector<8x8xf32>
    %337 = arith.mulf %335, %336 : vector<8x8xf32>
    %cst_137 = arith.constant dense<0xFF800000> : vector<8xf32>
    %338 = vector.multi_reduction <maximumf>, %337, %cst_137 [1] : vector<8x8xf32> to vector<8xf32>
    %339 = vector.shape_cast %338 : vector<8xf32> to vector<8x1xf32>
    %340 = vector.broadcast %339 : vector<8x1xf32> to vector<8x8xf32>
    %341 = arith.subf %337, %340 : vector<8x8xf32>
    %342 = math.exp %341 : vector<8x8xf32>
    %cst_138 = arith.constant dense<0.000000e+00> : vector<8xf32>
    %343 = vector.multi_reduction <add>, %342, %cst_138 [1] : vector<8x8xf32> to vector<8xf32>
    %344 = vector.shape_cast %343 : vector<8xf32> to vector<8x1xf32>
    %345 = tpu.reciprocal %344 {approx = true} : vector<8x1xf32> -> vector<8x1xf32>
    %346 = vector.broadcast %345 : vector<8x1xf32> to vector<8x8xf32>
    %347 = arith.mulf %342, %346 : vector<8x8xf32>
    %cst_139 = arith.constant dense<0.000000e+00> : vector<8x8xf32>
    %348 = tpu.matmul %347, %334, %cst_139 {dimension_numbers = #tpu.dot_dimension_numbers<[1], [0], [0], [1], [0, 0, 1, 1], [], []>} : vector<8x8xf32>, vector<8x8xf32>, vector<8x8xf32> -> vector<8x8xf32>
    %349 = vector.extract_strided_slice %295 {offsets = [0, 24], sizes = [8, 8], strides = [1, 1]} : vector<8x128xf32> to vector<8x8xf32>
    %350 = vector.extract_strided_slice %295 {offsets = [0, 56], sizes = [8, 8], strides = [1, 1]} : vector<8x128xf32> to vector<8x8xf32>
    %351 = vector.extract_strided_slice %295 {offsets = [0, 88], sizes = [8, 8], strides = [1, 1]} : vector<8x128xf32> to vector<8x8xf32>
    %cst_140 = arith.constant dense<0.000000e+00> : vector<8x8xf32>
    %352 = tpu.matmul %349, %350, %cst_140 {dimension_numbers = #tpu.dot_dimension_numbers<[1], [1], [0], [0], [0, 0, 1, 0], [], []>} : vector<8x8xf32>, vector<8x8xf32>, vector<8x8xf32> -> vector<8x8xf32>
    %cst_141 = arith.constant 0.353553385 : f32
    %353 = vector.broadcast %cst_141 : f32 to vector<8x8xf32>
    %354 = arith.mulf %352, %353 : vector<8x8xf32>
    %cst_142 = arith.constant dense<0xFF800000> : vector<8xf32>
    %355 = vector.multi_reduction <maximumf>, %354, %cst_142 [1] : vector<8x8xf32> to vector<8xf32>
    %356 = vector.shape_cast %355 : vector<8xf32> to vector<8x1xf32>
    %357 = vector.broadcast %356 : vector<8x1xf32> to vector<8x8xf32>
    %358 = arith.subf %354, %357 : vector<8x8xf32>
    %359 = math.exp %358 : vector<8x8xf32>
    %cst_143 = arith.constant dense<0.000000e+00> : vector<8xf32>
    %360 = vector.multi_reduction <add>, %359, %cst_143 [1] : vector<8x8xf32> to vector<8xf32>
    %361 = vector.shape_cast %360 : vector<8xf32> to vector<8x1xf32>
    %362 = tpu.reciprocal %361 {approx = true} : vector<8x1xf32> -> vector<8x1xf32>
    %363 = vector.broadcast %362 : vector<8x1xf32> to vector<8x8xf32>
    %364 = arith.mulf %359, %363 : vector<8x8xf32>
    %cst_144 = arith.constant dense<0.000000e+00> : vector<8x8xf32>
    %365 = tpu.matmul %364, %351, %cst_144 {dimension_numbers = #tpu.dot_dimension_numbers<[1], [0], [0], [1], [0, 0, 1, 1], [], []>} : vector<8x8xf32>, vector<8x8xf32>, vector<8x8xf32> -> vector<8x8xf32>
    %366 = tpu.concatenate %314, %331, %348, %365 in 1 : vector<8x8xf32>, vector<8x8xf32>, vector<8x8xf32>, vector<8x8xf32> -> vector<8x32xf32>
    %cst_145 = arith.constant dense<0.000000e+00> : vector<8x32xf32>
    %367 = tpu.matmul %366, %296, %cst_145 {dimension_numbers = #tpu.dot_dimension_numbers<[1], [0], [0], [1], [0, 0, 1, 1], [], []>} : vector<8x32xf32>, vector<32x32xf32>, vector<8x32xf32> -> vector<8x32xf32>
    %368 = vector.broadcast %297 : vector<1x32xf32> to vector<8x32xf32>
    %369 = arith.addf %367, %368 : vector<8x32xf32>
    %370 = arith.addf %292, %369 : vector<8x32xf32>
    %371 = tpu.concatenate %193, %370 in 0 : vector<8x32xf32>, vector<8x32xf32> -> vector<16x32xf32>
    %c0_146 = arith.constant 0 : index
    %c0_147 = arith.constant 0 : index
    %372 = vector.load %arg12[%c0_146, %c0_147] : memref<1x32xf32, #tpu.memory_space<vmem>>, vector<1x32xf32>
    %c0_148 = arith.constant 0 : index
    %c0_149 = arith.constant 0 : index
    %373 = vector.load %arg13[%c0_148, %c0_149] : memref<1x32xf32, #tpu.memory_space<vmem>>, vector<1x32xf32>
    %cst_150 = arith.constant dense<0.000000e+00> : vector<16xf32>
    %374 = vector.multi_reduction <add>, %371, %cst_150 [1] : vector<16x32xf32> to vector<16xf32>
    %375 = vector.shape_cast %374 : vector<16xf32> to vector<16x1xf32>
    %cst_151 = arith.constant 3.200000e+01 : f32
    %376 = vector.broadcast %cst_151 : f32 to vector<16x1xf32>
    %377 = arith.divf %375, %376 : vector<16x1xf32>
    %378 = vector.broadcast %377 : vector<16x1xf32> to vector<16x32xf32>
    %379 = arith.subf %371, %378 : vector<16x32xf32>
    %380 = arith.mulf %379, %379 : vector<16x32xf32>
    %cst_152 = arith.constant dense<0.000000e+00> : vector<16xf32>
    %381 = vector.multi_reduction <add>, %380, %cst_152 [1] : vector<16x32xf32> to vector<16xf32>
    %382 = vector.shape_cast %381 : vector<16xf32> to vector<16x1xf32>
    %cst_153 = arith.constant 3.200000e+01 : f32
    %383 = vector.broadcast %cst_153 : f32 to vector<16x1xf32>
    %384 = arith.divf %382, %383 : vector<16x1xf32>
    %cst_154 = arith.constant 9.99999974E-6 : f32
    %385 = vector.broadcast %cst_154 : f32 to vector<16x1xf32>
    %386 = arith.addf %384, %385 : vector<16x1xf32>
    %387 = math.rsqrt %386 : vector<16x1xf32>
    %388 = vector.broadcast %387 : vector<16x1xf32> to vector<16x32xf32>
    %389 = arith.mulf %379, %388 : vector<16x32xf32>
    %390 = vector.broadcast %372 : vector<1x32xf32> to vector<16x32xf32>
    %391 = arith.mulf %389, %390 : vector<16x32xf32>
    %392 = vector.broadcast %373 : vector<1x32xf32> to vector<16x32xf32>
    %393 = arith.addf %391, %392 : vector<16x32xf32>
    %c0_155 = arith.constant 0 : index
    %c0_156 = arith.constant 0 : index
    %394 = vector.load %arg8[%c0_155, %c0_156] : memref<32x128xf32, #tpu.memory_space<vmem>>, vector<32x128xf32>
    %cst_157 = arith.constant dense<0.000000e+00> : vector<16x128xf32>
    %395 = tpu.matmul %393, %394, %cst_157 {dimension_numbers = #tpu.dot_dimension_numbers<[1], [0], [0], [1], [0, 0, 1, 1], [], []>} : vector<16x32xf32>, vector<32x128xf32>, vector<16x128xf32> -> vector<16x128xf32>
    %c0_158 = arith.constant 0 : index
    %c0_159 = arith.constant 0 : index
    %396 = vector.load %arg9[%c0_158, %c0_159] : memref<1x128xf32, #tpu.memory_space<vmem>>, vector<1x128xf32>
    %397 = vector.broadcast %396 : vector<1x128xf32> to vector<16x128xf32>
    %398 = arith.addf %395, %397 : vector<16x128xf32>
    %cst_160 = arith.constant 5.000000e-01 : f32
    %399 = vector.broadcast %cst_160 : f32 to vector<16x128xf32>
    %400 = arith.mulf %399, %398 : vector<16x128xf32>
    %cst_161 = arith.constant 0.707106769 : f32
    %401 = vector.broadcast %cst_161 : f32 to vector<16x128xf32>
    %402 = arith.mulf %398, %401 : vector<16x128xf32>
    %403 = math.absf %402 : vector<16x128xf32>
    %cst_162 = arith.constant 0.327591091 : f32
    %404 = vector.broadcast %cst_162 : f32 to vector<16x128xf32>
    %405 = arith.mulf %404, %403 : vector<16x128xf32>
    %cst_163 = arith.constant 1.000000e+00 : f32
    %406 = vector.broadcast %cst_163 : f32 to vector<16x128xf32>
    %407 = arith.addf %406, %405 : vector<16x128xf32>
    %cst_164 = arith.constant 1.000000e+00 : f32
    %408 = vector.broadcast %cst_164 : f32 to vector<16x128xf32>
    %409 = arith.divf %408, %407 : vector<16x128xf32>
    %cst_165 = arith.constant 1.06140542 : f32
    %410 = vector.broadcast %cst_165 : f32 to vector<16x128xf32>
    %411 = arith.mulf %410, %409 : vector<16x128xf32>
    %cst_166 = arith.constant -1.45315206 : f32
    %412 = vector.broadcast %cst_166 : f32 to vector<16x128xf32>
    %413 = arith.addf %411, %412 : vector<16x128xf32>
    %414 = arith.mulf %413, %409 : vector<16x128xf32>
    %cst_167 = arith.constant 1.42141378 : f32
    %415 = vector.broadcast %cst_167 : f32 to vector<16x128xf32>
    %416 = arith.addf %414, %415 : vector<16x128xf32>
    %417 = arith.mulf %416, %409 : vector<16x128xf32>
    %cst_168 = arith.constant -0.284496725 : f32
    %418 = vector.broadcast %cst_168 : f32 to vector<16x128xf32>
    %419 = arith.addf %417, %418 : vector<16x128xf32>
    %420 = arith.mulf %419, %409 : vector<16x128xf32>
    %cst_169 = arith.constant 0.254829586 : f32
    %421 = vector.broadcast %cst_169 : f32 to vector<16x128xf32>
    %422 = arith.addf %420, %421 : vector<16x128xf32>
    %423 = arith.mulf %422, %409 : vector<16x128xf32>
    %cst_170 = arith.constant 0.000000e+00 : f32
    %424 = vector.broadcast %cst_170 : f32 to vector<16x128xf32>
    %425 = arith.subf %424, %403 : vector<16x128xf32>
    %426 = arith.mulf %425, %403 : vector<16x128xf32>
    %427 = math.exp %426 : vector<16x128xf32>
    %428 = arith.mulf %423, %427 : vector<16x128xf32>
    %cst_171 = arith.constant 1.000000e+00 : f32
    %429 = vector.broadcast %cst_171 : f32 to vector<16x128xf32>
    %430 = arith.subf %429, %428 : vector<16x128xf32>
    %cst_172 = arith.constant 0.000000e+00 : f32
    %431 = vector.broadcast %cst_172 : f32 to vector<16x128xf32>
    %432 = arith.cmpf oge, %402, %431 : vector<16x128xf32>
    %cst_173 = arith.constant 0.000000e+00 : f32
    %433 = vector.broadcast %cst_173 : f32 to vector<16x128xf32>
    %434 = arith.subf %433, %430 : vector<16x128xf32>
    %435 = arith.select %432, %430, %434 : vector<16x128xi1>, vector<16x128xf32>
    %cst_174 = arith.constant 1.000000e+00 : f32
    %436 = vector.broadcast %cst_174 : f32 to vector<16x128xf32>
    %437 = arith.addf %436, %435 : vector<16x128xf32>
    %438 = arith.mulf %400, %437 : vector<16x128xf32>
    %c0_175 = arith.constant 0 : index
    %c0_176 = arith.constant 0 : index
    %439 = vector.load %arg10[%c0_175, %c0_176] : memref<128x32xf32, #tpu.memory_space<vmem>>, vector<128x32xf32>
    %cst_177 = arith.constant dense<0.000000e+00> : vector<16x32xf32>
    %440 = tpu.matmul %438, %439, %cst_177 {dimension_numbers = #tpu.dot_dimension_numbers<[1], [0], [0], [1], [0, 0, 1, 1], [], []>} : vector<16x128xf32>, vector<128x32xf32>, vector<16x32xf32> -> vector<16x32xf32>
    %c0_178 = arith.constant 0 : index
    %c0_179 = arith.constant 0 : index
    %441 = vector.load %arg11[%c0_178, %c0_179] : memref<1x32xf32, #tpu.memory_space<vmem>>, vector<1x32xf32>
    %442 = vector.broadcast %441 : vector<1x32xf32> to vector<16x32xf32>
    %443 = arith.addf %440, %442 : vector<16x32xf32>
    %444 = arith.addf %393, %443 : vector<16x32xf32>
    %c0_180 = arith.constant 0 : index
    %c0_181 = arith.constant 0 : index
    %445 = vector.load %arg14[%c0_180, %c0_181] : memref<1x32xf32, #tpu.memory_space<vmem>>, vector<1x32xf32>
    %c0_182 = arith.constant 0 : index
    %c0_183 = arith.constant 0 : index
    %446 = vector.load %arg15[%c0_182, %c0_183] : memref<1x32xf32, #tpu.memory_space<vmem>>, vector<1x32xf32>
    %cst_184 = arith.constant dense<0.000000e+00> : vector<16xf32>
    %447 = vector.multi_reduction <add>, %444, %cst_184 [1] : vector<16x32xf32> to vector<16xf32>
    %448 = vector.shape_cast %447 : vector<16xf32> to vector<16x1xf32>
    %cst_185 = arith.constant 3.200000e+01 : f32
    %449 = vector.broadcast %cst_185 : f32 to vector<16x1xf32>
    %450 = arith.divf %448, %449 : vector<16x1xf32>
    %451 = vector.broadcast %450 : vector<16x1xf32> to vector<16x32xf32>
    %452 = arith.subf %444, %451 : vector<16x32xf32>
    %453 = arith.mulf %452, %452 : vector<16x32xf32>
    %cst_186 = arith.constant dense<0.000000e+00> : vector<16xf32>
    %454 = vector.multi_reduction <add>, %453, %cst_186 [1] : vector<16x32xf32> to vector<16xf32>
    %455 = vector.shape_cast %454 : vector<16xf32> to vector<16x1xf32>
    %cst_187 = arith.constant 3.200000e+01 : f32
    %456 = vector.broadcast %cst_187 : f32 to vector<16x1xf32>
    %457 = arith.divf %455, %456 : vector<16x1xf32>
    %cst_188 = arith.constant 9.99999974E-6 : f32
    %458 = vector.broadcast %cst_188 : f32 to vector<16x1xf32>
    %459 = arith.addf %457, %458 : vector<16x1xf32>
    %460 = math.rsqrt %459 : vector<16x1xf32>
    %461 = vector.broadcast %460 : vector<16x1xf32> to vector<16x32xf32>
    %462 = arith.mulf %452, %461 : vector<16x32xf32>
    %463 = vector.broadcast %445 : vector<1x32xf32> to vector<16x32xf32>
    %464 = arith.mulf %462, %463 : vector<16x32xf32>
    %465 = vector.broadcast %446 : vector<1x32xf32> to vector<16x32xf32>
    %466 = arith.addf %464, %465 : vector<16x32xf32>
    %467 = vector.extract_strided_slice %466 {offsets = [0, 0], sizes = [8, 32], strides = [1, 1]} : vector<16x32xf32> to vector<8x32xf32>
    %c0_189 = arith.constant 0 : index
    %c0_190 = arith.constant 0 : index
    %c0_191 = arith.constant 0 : index
    %468 = vector.load %arg16[%c0_189, %c0_190, %c0_191] : memref<2x8x32xf32, #tpu.memory_space<vmem>>, vector<1x8x32xf32>
    %469 = vector.shape_cast %468 : vector<1x8x32xf32> to vector<8x32xf32>
    %470 = vector.shape_cast %467 : vector<8x32xf32> to vector<1x8x32xf32>
    tpu.vector_store %arg16[%c0_189, %c0_190, %c0_191], %470 {strides = array<i32>} : memref<2x8x32xf32, #tpu.memory_space<vmem>>, vector<1x8x32xf32>,
    %471 = vector.extract_strided_slice %466 {offsets = [8, 0], sizes = [8, 32], strides = [1, 1]} : vector<16x32xf32> to vector<8x32xf32>
    %c1_192 = arith.constant 1 : index
    %c0_193 = arith.constant 0 : index
    %c0_194 = arith.constant 0 : index
    %472 = vector.load %arg16[%c1_192, %c0_193, %c0_194] : memref<2x8x32xf32, #tpu.memory_space<vmem>>, vector<1x8x32xf32>
    %473 = vector.shape_cast %472 : vector<1x8x32xf32> to vector<8x32xf32>
    %474 = vector.shape_cast %471 : vector<8x32xf32> to vector<1x8x32xf32>
    tpu.vector_store %arg16[%c1_192, %c0_193, %c0_194], %474 {strides = array<i32>} : memref<2x8x32xf32, #tpu.memory_space<vmem>>, vector<1x8x32xf32>,
    return
  }
  func.func @transform_0(%arg0: i32) -> (i32, i32, i32) {
    %c0_i32 = arith.constant 0 : i32
    %c0_i32_0 = arith.constant 0 : i32
    %c0_i32_1 = arith.constant 0 : i32
    return %arg0, %c0_i32, %c0_i32_0 : i32, i32, i32
  }
  func.func @transform_1(%arg0: i32) -> (i32, i32, i32) {
    %c0_i32 = arith.constant 0 : i32
    %c0_i32_0 = arith.constant 0 : i32
    %c0_i32_1 = arith.constant 0 : i32
    return %arg0, %c0_i32, %c0_i32_0 : i32, i32, i32
  }
  func.func @transform_2(%arg0: i32) -> (i32, i32) {
    %c0_i32 = arith.constant 0 : i32
    %c0_i32_0 = arith.constant 0 : i32
    %c0_i32_1 = arith.constant 0 : i32
    return %c0_i32, %c0_i32_0 : i32, i32
  }
  func.func @transform_3(%arg0: i32) -> (i32, i32) {
    %c0_i32 = arith.constant 0 : i32
    %c0_i32_0 = arith.constant 0 : i32
    %c0_i32_1 = arith.constant 0 : i32
    return %c0_i32, %c0_i32_0 : i32, i32
  }
  func.func @transform_4(%arg0: i32) -> (i32, i32) {
    %c0_i32 = arith.constant 0 : i32
    %c0_i32_0 = arith.constant 0 : i32
    %c0_i32_1 = arith.constant 0 : i32
    return %c0_i32, %c0_i32_0 : i32, i32
  }
  func.func @transform_5(%arg0: i32) -> (i32, i32) {
    %c0_i32 = arith.constant 0 : i32
    %c0_i32_0 = arith.constant 0 : i32
    %c0_i32_1 = arith.constant 0 : i32
    return %c0_i32, %c0_i32_0 : i32, i32
  }
  func.func @transform_6(%arg0: i32) -> (i32, i32, i32) {
    %c0_i32 = arith.constant 0 : i32
    %c0_i32_0 = arith.constant 0 : i32
    %c0_i32_1 = arith.constant 0 : i32
    %c0_i32_2 = arith.constant 0 : i32
    return %c0_i32, %c0_i32_0, %c0_i32_1 : i32, i32, i32
  }
  func.func @transform_7(%arg0: i32) -> (i32, i32) {
    %c0_i32 = arith.constant 0 : i32
    %c0_i32_0 = arith.constant 0 : i32
    %c0_i32_1 = arith.constant 0 : i32
    return %c0_i32, %c0_i32_0 : i32, i32
  }
  func.func @transform_8(%arg0: i32) -> (i32, i32) {
    %c0_i32 = arith.constant 0 : i32
    %c0_i32_0 = arith.constant 0 : i32
    %c0_i32_1 = arith.constant 0 : i32
    return %c0_i32, %c0_i32_0 : i32, i32
  }
  func.func @transform_9(%arg0: i32) -> (i32, i32) {
    %c0_i32 = arith.constant 0 : i32
    %c0_i32_0 = arith.constant 0 : i32
    %c0_i32_1 = arith.constant 0 : i32
    return %c0_i32, %c0_i32_0 : i32, i32
  }
  func.func @transform_10(%arg0: i32) -> (i32, i32) {
    %c0_i32 = arith.constant 0 : i32
    %c0_i32_0 = arith.constant 0 : i32
    %c0_i32_1 = arith.constant 0 : i32
    return %c0_i32, %c0_i32_0 : i32, i32
  }
  func.func @transform_11(%arg0: i32) -> (i32, i32) {
    %c0_i32 = arith.constant 0 : i32
    %c0_i32_0 = arith.constant 0 : i32
    %c0_i32_1 = arith.constant 0 : i32
    return %c0_i32, %c0_i32_0 : i32, i32
  }
  func.func @transform_12(%arg0: i32) -> (i32, i32) {
    %c0_i32 = arith.constant 0 : i32
    %c0_i32_0 = arith.constant 0 : i32
    %c0_i32_1 = arith.constant 0 : i32
    return %c0_i32, %c0_i32_0 : i32, i32
  }
  func.func @transform_13(%arg0: i32) -> (i32, i32) {
    %c0_i32 = arith.constant 0 : i32
    %c0_i32_0 = arith.constant 0 : i32
    %c0_i32_1 = arith.constant 0 : i32
    return %c0_i32, %c0_i32_0 : i32, i32
  }
  func.func @transform_14(%arg0: i32) -> (i32, i32) {
    %c0_i32 = arith.constant 0 : i32
    %c0_i32_0 = arith.constant 0 : i32
    %c0_i32_1 = arith.constant 0 : i32
    return %c0_i32, %c0_i32_0 : i32, i32
  }
  func.func @transform_15(%arg0: i32) -> (i32, i32, i32) {
    %c0_i32 = arith.constant 0 : i32
    %c0_i32_0 = arith.constant 0 : i32
    %c0_i32_1 = arith.constant 0 : i32
    return %arg0, %c0_i32, %c0_i32_0 : i32, i32, i32
  }
}

</mosaic_0001>

<llo_original>
// kernel: tpu_custom_call.1
$region0: #{tpu_custom_call.1}
  #allocation0 [shape = 'u32[]', space=smem, size = 0x4, offset = 0x4, fixed_abs, tag = 'smem constant byte address 0x4 - core index']
  #allocation1 [shape = 'u32[144,128]{1,0:T(1,128)}', space=vmem, size = 0x12000, scoped, tag = 'internal scratch']
  %s0 = inlined_call_operand.hbm [shape: f32[2,1,16], index: 0, kind: input, shape index: {}]
  %s1 = inlined_call_operand.hbm [shape: f32[2,8,32], index: 1, kind: input, shape index: {}]
  %s2 = inlined_call_operand.hbm [shape: f32[16,128], index: 2, kind: input, shape index: {}]
  %s3 = inlined_call_operand.hbm [shape: f32[1,128], index: 3, kind: input, shape index: {}]
  %s4 = inlined_call_operand.hbm [shape: f32[128,2176], index: 4, kind: input, shape index: {}]
  %s5 = inlined_call_operand.hbm [shape: f32[1,2176], index: 5, kind: input, shape index: {}]
  %s6 = inlined_call_operand.hbm [shape: f32[16,32,128], index: 6, kind: input, shape index: {}]
  %s7 = inlined_call_operand.hbm [shape: f32[32,128], index: 7, kind: input, shape index: {}]
  %s8 = inlined_call_operand.hbm [shape: f32[1,128], index: 8, kind: input, shape index: {}]
  %s9 = inlined_call_operand.vmem [shape: f32[128,32], index: 9, kind: input, shape index: {}]
  %s10 = inlined_call_operand.hbm [shape: f32[1,32], index: 10, kind: input, shape index: {}]
  %s11 = inlined_call_operand.hbm [shape: f32[1,32], index: 11, kind: input, shape index: {}]
  %s12 = inlined_call_operand.hbm [shape: f32[1,32], index: 12, kind: input, shape index: {}]
  %s13 = inlined_call_operand.hbm [shape: f32[1,32], index: 13, kind: input, shape index: {}]
  %s14 = inlined_call_operand.hbm [shape: f32[1,32], index: 14, kind: input, shape index: {}]
  %s15 = inlined_call_operand.hbm [shape: f32[2,8,32], index: 15, kind: output, shape index: {}]
  %s16 = sld [smem:[#allocation0]]
  $region126: #{tpu_custom_call.1} parent=0
    _
  %s18 = ssub.s32 1, %s16
  %s19 = scalar_select 0, %s18, %s16
  $region1: #{tpu_custom_call.1} parent=0
    #allocation2 [shape = 'u8[1024]{0}', space=vmem, size = 0x400, scoped, tag = 'input window, operand 0, single buffered']
    #allocation3 [shape = 's32[1]{0}', space=sflag, size = 0x4, scoped, tag = 'scoped memory for tpu_custom_call.1']
    #allocation4 [shape = 's32[1]{0}', space=sflag, size = 0x4, scoped, tag = 'scoped memory for tpu_custom_call.1']
    #allocation5 [shape = 'u8[8192]{0}', space=vmem, size = 0x2000, scoped, tag = 'input window, operand 1, single buffered']
    #allocation6 [shape = 's32[1]{0}', space=sflag, size = 0x4, scoped, tag = 'scoped memory for tpu_custom_call.1']
    #allocation7 [shape = 'u8[8192]{0}', space=vmem, size = 0x2000, scoped, tag = 'input window, operand 2, single buffered']
    #allocation8 [shape = 'u8[512]{0}', space=vmem, size = 0x400, scoped, tag = 'input window, operand 3, single buffered']
    #allocation9 [shape = 's32[1]{0}', space=sflag, size = 0x4, scoped, tag = 'scoped memory for tpu_custom_call.1']
    #allocation10 [shape = 'u8[1114112]{0}', space=vmem, size = 0x110000, scoped, tag = 'input window, operand 4, single buffered']
    #allocation11 [shape = 'u8[8704]{0}', space=vmem, size = 0x2400, scoped, tag = 'input window, operand 5, single buffered']
    #allocation12 [shape = 's32[1]{0}', space=sflag, size = 0x4, scoped, tag = 'scoped memory for tpu_custom_call.1']
    #allocation13 [shape = 'u8[262144]{0}', space=vmem, size = 0x40000, scoped, tag = 'input window, operand 6, single buffered']
    #allocation14 [shape = 'u8[16384]{0}', space=vmem, size = 0x4000, scoped, tag = 'input window, operand 7, single buffered']
    #allocation15 [shape = 's32[1]{0}', space=sflag, size = 0x4, scoped, tag = 'scoped memory for tpu_custom_call.1']
    #allocation16 [shape = 'u8[512]{0}', space=vmem, size = 0x400, scoped, tag = 'input window, operand 8, single buffered']
    #allocation17 [shape = 'u8[512]{0}', space=vmem, size = 0x400, scoped, tag = 'input window, operand 10, single buffered']
    #allocation18 [shape = 's32[1]{0}', space=sflag, size = 0x4, scoped, tag = 'scoped memory for tpu_custom_call.1']
    #allocation19 [shape = 'u8[512]{0}', space=vmem, size = 0x400, scoped, tag = 'input window, operand 11, single buffered']
    #allocation20 [shape = 'u8[512]{0}', space=vmem, size = 0x400, scoped, tag = 'input window, operand 12, single buffered']
    #allocation21 [shape = 's32[1]{0}', space=sflag, size = 0x4, scoped, tag = 'scoped memory for tpu_custom_call.1']
    #allocation22 [shape = 'u8[512]{0}', space=vmem, size = 0x400, scoped, tag = 'input window, operand 13, single buffered']
    #allocation23 [shape = 'u8[512]{0}', space=vmem, size = 0x400, scoped, tag = 'input window, operand 14, single buffered']
    #allocation24 [shape = 's32[1]{0}', space=sflag, size = 0x4, scoped, tag = 'scoped memory for tpu_custom_call.1']
    #allocation25 [shape = 'u8[8192]{0}', space=vmem, size = 0x2000, scoped, tag = 'output window, operand 0, single buffered']
    %20 = vsyncpa [#allocation3], 0
    %21 = vsyncpa [#allocation6], 0
    %22 = vsyncpa [#allocation9], 0
    %23 = vsyncpa [#allocation12], 0
    %24 = vsyncpa [#allocation15], 0
    %25 = vsyncpa [#allocation18], 0
    %26 = vsyncpa [#allocation21], 0
    %27 = vsyncpa [#allocation24], 0
    %28 = vsyncpa [#allocation4], 0
    // Predicated region
    $region2: #{tpu_custom_call.1} parent=1 // pred_check
      _
    $region3: #{tpu_custom_call.1} parent=1 // pred_check_branch
      %30 = sbr.rel (0) target = $region5
    $region4: #{tpu_custom_call.1} parent=1 // pred_region
      %s32 = ssub.s32 32, 32
      %33 = vsyncadd [#allocation3], %s32
      %s34 = sshll.u32 [#allocation2], 4
      %s35 = int_to_ptr.vmem [resolvable:$true] %s34
      %40 = dma.hbm_to_vmem [thread:$0]  %s0, 32, %s35, [#allocation3], 16, 16, 1
    $region5: #{tpu_custom_call.1} parent=1 // pred_fallthru
      _
    // Predicated region
    $region6: #{tpu_custom_call.1} parent=1 // pred_check
      _
    $region7: #{tpu_custom_call.1} parent=1 // pred_check_branch
      %42 = sbr.rel (0) target = $region9
    $region8: #{tpu_custom_call.1} parent=1 // pred_region
      %s44 = ssub.s32 256, 256
      %45 = vsyncadd [#allocation6], %s44
      %s46 = sshll.u32 [#allocation5], 4
      %s47 = int_to_ptr.vmem [resolvable:$true] %s46
      %52 = dma.hbm_to_vmem [thread:$0]  %s1, 256, %s47, [#allocation6], 128, 128, 8
    $region9: #{tpu_custom_call.1} parent=1 // pred_fallthru
      _
    // Predicated region
    $region10: #{tpu_custom_call.1} parent=1 // pred_check
      _
    $region11: #{tpu_custom_call.1} parent=1 // pred_check_branch
      %54 = sbr.rel (0) target = $region13
    $region12: #{tpu_custom_call.1} parent=1 // pred_region
      %s56 = ssub.s32 256, 256
      %57 = vsyncadd [#allocation6], %s56
      %s58 = sshll.u32 [#allocation7], 4
      %s59 = int_to_ptr.vmem [resolvable:$true] %s58
      %64 = dma.hbm_to_vmem [thread:$0]  %s2, 256, %s59, [#allocation6], 128, 128, 8
    $region13: #{tpu_custom_call.1} parent=1 // pred_fallthru
      _
    // Predicated region
    $region14: #{tpu_custom_call.1} parent=1 // pred_check
      _
    $region15: #{tpu_custom_call.1} parent=1 // pred_check_branch
      %66 = sbr.rel (0) target = $region17
    $region16: #{tpu_custom_call.1} parent=1 // pred_region
      %s68 = ssub.s32 16, 16
      %69 = vsyncadd [#allocation9], %s68
      %s71 = sshll.u32 [#allocation8], 4
      %s72 = int_to_ptr.vmem [resolvable:$true] %s71
      %74 = dma.hbm_to_vmem [thread:$0]  %s3, 16, %s72, [#allocation9]
    $region17: #{tpu_custom_call.1} parent=1 // pred_fallthru
      _
    // Predicated region
    $region18: #{tpu_custom_call.1} parent=1 // pred_check
      _
    $region19: #{tpu_custom_call.1} parent=1 // pred_check_branch
      %76 = sbr.rel (0) target = $region21
    $region20: #{tpu_custom_call.1} parent=1 // pred_region
      %s78 = ssub.s32 34816, 34816
      %79 = vsyncadd [#allocation9], %s78
      %s80 = sshll.u32 [#allocation10], 4
      %s81 = int_to_ptr.vmem [resolvable:$true] %s80
      %86 = dma.hbm_to_vmem [thread:$0]  %s4, 34816, %s81, [#allocation9], 2176, 2176, 136
    $region21: #{tpu_custom_call.1} parent=1 // pred_fallthru
      _
    // Predicated region
    $region22: #{tpu_custom_call.1} parent=1 // pred_check
      _
    $region23: #{tpu_custom_call.1} parent=1 // pred_check_branch
      %88 = sbr.rel (0) target = $region25
    $region24: #{tpu_custom_call.1} parent=1 // pred_region
      %s90 = ssub.s32 272, 272
      %91 = vsyncadd [#allocation12], %s90
      %s93 = sshll.u32 [#allocation11], 4
      %s94 = int_to_ptr.vmem [resolvable:$true] %s93
      %96 = dma.hbm_to_vmem [thread:$0]  %s5, 272, %s94, [#allocation12]
    $region25: #{tpu_custom_call.1} parent=1 // pred_fallthru
      _
    // Predicated region
    $region26: #{tpu_custom_call.1} parent=1 // pred_check
      _
    $region27: #{tpu_custom_call.1} parent=1 // pred_check_branch
      %98 = sbr.rel (0) target = $region29
    $region28: #{tpu_custom_call.1} parent=1 // pred_region
      %s100 = ssub.s32 8192, 8192
      %101 = vsyncadd [#allocation12], %s100
      %s102 = sshll.u32 [#allocation13], 4
      %s103 = int_to_ptr.vmem [resolvable:$true] %s102
      %108 = dma.hbm_to_vmem [thread:$0]  %s6, 8192, %s103, [#allocation12], 128, 128, 8
    $region29: #{tpu_custom_call.1} parent=1 // pred_fallthru
      _
    // Predicated region
    $region30: #{tpu_custom_call.1} parent=1 // pred_check
      _
    $region31: #{tpu_custom_call.1} parent=1 // pred_check_branch
      %110 = sbr.rel (0) target = $region33
    $region32: #{tpu_custom_call.1} parent=1 // pred_region
      %s112 = ssub.s32 512, 512
      %113 = vsyncadd [#allocation15], %s112
      %s114 = sshll.u32 [#allocation14], 4
      %s115 = int_to_ptr.vmem [resolvable:$true] %s114
      %120 = dma.hbm_to_vmem [thread:$0]  %s7, 512, %s115, [#allocation15], 128, 128, 8
    $region33: #{tpu_custom_call.1} parent=1 // pred_fallthru
      _
    // Predicated region
    $region34: #{tpu_custom_call.1} parent=1 // pred_check
      _
    $region35: #{tpu_custom_call.1} parent=1 // pred_check_branch
      %122 = sbr.rel (0) target = $region37
    $region36: #{tpu_custom_call.1} parent=1 // pred_region
      %s124 = ssub.s32 16, 16
      %125 = vsyncadd [#allocation15], %s124
      %s127 = sshll.u32 [#allocation16], 4
      %s128 = int_to_ptr.vmem [resolvable:$true] %s127
      %130 = dma.hbm_to_vmem [thread:$0]  %s8, 16, %s128, [#allocation15]
    $region37: #{tpu_custom_call.1} parent=1 // pred_fallthru
      _
    // Predicated region
    $region38: #{tpu_custom_call.1} parent=1 // pred_check
      _
    $region39: #{tpu_custom_call.1} parent=1 // pred_check_branch
      %132 = sbr.rel (0) target = $region41
    $region40: #{tpu_custom_call.1} parent=1 // pred_region
      _
    $region41: #{tpu_custom_call.1} parent=1 // pred_fallthru
      _
    // Predicated region
    $region42: #{tpu_custom_call.1} parent=1 // pred_check
      _
    $region43: #{tpu_custom_call.1} parent=1 // pred_check_branch
      %134 = sbr.rel (0) target = $region45
    $region44: #{tpu_custom_call.1} parent=1 // pred_region
      %s136 = ssub.s32 16, 16
      %137 = vsyncadd [#allocation18], %s136
      %s139 = sshll.u32 [#allocation17], 4
      %s140 = int_to_ptr.vmem [resolvable:$true] %s139
      %142 = dma.hbm_to_vmem [thread:$0]  %s10, 16, %s140, [#allocation18]
    $region45: #{tpu_custom_call.1} parent=1 // pred_fallthru
      _
    // Predicated region
    $region46: #{tpu_custom_call.1} parent=1 // pred_check
      _
    $region47: #{tpu_custom_call.1} parent=1 // pred_check_branch
      %144 = sbr.rel (0) target = $region49
    $region48: #{tpu_custom_call.1} parent=1 // pred_region
      %s146 = ssub.s32 16, 16
      %147 = vsyncadd [#allocation18], %s146
      %s149 = sshll.u32 [#allocation19], 4
      %s150 = int_to_ptr.vmem [resolvable:$true] %s149
      %152 = dma.hbm_to_vmem [thread:$0]  %s11, 16, %s150, [#allocation18]
    $region49: #{tpu_custom_call.1} parent=1 // pred_fallthru
      _
    // Predicated region
    $region50: #{tpu_custom_call.1} parent=1 // pred_check
      _
    $region51: #{tpu_custom_call.1} parent=1 // pred_check_branch
      %154 = sbr.rel (0) target = $region53
    $region52: #{tpu_custom_call.1} parent=1 // pred_region
      %s156 = ssub.s32 16, 16
      %157 = vsyncadd [#allocation21], %s156
      %s159 = sshll.u32 [#allocation20], 4
      %s160 = int_to_ptr.vmem [resolvable:$true] %s159
      %162 = dma.hbm_to_vmem [thread:$0]  %s12, 16, %s160, [#allocation21]
    $region53: #{tpu_custom_call.1} parent=1 // pred_fallthru
      _
    // Predicated region
    $region54: #{tpu_custom_call.1} parent=1 // pred_check
      _
    $region55: #{tpu_custom_call.1} parent=1 // pred_check_branch
      %164 = sbr.rel (0) target = $region57
    $region56: #{tpu_custom_call.1} parent=1 // pred_region
      %s166 = ssub.s32 16, 16
      %167 = vsyncadd [#allocation21], %s166
      %s169 = sshll.u32 [#allocation22], 4
      %s170 = int_to_ptr.vmem [resolvable:$true] %s169
      %172 = dma.hbm_to_vmem [thread:$0]  %s13, 16, %s170, [#allocation21]
    $region57: #{tpu_custom_call.1} parent=1 // pred_fallthru
      _
    // Predicated region
    $region58: #{tpu_custom_call.1} parent=1 // pred_check
      _
    $region59: #{tpu_custom_call.1} parent=1 // pred_check_branch
      %174 = sbr.rel (0) target = $region61
    $region60: #{tpu_custom_call.1} parent=1 // pred_region
      %s176 = ssub.s32 16, 16
      %177 = vsyncadd [#allocation24], %s176
      %s179 = sshll.u32 [#allocation23], 4
      %s180 = int_to_ptr.vmem [resolvable:$true] %s179
      %182 = dma.hbm_to_vmem [thread:$0]  %s14, 16, %s180, [#allocation24]
    $region61: #{tpu_custom_call.1} parent=1 // pred_fallthru
      _
    // Predicated region
    $region62: #{tpu_custom_call.1} parent=1 // pred_check
      _
    $region63: #{tpu_custom_call.1} parent=1 // pred_check_branch
      %184 = sbr.rel (0) target = $region65
    $region64: #{tpu_custom_call.1} parent=1 // pred_region
      %185 = dma.done [#allocation3], 32
    $region65: #{tpu_custom_call.1} parent=1 // pred_fallthru
      _
    // Predicated region
    $region66: #{tpu_custom_call.1} parent=1 // pred_check
      _
    $region67: #{tpu_custom_call.1} parent=1 // pred_check_branch
      %187 = sbr.rel (0) target = $region69
    $region68: #{tpu_custom_call.1} parent=1 // pred_region
      %188 = dma.done [#allocation6], 256
    $region69: #{tpu_custom_call.1} parent=1 // pred_fallthru
      _
    // Predicated region
    $region70: #{tpu_custom_call.1} parent=1 // pred_check
      _
    $region71: #{tpu_custom_call.1} parent=1 // pred_check_branch
      %190 = sbr.rel (0) target = $region73
    $region72: #{tpu_custom_call.1} parent=1 // pred_region
      %191 = dma.done [#allocation6], 256
    $region73: #{tpu_custom_call.1} parent=1 // pred_fallthru
      _
    // Predicated region
    $region74: #{tpu_custom_call.1} parent=1 // pred_check
      _
    $region75: #{tpu_custom_call.1} parent=1 // pred_check_branch
      %193 = sbr.rel (0) target = $region77
    $region76: #{tpu_custom_call.1} parent=1 // pred_region
      %194 = dma.done [#allocation9], 16
    $region77: #{tpu_custom_call.1} parent=1 // pred_fallthru
      _
    // Predicated region
    $region78: #{tpu_custom_call.1} parent=1 // pred_check
      _
    $region79: #{tpu_custom_call.1} parent=1 // pred_check_branch
      %196 = sbr.rel (0) target = $region81
    $region80: #{tpu_custom_call.1} parent=1 // pred_region
      %197 = dma.done [#allocation9], 34816
    $region81: #{tpu_custom_call.1} parent=1 // pred_fallthru
      _
    // Predicated region
    $region82: #{tpu_custom_call.1} parent=1 // pred_check
      _
    $region83: #{tpu_custom_call.1} parent=1 // pred_check_branch
      %199 = sbr.rel (0) target = $region85
    $region84: #{tpu_custom_call.1} parent=1 // pred_region
      %200 = dma.done [#allocation12], 272
    $region85: #{tpu_custom_call.1} parent=1 // pred_fallthru
      _
    // Predicated region
    $region86: #{tpu_custom_call.1} parent=1 // pred_check
      _
    $region87: #{tpu_custom_call.1} parent=1 // pred_check_branch
      %202 = sbr.rel (0) target = $region89
    $region88: #{tpu_custom_call.1} parent=1 // pred_region
      %203 = dma.done [#allocation12], 8192
    $region89: #{tpu_custom_call.1} parent=1 // pred_fallthru
      _
    // Predicated region
    $region90: #{tpu_custom_call.1} parent=1 // pred_check
      _
    $region91: #{tpu_custom_call.1} parent=1 // pred_check_branch
      %205 = sbr.rel (0) target = $region93
    $region92: #{tpu_custom_call.1} parent=1 // pred_region
      %206 = dma.done [#allocation15], 512
    $region93: #{tpu_custom_call.1} parent=1 // pred_fallthru
      _
    // Predicated region
    $region94: #{tpu_custom_call.1} parent=1 // pred_check
      _
    $region95: #{tpu_custom_call.1} parent=1 // pred_check_branch
      %208 = sbr.rel (0) target = $region97
    $region96: #{tpu_custom_call.1} parent=1 // pred_region
      %209 = dma.done [#allocation15], 16
    $region97: #{tpu_custom_call.1} parent=1 // pred_fallthru
      _
    // Predicated region
    $region98: #{tpu_custom_call.1} parent=1 // pred_check
      _
    $region99: #{tpu_custom_call.1} parent=1 // pred_check_branch
      %211 = sbr.rel (0) target = $region101
    $region100: #{tpu_custom_call.1} parent=1 // pred_region
      %212 = dma.done [#allocation18], 16
    $region101: #{tpu_custom_call.1} parent=1 // pred_fallthru
      _
    // Predicated region
    $region102: #{tpu_custom_call.1} parent=1 // pred_check
      _
    $region103: #{tpu_custom_call.1} parent=1 // pred_check_branch
      %214 = sbr.rel (0) target = $region105
    $region104: #{tpu_custom_call.1} parent=1 // pred_region
      %215 = dma.done [#allocation18], 16
    $region105: #{tpu_custom_call.1} parent=1 // pred_fallthru
      _
    // Predicated region
    $region106: #{tpu_custom_call.1} parent=1 // pred_check
      _
    $region107: #{tpu_custom_call.1} parent=1 // pred_check_branch
      %217 = sbr.rel (0) target = $region109
    $region108: #{tpu_custom_call.1} parent=1 // pred_region
      %218 = dma.done [#allocation21], 16
    $region109: #{tpu_custom_call.1} parent=1 // pred_fallthru
      _
    // Predicated region
    $region110: #{tpu_custom_call.1} parent=1 // pred_check
      _
    $region111: #{tpu_custom_call.1} parent=1 // pred_check_branch
      %220 = sbr.rel (0) target = $region113
    $region112: #{tpu_custom_call.1} parent=1 // pred_region
      %221 = dma.done [#allocation21], 16
    $region113: #{tpu_custom_call.1} parent=1 // pred_fallthru
      _
    // Predicated region
    $region114: #{tpu_custom_call.1} parent=1 // pred_check
      _
    $region115: #{tpu_custom_call.1} parent=1 // pred_check_branch
      %223 = sbr.rel (0) target = $region117
    $region116: #{tpu_custom_call.1} parent=1 // pred_region
      %224 = dma.done [#allocation24], 16
    $region117: #{tpu_custom_call.1} parent=1 // pred_fallthru
      _
    %v225 = vld [vmem:[#allocation2] sm:$0x1]
    %s226 = scalar_lea.vmem [#allocation2], 1
    %v227 = vld [vmem:[%s226] sm:$0x1]
    %v229 = vlaneseq
    %v230 = vshrl.u32 %v229, 7
    %v231 = vsub.s32 0, %v230
    %v232 = vrot.slane %v227, %v231
    %vm234 = vcmask 1040384
    %v235 = vsel %vm234, %v225, %v232
    %v236 = vld [vmem:[#allocation7] sm:$0xff]
    %v237 = vld [vmem:[#allocation7 + $0x8] sm:$0xff]
    %v238 = vld [vmem:[#allocation8] sm:$0x1]
    %v240 = vlaneseq
    %v241 = vshrl.u32 %v240, 7
    %v242 = vsub.s32 0, %v241
    %v243 = vrot.slane %v238, %v242
    %vm245 = vcmask 130048
    %v247 = vsel %vm245, %v235, 0
    %249 = vmatprep.subr.mxu0 0.0
    %250 = vmatpush1.msra.mxu0 %v236
    %251 = vmatprep.subr.mxu0 0.0
    %252 = vmatpush1.msra.mxu0 %v237
    %253 = vmatprep.subr.mxu0 0.0
    %254 = vmatpush1.msra.mxu0 0.0
    %255 = vmatprep.subr.mxu0 0.0
    %256 = vmatpush1.msra.mxu0 0.0
    %257 = vmatprep.subr.mxu0 0.0
    %258 = vmatpush1.msra.mxu0 0.0
    %259 = vmatprep.subr.mxu0 0.0
    %260 = vmatpush1.msra.mxu0 0.0
    %261 = vmatprep.subr.mxu0 0.0
    %262 = vmatpush1.msra.mxu0 0.0
    %263 = vmatprep.subr.mxu0 0.0
    %264 = vmatpush1.msra.mxu0 0.0
    %265 = vmatprep.subr.mxu0 0.0
    %266 = vmatpush1.msra.mxu0 0.0
    %267 = vmatprep.subr.mxu0 0.0
    %268 = vmatpush1.msra.mxu0 0.0
    %269 = vmatprep.subr.mxu0 0.0
    %270 = vmatpush1.msra.mxu0 0.0
    %271 = vmatprep.subr.mxu0 0.0
    %272 = vmatpush1.msra.mxu0 0.0
    %273 = vmatprep.subr.mxu0 0.0
    %274 = vmatpush1.msra.mxu0 0.0
    %275 = vmatprep.subr.mxu0 0.0
    %276 = vmatpush1.msra.mxu0 0.0
    %277 = vmatprep.subr.mxu0 0.0
    %278 = vmatpush1.msra.mxu0 0.0
    %279 = vmatprep.subr.mxu0 0.0
    %280 = vmatpush1.msra.mxu0 0.0
    %281 = vmatprep.subr.mxu0 0.0
    %282 = vmatpush1.msra.mxu0 0.0
    %283 = vmatprep.subr.mxu0 0.0
    %284 = vmatpush1.msra.mxu0 0.0
    %285 = vmatprep.subr.mxu0 0.0
    %286 = vmatpush1.msra.mxu0 0.0
    %287 = vmatprep.subr.mxu0 0.0
    %288 = vmatpush1.msra.mxu0 0.0
    %289 = vmatprep.subr.mxu0 0.0
    %290 = vmatpush1.msra.mxu0 0.0
    %291 = vmatprep.subr.mxu0 0.0
    %292 = vmatpush1.msra.mxu0 0.0
    %293 = vmatprep.subr.mxu0 0.0
    %294 = vmatpush1.msra.mxu0 0.0
    %295 = vmatprep.subr.mxu0 0.0
    %296 = vmatpush1.msra.mxu0 0.0
    %297 = vmatprep.subr.mxu0 0.0
    %298 = vmatpush1.msra.mxu0 0.0
    %299 = vmatprep.subr.mxu0 0.0
    %300 = vmatpush1.msra.mxu0 0.0
    %301 = vmatprep.subr.mxu0 0.0
    %302 = vmatpush1.msra.mxu0 0.0
    %303 = vmatprep.subr.mxu0 0.0
    %304 = vmatpush1.msra.mxu0 0.0
    %305 = vmatprep.subr.mxu0 0.0
    %306 = vmatpush1.msra.mxu0 0.0
    %307 = vmatprep.subr.mxu0 0.0
    %308 = vmatpush1.msra.mxu0 0.0
    %309 = vmatprep.subr.mxu0 0.0
    %310 = vmatpush1.msra.mxu0 0.0
    %311 = vmatprep.subr.mxu0 0.0
    %312 = vmatpush1.msra.mxu0 0.0
    %313 = vmatprep.mubr.f32.mxu0 0.0
    %314 = vmatmul.mubr.f32.gmra.mrb[0].mxu0 %v247
    %v315 = vpop.f32.mrb[0].mxu0
    %v316 = vadd.f32 %v243, %v315
    %v317 = vpop.f32.mrb[0].mxu0
    %318 = vdwg.mxu0
    %v319 = vmax.f32 %v316, 0.0
    %v320 = vld [vmem:[#allocation10] sm:$0xff]
    %v321 = vld [vmem:[#allocation10 + $0x8] sm:$0xff]
    %v322 = vld [vmem:[#allocation10 + $0x10] sm:$0xff]
    %v323 = vld [vmem:[#allocation10 + $0x18] sm:$0xff]
    %v324 = vld [vmem:[#allocation10 + $0x20] sm:$0xff]
    %v325 = vld [vmem:[#allocation10 + $0x28] sm:$0xff]
    %v326 = vld [vmem:[#allocation10 + $0x30] sm:$0xff]
    %v327 = vld [vmem:[#allocation10 + $0x38] sm:$0xff]
    %v328 = vld [vmem:[#allocation10 + $0x40] sm:$0xff]
    %v329 = vld [vmem:[#allocation10 + $0x48] sm:$0xff]
    %v330 = vld [vmem:[#allocation10 + $0x50] sm:$0xff]
    %v331 = vld [vmem:[#allocation10 + $0x58] sm:$0xff]
    %v332 = vld [vmem:[#allocation10 + $0x60] sm:$0xff]
    %v333 = vld [vmem:[#allocation10 + $0x68] sm:$0xff]
    %v334 = vld [vmem:[#allocation10 + $0x70] sm:$0xff]
    %v335 = vld [vmem:[#allocation10 + $0x78] sm:$0xff]
    %v336 = vld [vmem:[#allocation10 + $0x80] sm:$0xff]
    %v337 = vld [vmem:[#allocation10 + $0x88] sm:$0xff]
    %v338 = vld [vmem:[#allocation10 + $0x90] sm:$0xff]
    %v339 = vld [vmem:[#allocation10 + $0x98] sm:$0xff]
    %v340 = vld [vmem:[#allocation10 + $0xa0] sm:$0xff]
    %v341 = vld [vmem:[#allocation10 + $0xa8] sm:$0xff]
    %v342 = vld [vmem:[#allocation10 + $0xb0] sm:$0xff]
    %v343 = vld [vmem:[#allocation10 + $0xb8] sm:$0xff]
    %v344 = vld [vmem:[#allocation10 + $0xc0] sm:$0xff]
    %v345 = vld [vmem:[#allocation10 + $0xc8] sm:$0xff]
    %v346 = vld [vmem:[#allocation10 + $0xd0] sm:$0xff]
    %v347 = vld [vmem:[#allocation10 + $0xd8] sm:$0xff]
    %v348 = vld [vmem:[#allocation10 + $0xe0] sm:$0xff]
    %v349 = vld [vmem:[#allocation10 + $0xe8] sm:$0xff]
    %v350 = vld [vmem:[#allocation10 + $0xf0] sm:$0xff]
    %v351 = vld [vmem:[#allocation10 + $0xf8] sm:$0xff]
    %v352 = vld [vmem:[#allocation10 + $0x100] sm:$0xff]
    %v353 = vld [vmem:[#allocation10 + $0x108] sm:$0xff]
    %v354 = vld [vmem:[#allocation10 + $0x110] sm:$0xff]
    %v355 = vld [vmem:[#allocation10 + $0x118] sm:$0xff]
    %v356 = vld [vmem:[#allocation10 + $0x120] sm:$0xff]
    %v357 = vld [vmem:[#allocation10 + $0x128] sm:$0xff]
    %v358 = vld [vmem:[#allocation10 + $0x130] sm:$0xff]
    %v359 = vld [vmem:[#allocation10 + $0x138] sm:$0xff]
    %v360 = vld [vmem:[#allocation10 + $0x140] sm:$0xff]
    %v361 = vld [vmem:[#allocation10 + $0x148] sm:$0xff]
    %v362 = vld [vmem:[#allocation10 + $0x150] sm:$0xff]
    %v363 = vld [vmem:[#allocation10 + $0x158] sm:$0xff]
    %v364 = vld [vmem:[#allocation10 + $0x160] sm:$0xff]
    %v365 = vld [vmem:[#allocation10 + $0x168] sm:$0xff]
    %v366 = vld [vmem:[#allocation10 + $0x170] sm:$0xff]
    %v367 = vld [vmem:[#allocation10 + $0x178] sm:$0xff]
    %v368 = vld [vmem:[#allocation10 + $0x180] sm:$0xff]
    %v369 = vld [vmem:[#allocation10 + $0x188] sm:$0xff]
    %v370 = vld [vmem:[#allocation10 + $0x190] sm:$0xff]
    %v371 = vld [vmem:[#allocation10 + $0x198] sm:$0xff]
    %v372 = vld [vmem:[#allocation10 + $0x1a0] sm:$0xff]
    %v373 = vld [vmem:[#allocation10 + $0x1a8] sm:$0xff]
    %v374 = vld [vmem:[#allocation10 + $0x1b0] sm:$0xff]
    %v375 = vld [vmem:[#allocation10 + $0x1b8] sm:$0xff]
    %v376 = vld [vmem:[#allocation10 + $0x1c0] sm:$0xff]
    %v377 = vld [vmem:[#allocation10 + $0x1c8] sm:$0xff]
    %v378 = vld [vmem:[#allocation10 + $0x1d0] sm:$0xff]
    %v379 = vld [vmem:[#allocation10 + $0x1d8] sm:$0xff]
    %v380 = vld [vmem:[#allocation10 + $0x1e0] sm:$0xff]
    %v381 = vld [vmem:[#allocation10 + $0x1e8] sm:$0xff]
    %v382 = vld [vmem:[#allocation10 + $0x1f0] sm:$0xff]
    %v383 = vld [vmem:[#allocation10 + $0x1f8] sm:$0xff]
    %v384 = vld [vmem:[#allocation10 + $0x200] sm:$0xff]
    %v385 = vld [vmem:[#allocation10 + $0x208] sm:$0xff]
    %v386 = vld [vmem:[#allocation10 + $0x210] sm:$0xff]
    %v387 = vld [vmem:[#allocation10 + $0x218] sm:$0xff]
    %v388 = vld [vmem:[#allocation10 + $0x220] sm:$0xff]
    %v389 = vld [vmem:[#allocation10 + $0x228] sm:$0xff]
    %v390 = vld [vmem:[#allocation10 + $0x230] sm:$0xff]
    %v391 = vld [vmem:[#allocation10 + $0x238] sm:$0xff]
    %v392 = vld [vmem:[#allocation10 + $0x240] sm:$0xff]
    %v393 = vld [vmem:[#allocation10 + $0x248] sm:$0xff]
    %v394 = vld [vmem:[#allocation10 + $0x250] sm:$0xff]
    %v395 = vld [vmem:[#allocation10 + $0x258] sm:$0xff]
    %v396 = vld [vmem:[#allocation10 + $0x260] sm:$0xff]
    %v397 = vld [vmem:[#allocation10 + $0x268] sm:$0xff]
    %v398 = vld [vmem:[#allocation10 + $0x270] sm:$0xff]
    %v399 = vld [vmem:[#allocation10 + $0x278] sm:$0xff]
    %v400 = vld [vmem:[#allocation10 + $0x280] sm:$0xff]
    %v401 = vld [vmem:[#allocation10 + $0x288] sm:$0xff]
    %v402 = vld [vmem:[#allocation10 + $0x290] sm:$0xff]
    %v403 = vld [vmem:[#allocation10 + $0x298] sm:$0xff]
    %v404 = vld [vmem:[#allocation10 + $0x2a0] sm:$0xff]
    %v405 = vld [vmem:[#allocation10 + $0x2a8] sm:$0xff]
    %v406 = vld [vmem:[#allocation10 + $0x2b0] sm:$0xff]
    %v407 = vld [vmem:[#allocation10 + $0x2b8] sm:$0xff]
    %v408 = vld [vmem:[#allocation10 + $0x2c0] sm:$0xff]
    %v409 = vld [vmem:[#allocation10 + $0x2c8] sm:$0xff]
    %v410 = vld [vmem:[#allocation10 + $0x2d0] sm:$0xff]
    %v411 = vld [vmem:[#allocation10 + $0x2d8] sm:$0xff]
    %v412 = vld [vmem:[#allocation10 + $0x2e0] sm:$0xff]
    %v413 = vld [vmem:[#allocation10 + $0x2e8] sm:$0xff]
    %v414 = vld [vmem:[#allocation10 + $0x2f0] sm:$0xff]
    %v415 = vld [vmem:[#allocation10 + $0x2f8] sm:$0xff]
    %v416 = vld [vmem:[#allocation10 + $0x300] sm:$0xff]
    %v417 = vld [vmem:[#allocation10 + $0x308] sm:$0xff]
    %v418 = vld [vmem:[#allocation10 + $0x310] sm:$0xff]
    %v419 = vld [vmem:[#allocation10 + $0x318] sm:$0xff]
    %v420 = vld [vmem:[#allocation10 + $0x320] sm:$0xff]
    %v421 = vld [vmem:[#allocation10 + $0x328] sm:$0xff]
    %v422 = vld [vmem:[#allocation10 + $0x330] sm:$0xff]
    %v423 = vld [vmem:[#allocation10 + $0x338] sm:$0xff]
    %v424 = vld [vmem:[#allocation10 + $0x340] sm:$0xff]
    %v425 = vld [vmem:[#allocation10 + $0x348] sm:$0xff]
    %v426 = vld [vmem:[#allocation10 + $0x350] sm:$0xff]
    %v427 = vld [vmem:[#allocation10 + $0x358] sm:$0xff]
    %v428 = vld [vmem:[#allocation10 + $0x360] sm:$0xff]
    %v429 = vld [vmem:[#allocation10 + $0x368] sm:$0xff]
    %v430 = vld [vmem:[#allocation10 + $0x370] sm:$0xff]
    %v431 = vld [vmem:[#allocation10 + $0x378] sm:$0xff]
    %v432 = vld [vmem:[#allocation10 + $0x380] sm:$0xff]
    %v433 = vld [vmem:[#allocation10 + $0x388] sm:$0xff]
    %v434 = vld [vmem:[#allocation10 + $0x390] sm:$0xff]
    %v435 = vld [vmem:[#allocation10 + $0x398] sm:$0xff]
    %v436 = vld [vmem:[#allocation10 + $0x3a0] sm:$0xff]
    %v437 = vld [vmem:[#allocation10 + $0x3a8] sm:$0xff]
    %v438 = vld [vmem:[#allocation10 + $0x3b0] sm:$0xff]
    %v439 = vld [vmem:[#allocation10 + $0x3b8] sm:$0xff]
    %v440 = vld [vmem:[#allocation10 + $0x3c0] sm:$0xff]
    %v441 = vld [vmem:[#allocation10 + $0x3c8] sm:$0xff]
    %v442 = vld [vmem:[#allocation10 + $0x3d0] sm:$0xff]
    %v443 = vld [vmem:[#allocation10 + $0x3d8] sm:$0xff]
    %v444 = vld [vmem:[#allocation10 + $0x3e0] sm:$0xff]
    %v445 = vld [vmem:[#allocation10 + $0x3e8] sm:$0xff]
    %v446 = vld [vmem:[#allocation10 + $0x3f0] sm:$0xff]
    %v447 = vld [vmem:[#allocation10 + $0x3f8] sm:$0xff]
    %v448 = vld [vmem:[#allocation10 + $0x400] sm:$0xff]
    %v449 = vld [vmem:[#allocation10 + $0x408] sm:$0xff]
    %v450 = vld [vmem:[#allocation10 + $0x410] sm:$0xff]
    %v451 = vld [vmem:[#allocation10 + $0x418] sm:$0xff]
    %v452 = vld [vmem:[#allocation10 + $0x420] sm:$0xff]
    %v453 = vld [vmem:[#allocation10 + $0x428] sm:$0xff]
    %v454 = vld [vmem:[#allocation10 + $0x430] sm:$0xff]
    %v455 = vld [vmem:[#allocation10 + $0x438] sm:$0xff]
    %v456 = vld [vmem:[#allocation10 + $0x440] sm:$0xff]
    %v457 = vld [vmem:[#allocation10 + $0x448] sm:$0xff]
    %v458 = vld [vmem:[#allocation10 + $0x450] sm:$0xff]
    %v459 = vld [vmem:[#allocation10 + $0x458] sm:$0xff]
    %v460 = vld [vmem:[#allocation10 + $0x460] sm:$0xff]
    %v461 = vld [vmem:[#allocation10 + $0x468] sm:$0xff]
    %v462 = vld [vmem:[#allocation10 + $0x470] sm:$0xff]
    %v463 = vld [vmem:[#allocation10 + $0x478] sm:$0xff]
    %v464 = vld [vmem:[#allocation10 + $0x480] sm:$0xff]
    %v465 = vld [vmem:[#allocation10 + $0x488] sm:$0xff]
    %v466 = vld [vmem:[#allocation10 + $0x490] sm:$0xff]
    %v467 = vld [vmem:[#allocation10 + $0x498] sm:$0xff]
    %v468 = vld [vmem:[#allocation10 + $0x4a0] sm:$0xff]
    %v469 = vld [vmem:[#allocation10 + $0x4a8] sm:$0xff]
    %v470 = vld [vmem:[#allocation10 + $0x4b0] sm:$0xff]
    %v471 = vld [vmem:[#allocation10 + $0x4b8] sm:$0xff]
    %v472 = vld [vmem:[#allocation10 + $0x4c0] sm:$0xff]
    %v473 = vld [vmem:[#allocation10 + $0x4c8] sm:$0xff]
    %v474 = vld [vmem:[#allocation10 + $0x4d0] sm:$0xff]
    %v475 = vld [vmem:[#allocation10 + $0x4d8] sm:$0xff]
    %v476 = vld [vmem:[#allocation10 + $0x4e0] sm:$0xff]
    %v477 = vld [vmem:[#allocation10 + $0x4e8] sm:$0xff]
    %v478 = vld [vmem:[#allocation10 + $0x4f0] sm:$0xff]
    %v479 = vld [vmem:[#allocation10 + $0x4f8] sm:$0xff]
    %v480 = vld [vmem:[#allocation10 + $0x500] sm:$0xff]
    %v481 = vld [vmem:[#allocation10 + $0x508] sm:$0xff]
    %v482 = vld [vmem:[#allocation10 + $0x510] sm:$0xff]
    %v483 = vld [vmem:[#allocation10 + $0x518] sm:$0xff]
    %v484 = vld [vmem:[#allocation10 + $0x520] sm:$0xff]
    %v485 = vld [vmem:[#allocation10 + $0x528] sm:$0xff]
    %v486 = vld [vmem:[#allocation10 + $0x530] sm:$0xff]
    %v487 = vld [vmem:[#allocation10 + $0x538] sm:$0xff]
    %v488 = vld [vmem:[#allocation10 + $0x540] sm:$0xff]
    %v489 = vld [vmem:[#allocation10 + $0x548] sm:$0xff]
    %v490 = vld [vmem:[#allocation10 + $0x550] sm:$0xff]
    %v491 = vld [vmem:[#allocation10 + $0x558] sm:$0xff]
    %v492 = vld [vmem:[#allocation10 + $0x560] sm:$0xff]
    %v493 = vld [vmem:[#allocation10 + $0x568] sm:$0xff]
    %v494 = vld [vmem:[#allocation10 + $0x570] sm:$0xff]
    %v495 = vld [vmem:[#allocation10 + $0x578] sm:$0xff]
    %v496 = vld [vmem:[#allocation10 + $0x580] sm:$0xff]
    %v497 = vld [vmem:[#allocation10 + $0x588] sm:$0xff]
    %v498 = vld [vmem:[#allocation10 + $0x590] sm:$0xff]
    %v499 = vld [vmem:[#allocation10 + $0x598] sm:$0xff]
    %v500 = vld [vmem:[#allocation10 + $0x5a0] sm:$0xff]
    %v501 = vld [vmem:[#allocation10 + $0x5a8] sm:$0xff]
    %v502 = vld [vmem:[#allocation10 + $0x5b0] sm:$0xff]
    %v503 = vld [vmem:[#allocation10 + $0x5b8] sm:$0xff]
    %v504 = vld [vmem:[#allocation10 + $0x5c0] sm:$0xff]
    %v505 = vld [vmem:[#allocation10 + $0x5c8] sm:$0xff]
    %v506 = vld [vmem:[#allocation10 + $0x5d0] sm:$0xff]
    %v507 = vld [vmem:[#allocation10 + $0x5d8] sm:$0xff]
    %v508 = vld [vmem:[#allocation10 + $0x5e0] sm:$0xff]
    %v509 = vld [vmem:[#allocation10 + $0x5e8] sm:$0xff]
    %v510 = vld [vmem:[#allocation10 + $0x5f0] sm:$0xff]
    %v511 = vld [vmem:[#allocation10 + $0x5f8] sm:$0xff]
    %v512 = vld [vmem:[#allocation10 + $0x600] sm:$0xff]
    %v513 = vld [vmem:[#allocation10 + $0x608] sm:$0xff]
    %v514 = vld [vmem:[#allocation10 + $0x610] sm:$0xff]
    %v515 = vld [vmem:[#allocation10 + $0x618] sm:$0xff]
    %v516 = vld [vmem:[#allocation10 + $0x620] sm:$0xff]
    %v517 = vld [vmem:[#allocation10 + $0x628] sm:$0xff]
    %v518 = vld [vmem:[#allocation10 + $0x630] sm:$0xff]
    %v519 = vld [vmem:[#allocation10 + $0x638] sm:$0xff]
    %v520 = vld [vmem:[#allocation10 + $0x640] sm:$0xff]
    %v521 = vld [vmem:[#allocation10 + $0x648] sm:$0xff]
    %v522 = vld [vmem:[#allocation10 + $0x650] sm:$0xff]
    %v523 = vld [vmem:[#allocation10 + $0x658] sm:$0xff]
    %v524 = vld [vmem:[#allocation10 + $0x660] sm:$0xff]
    %v525 = vld [vmem:[#allocation10 + $0x668] sm:$0xff]
    %v526 = vld [vmem:[#allocation10 + $0x670] sm:$0xff]
    %v527 = vld [vmem:[#allocation10 + $0x678] sm:$0xff]
    %v528 = vld [vmem:[#allocation10 + $0x680] sm:$0xff]
    %v529 = vld [vmem:[#allocation10 + $0x688] sm:$0xff]
    %v530 = vld [vmem:[#allocation10 + $0x690] sm:$0xff]
    %v531 = vld [vmem:[#allocation10 + $0x698] sm:$0xff]
    %v532 = vld [vmem:[#allocation10 + $0x6a0] sm:$0xff]
    %v533 = vld [vmem:[#allocation10 + $0x6a8] sm:$0xff]
    %v534 = vld [vmem:[#allocation10 + $0x6b0] sm:$0xff]
    %v535 = vld [vmem:[#allocation10 + $0x6b8] sm:$0xff]
    %v536 = vld [vmem:[#allocation10 + $0x6c0] sm:$0xff]
    %v537 = vld [vmem:[#allocation10 + $0x6c8] sm:$0xff]
    %v538 = vld [vmem:[#allocation10 + $0x6d0] sm:$0xff]
    %v539 = vld [vmem:[#allocation10 + $0x6d8] sm:$0xff]
    %v540 = vld [vmem:[#allocation10 + $0x6e0] sm:$0xff]
    %v541 = vld [vmem:[#allocation10 + $0x6e8] sm:$0xff]
    %v542 = vld [vmem:[#allocation10 + $0x6f0] sm:$0xff]
    %v543 = vld [vmem:[#allocation10 + $0x6f8] sm:$0xff]
    %v544 = vld [vmem:[#allocation10 + $0x700] sm:$0xff]
    %v545 = vld [vmem:[#allocation10 + $0x708] sm:$0xff]
    %v546 = vld [vmem:[#allocation10 + $0x710] sm:$0xff]
    %v547 = vld [vmem:[#allocation10 + $0x718] sm:$0xff]
    %v548 = vld [vmem:[#allocation10 + $0x720] sm:$0xff]
    %v549 = vld [vmem:[#allocation10 + $0x728] sm:$0xff]
    %v550 = vld [vmem:[#allocation10 + $0x730] sm:$0xff]
    %v551 = vld [vmem:[#allocation10 + $0x738] sm:$0xff]
    %v552 = vld [vmem:[#allocation10 + $0x740] sm:$0xff]
    %v553 = vld [vmem:[#allocation10 + $0x748] sm:$0xff]
    %v554 = vld [vmem:[#allocation10 + $0x750] sm:$0xff]
    %v555 = vld [vmem:[#allocation10 + $0x758] sm:$0xff]
    %v556 = vld [vmem:[#allocation10 + $0x760] sm:$0xff]
    %v557 = vld [vmem:[#allocation10 + $0x768] sm:$0xff]
    %v558 = vld [vmem:[#allocation10 + $0x770] sm:$0xff]
    %v559 = vld [vmem:[#allocation10 + $0x778] sm:$0xff]
    %v560 = vld [vmem:[#allocation10 + $0x780] sm:$0xff]
    %v561 = vld [vmem:[#allocation10 + $0x788] sm:$0xff]
    %v562 = vld [vmem:[#allocation10 + $0x790] sm:$0xff]
    %v563 = vld [vmem:[#allocation10 + $0x798] sm:$0xff]
    %v564 = vld [vmem:[#allocation10 + $0x7a0] sm:$0xff]
    %v565 = vld [vmem:[#allocation10 + $0x7a8] sm:$0xff]
    %v566 = vld [vmem:[#allocation10 + $0x7b0] sm:$0xff]
    %v567 = vld [vmem:[#allocation10 + $0x7b8] sm:$0xff]
    %v568 = vld [vmem:[#allocation10 + $0x7c0] sm:$0xff]
    %v569 = vld [vmem:[#allocation10 + $0x7c8] sm:$0xff]
    %v570 = vld [vmem:[#allocation10 + $0x7d0] sm:$0xff]
    %v571 = vld [vmem:[#allocation10 + $0x7d8] sm:$0xff]
    %v572 = vld [vmem:[#allocation10 + $0x7e0] sm:$0xff]
    %v573 = vld [vmem:[#allocation10 + $0x7e8] sm:$0xff]
    %v574 = vld [vmem:[#allocation10 + $0x7f0] sm:$0xff]
    %v575 = vld [vmem:[#allocation10 + $0x7f8] sm:$0xff]
    %v576 = vld [vmem:[#allocation10 + $0x800] sm:$0xff]
    %v577 = vld [vmem:[#allocation10 + $0x808] sm:$0xff]
    %v578 = vld [vmem:[#allocation10 + $0x810] sm:$0xff]
    %v579 = vld [vmem:[#allocation10 + $0x818] sm:$0xff]
    %v580 = vld [vmem:[#allocation10 + $0x820] sm:$0xff]
    %v581 = vld [vmem:[#allocation10 + $0x828] sm:$0xff]
    %v582 = vld [vmem:[#allocation10 + $0x830] sm:$0xff]
    %v583 = vld [vmem:[#allocation10 + $0x838] sm:$0xff]
    %v584 = vld [vmem:[#allocation10 + $0x840] sm:$0xff]
    %v585 = vld [vmem:[#allocation10 + $0x848] sm:$0xff]
    %v586 = vld [vmem:[#allocation10 + $0x850] sm:$0xff]
    %v587 = vld [vmem:[#allocation10 + $0x858] sm:$0xff]
    %v588 = vld [vmem:[#allocation10 + $0x860] sm:$0xff]
    %v589 = vld [vmem:[#allocation10 + $0x868] sm:$0xff]
    %v590 = vld [vmem:[#allocation10 + $0x870] sm:$0xff]
    %v591 = vld [vmem:[#allocation10 + $0x878] sm:$0xff]
    %v592 = vld [vmem:[#allocation11] sm:$0xff]
    %v593 = vld [vmem:[#allocation11 + $0x8] sm:$0xff]
    %v594 = vld [vmem:[#allocation11 + $0x10] sm:$0x1]
    %v598 = vlaneseq
    %v599 = vshrl.u32 %v598, 7
    %v600 = vsub.s32 0, %v599
    %v601 = vrot.slane %v592, %v600
    %v602 = vlaneseq
    %v603 = vshrl.u32 %v602, 7
    %v604 = vsub.s32 1, %v603
    %v605 = vrot.slane %v592, %v604
    %v606 = vlaneseq
    %v607 = vshrl.u32 %v606, 7
    %v608 = vsub.s32 2, %v607
    %v609 = vrot.slane %v592, %v608
    %v610 = vlaneseq
    %v611 = vshrl.u32 %v610, 7
    %v612 = vsub.s32 3, %v611
    %v613 = vrot.slane %v592, %v612
    %v614 = vlaneseq
    %v615 = vshrl.u32 %v614, 7
    %v616 = vsub.s32 4, %v615
    %v617 = vrot.slane %v592, %v616
    %v618 = vlaneseq
    %v619 = vshrl.u32 %v618, 7
    %v620 = vsub.s32 5, %v619
    %v621 = vrot.slane %v592, %v620
    %v622 = vlaneseq
    %v623 = vshrl.u32 %v622, 7
    %v624 = vsub.s32 6, %v623
    %v625 = vrot.slane %v592, %v624
    %v626 = vlaneseq
    %v627 = vshrl.u32 %v626, 7
    %v628 = vsub.s32 7, %v627
    %v629 = vrot.slane %v592, %v628
    %v630 = vlaneseq
    %v631 = vshrl.u32 %v630, 7
    %v632 = vsub.s32 0, %v631
    %v633 = vrot.slane %v593, %v632
    %v634 = vlaneseq
    %v635 = vshrl.u32 %v634, 7
    %v636 = vsub.s32 1, %v635
    %v637 = vrot.slane %v593, %v636
    %v638 = vlaneseq
    %v639 = vshrl.u32 %v638, 7
    %v640 = vsub.s32 2, %v639
    %v641 = vrot.slane %v593, %v640
    %v642 = vlaneseq
    %v643 = vshrl.u32 %v642, 7
    %v644 = vsub.s32 3, %v643
    %v645 = vrot.slane %v593, %v644
    %v646 = vlaneseq
    %v647 = vshrl.u32 %v646, 7
    %v648 = vsub.s32 4, %v647
    %v649 = vrot.slane %v593, %v648
    %v650 = vlaneseq
    %v651 = vshrl.u32 %v650, 7
    %v652 = vsub.s32 5, %v651
    %v653 = vrot.slane %v593, %v652
    %v654 = vlaneseq
    %v655 = vshrl.u32 %v654, 7
    %v656 = vsub.s32 6, %v655
    %v657 = vrot.slane %v593, %v656
    %v658 = vlaneseq
    %v659 = vshrl.u32 %v658, 7
    %v660 = vsub.s32 7, %v659
    %v661 = vrot.slane %v593, %v660
    %v662 = vlaneseq
    %v663 = vshrl.u32 %v662, 7
    %v664 = vsub.s32 0, %v663
    %v665 = vrot.slane %v594, %v664
    %683 = vmatprep.subr.mxu0 %v321
    %684 = vmatpush1.msra.mxu0 %v320
    %685 = vmatprep.subr.mxu0 %v338
    %686 = vmatpush1.msra.mxu0 %v337
    %687 = vmatprep.subr.mxu0 %v355
    %688 = vmatpush1.msra.mxu0 %v354
    %689 = vmatprep.subr.mxu0 %v372
    %690 = vmatpush1.msra.mxu0 %v371
    %691 = vmatprep.subr.mxu0 %v389
    %692 = vmatpush1.msra.mxu0 %v388
    %693 = vmatprep.subr.mxu0 %v406
    %694 = vmatpush1.msra.mxu0 %v405
    %695 = vmatprep.subr.mxu0 %v423
    %696 = vmatpush1.msra.mxu0 %v422
    %697 = vmatprep.subr.mxu0 %v440
    %698 = vmatpush1.msra.mxu0 %v439
    %699 = vmatprep.subr.mxu0 %v457
    %700 = vmatpush1.msra.mxu0 %v456
    %701 = vmatprep.subr.mxu0 %v474
    %702 = vmatpush1.msra.mxu0 %v473
    %703 = vmatprep.subr.mxu0 %v491
    %704 = vmatpush1.msra.mxu0 %v490
    %705 = vmatprep.subr.mxu0 %v508
    %706 = vmatpush1.msra.mxu0 %v507
    %707 = vmatprep.subr.mxu0 %v525
    %708 = vmatpush1.msra.mxu0 %v524
    %709 = vmatprep.subr.mxu0 %v542
    %710 = vmatpush1.msra.mxu0 %v541
    %711 = vmatprep.subr.mxu0 %v559
    %712 = vmatpush1.msra.mxu0 %v558
    %713 = vmatprep.subr.mxu0 %v576
    %714 = vmatpush1.msra.mxu0 %v575
    %715 = vmatprep.subr.mxu0 0.0
    %716 = vmatpush1.msra.mxu0 0.0
    %717 = vmatprep.subr.mxu0 0.0
    %718 = vmatpush1.msra.mxu0 0.0
    %719 = vmatprep.subr.mxu0 0.0
    %720 = vmatpush1.msra.mxu0 0.0
    %721 = vmatprep.subr.mxu0 0.0
    %722 = vmatpush1.msra.mxu0 0.0
    %723 = vmatprep.subr.mxu0 0.0
    %724 = vmatpush1.msra.mxu0 0.0
    %725 = vmatprep.subr.mxu0 0.0
    %726 = vmatpush1.msra.mxu0 0.0
    %727 = vmatprep.subr.mxu0 0.0
    %728 = vmatpush1.msra.mxu0 0.0
    %729 = vmatprep.subr.mxu0 0.0
    %730 = vmatpush1.msra.mxu0 0.0
    %731 = vmatprep.subr.mxu0 0.0
    %732 = vmatpush1.msra.mxu0 0.0
    %733 = vmatprep.subr.mxu0 0.0
    %734 = vmatpush1.msra.mxu0 0.0
    %735 = vmatprep.subr.mxu0 0.0
    %736 = vmatpush1.msra.mxu0 0.0
    %737 = vmatprep.subr.mxu0 0.0
    %738 = vmatpush1.msra.mxu0 0.0
    %739 = vmatprep.subr.mxu0 0.0
    %740 = vmatpush1.msra.mxu0 0.0
    %741 = vmatprep.subr.mxu0 0.0
    %742 = vmatpush1.msra.mxu0 0.0
    %743 = vmatprep.subr.mxu0 0.0
    %744 = vmatpush1.msra.mxu0 0.0
    %745 = vmatprep.subr.mxu0 0.0
    %746 = vmatpush1.msra.mxu0 0.0
    %747 = vmatprep.mubr.f32.mxu0 0.0
    %748 = vmatmul.mubr.f32.gmra.mrb[0].mxu0 %v319
    %v749 = vpop.f32.mrb[0].mxu0
    %v750 = vadd.f32 %v601, %v749
    %v751 = vpop.f32.mrb[0].mxu0
    %v752 = vadd.f32 %v605, %v751
    %753 = vdwg.mxu0
    %754 = vmatprep.subr.mxu0 %v323
    %755 = vmatpush1.msra.mxu0 %v322
    %756 = vmatprep.subr.mxu0 %v340
    %757 = vmatpush1.msra.mxu0 %v339
    %758 = vmatprep.subr.mxu0 %v357
    %759 = vmatpush1.msra.mxu0 %v356
    %760 = vmatprep.subr.mxu0 %v374
    %761 = vmatpush1.msra.mxu0 %v373
    %762 = vmatprep.subr.mxu0 %v391
    %763 = vmatpush1.msra.mxu0 %v390
    %764 = vmatprep.subr.mxu0 %v408
    %765 = vmatpush1.msra.mxu0 %v407
    %766 = vmatprep.subr.mxu0 %v425
    %767 = vmatpush1.msra.mxu0 %v424
    %768 = vmatprep.subr.mxu0 %v442
    %769 = vmatpush1.msra.mxu0 %v441
    %770 = vmatprep.subr.mxu0 %v459
    %771 = vmatpush1.msra.mxu0 %v458
    %772 = vmatprep.subr.mxu0 %v476
    %773 = vmatpush1.msra.mxu0 %v475
    %774 = vmatprep.subr.mxu0 %v493
    %775 = vmatpush1.msra.mxu0 %v492
    %776 = vmatprep.subr.mxu0 %v510
    %777 = vmatpush1.msra.mxu0 %v509
    %778 = vmatprep.subr.mxu0 %v527
    %779 = vmatpush1.msra.mxu0 %v526
    %780 = vmatprep.subr.mxu0 %v544
    %781 = vmatpush1.msra.mxu0 %v543
    %782 = vmatprep.subr.mxu0 %v561
    %783 = vmatpush1.msra.mxu0 %v560
    %784 = vmatprep.subr.mxu0 %v578
    %785 = vmatpush1.msra.mxu0 %v577
    %786 = vmatprep.subr.mxu0 0.0
    %787 = vmatpush1.msra.mxu0 0.0
    %788 = vmatprep.subr.mxu0 0.0
    %789 = vmatpush1.msra.mxu0 0.0
    %790 = vmatprep.subr.mxu0 0.0
    %791 = vmatpush1.msra.mxu0 0.0
    %792 = vmatprep.subr.mxu0 0.0
    %793 = vmatpush1.msra.mxu0 0.0
    %794 = vmatprep.subr.mxu0 0.0
    %795 = vmatpush1.msra.mxu0 0.0
    %796 = vmatprep.subr.mxu0 0.0
    %797 = vmatpush1.msra.mxu0 0.0
    %798 = vmatprep.subr.mxu0 0.0
    %799 = vmatpush1.msra.mxu0 0.0
    %800 = vmatprep.subr.mxu0 0.0
    %801 = vmatpush1.msra.mxu0 0.0
    %802 = vmatprep.subr.mxu0 0.0
    %803 = vmatpush1.msra.mxu0 0.0
    %804 = vmatprep.subr.mxu0 0.0
    %805 = vmatpush1.msra.mxu0 0.0
    %806 = vmatprep.subr.mxu0 0.0
    %807 = vmatpush1.msra.mxu0 0.0
    %808 = vmatprep.subr.mxu0 0.0
    %809 = vmatpush1.msra.mxu0 0.0
    %810 = vmatprep.subr.mxu0 0.0
    %811 = vmatpush1.msra.mxu0 0.0
    %812 = vmatprep.subr.mxu0 0.0
    %813 = vmatpush1.msra.mxu0 0.0
    %814 = vmatprep.subr.mxu0 0.0
    %815 = vmatpush1.msra.mxu0 0.0
    %816 = vmatprep.subr.mxu0 0.0
    %817 = vmatpush1.msra.mxu0 0.0
    %818 = vmatprep.mubr.f32.mxu0 0.0
    %819 = vmatmul.mubr.f32.gmra.mrb[0].mxu0 %v319
    %v820 = vpop.f32.mrb[0].mxu0
    %v821 = vadd.f32 %v609, %v820
    %v822 = vpop.f32.mrb[0].mxu0
    %v823 = vadd.f32 %v613, %v822
    %824 = vdwg.mxu0
    %825 = vmatprep.subr.mxu0 %v325
    %826 = vmatpush1.msra.mxu0 %v324
    %827 = vmatprep.subr.mxu0 %v342
    %828 = vmatpush1.msra.mxu0 %v341
    %829 = vmatprep.subr.mxu0 %v359
    %830 = vmatpush1.msra.mxu0 %v358
    %831 = vmatprep.subr.mxu0 %v376
    %832 = vmatpush1.msra.mxu0 %v375
    %833 = vmatprep.subr.mxu0 %v393
    %834 = vmatpush1.msra.mxu0 %v392
    %835 = vmatprep.subr.mxu0 %v410
    %836 = vmatpush1.msra.mxu0 %v409
    %837 = vmatprep.subr.mxu0 %v427
    %838 = vmatpush1.msra.mxu0 %v426
    %839 = vmatprep.subr.mxu0 %v444
    %840 = vmatpush1.msra.mxu0 %v443
    %841 = vmatprep.subr.mxu0 %v461
    %842 = vmatpush1.msra.mxu0 %v460
    %843 = vmatprep.subr.mxu0 %v478
    %844 = vmatpush1.msra.mxu0 %v477
    %845 = vmatprep.subr.mxu0 %v495
    %846 = vmatpush1.msra.mxu0 %v494
    %847 = vmatprep.subr.mxu0 %v512
    %848 = vmatpush1.msra.mxu0 %v511
    %849 = vmatprep.subr.mxu0 %v529
    %850 = vmatpush1.msra.mxu0 %v528
    %851 = vmatprep.subr.mxu0 %v546
    %852 = vmatpush1.msra.mxu0 %v545
    %853 = vmatprep.subr.mxu0 %v563
    %854 = vmatpush1.msra.mxu0 %v562
    %855 = vmatprep.subr.mxu0 %v580
    %856 = vmatpush1.msra.mxu0 %v579
    %857 = vmatprep.subr.mxu0 0.0
    %858 = vmatpush1.msra.mxu0 0.0
    %859 = vmatprep.subr.mxu0 0.0
    %860 = vmatpush1.msra.mxu0 0.0
    %861 = vmatprep.subr.mxu0 0.0
    %862 = vmatpush1.msra.mxu0 0.0
    %863 = vmatprep.subr.mxu0 0.0
    %864 = vmatpush1.msra.mxu0 0.0
    %865 = vmatprep.subr.mxu0 0.0
    %866 = vmatpush1.msra.mxu0 0.0
    %867 = vmatprep.subr.mxu0 0.0
    %868 = vmatpush1.msra.mxu0 0.0
    %869 = vmatprep.subr.mxu0 0.0
    %870 = vmatpush1.msra.mxu0 0.0
    %871 = vmatprep.subr.mxu0 0.0
    %872 = vmatpush1.msra.mxu0 0.0
    %873 = vmatprep.subr.mxu0 0.0
    %874 = vmatpush1.msra.mxu0 0.0
    %875 = vmatprep.subr.mxu0 0.0
    %876 = vmatpush1.msra.mxu0 0.0
    %877 = vmatprep.subr.mxu0 0.0
    %878 = vmatpush1.msra.mxu0 0.0
    %879 = vmatprep.subr.mxu0 0.0
    %880 = vmatpush1.msra.mxu0 0.0
    %881 = vmatprep.subr.mxu0 0.0
    %882 = vmatpush1.msra.mxu0 0.0
    %883 = vmatprep.subr.mxu0 0.0
    %884 = vmatpush1.msra.mxu0 0.0
    %885 = vmatprep.subr.mxu0 0.0
    %886 = vmatpush1.msra.mxu0 0.0
    %887 = vmatprep.subr.mxu0 0.0
    %888 = vmatpush1.msra.mxu0 0.0
    %889 = vmatprep.mubr.f32.mxu0 0.0
    %890 = vmatmul.mubr.f32.gmra.mrb[0].mxu0 %v319
    %v891 = vpop.f32.mrb[0].mxu0
    %v892 = vadd.f32 %v617, %v891
    %v893 = vpop.f32.mrb[0].mxu0
    %v894 = vadd.f32 %v621, %v893
    %895 = vdwg.mxu0
    %896 = vmatprep.subr.mxu0 %v327
    %897 = vmatpush1.msra.mxu0 %v326
    %898 = vmatprep.subr.mxu0 %v344
    %899 = vmatpush1.msra.mxu0 %v343
    %900 = vmatprep.subr.mxu0 %v361
    %901 = vmatpush1.msra.mxu0 %v360
    %902 = vmatprep.subr.mxu0 %v378
    %903 = vmatpush1.msra.mxu0 %v377
    %904 = vmatprep.subr.mxu0 %v395
    %905 = vmatpush1.msra.mxu0 %v394
    %906 = vmatprep.subr.mxu0 %v412
    %907 = vmatpush1.msra.mxu0 %v411
    %908 = vmatprep.subr.mxu0 %v429
    %909 = vmatpush1.msra.mxu0 %v428
    %910 = vmatprep.subr.mxu0 %v446
    %911 = vmatpush1.msra.mxu0 %v445
    %912 = vmatprep.subr.mxu0 %v463
    %913 = vmatpush1.msra.mxu0 %v462
    %914 = vmatprep.subr.mxu0 %v480
    %915 = vmatpush1.msra.mxu0 %v479
    %916 = vmatprep.subr.mxu0 %v497
    %917 = vmatpush1.msra.mxu0 %v496
    %918 = vmatprep.subr.mxu0 %v514
    %919 = vmatpush1.msra.mxu0 %v513
    %920 = vmatprep.subr.mxu0 %v531
    %921 = vmatpush1.msra.mxu0 %v530
    %922 = vmatprep.subr.mxu0 %v548
    %923 = vmatpush1.msra.mxu0 %v547
    %924 = vmatprep.subr.mxu0 %v565
    %925 = vmatpush1.msra.mxu0 %v564
    %926 = vmatprep.subr.mxu0 %v582
    %927 = vmatpush1.msra.mxu0 %v581
    %928 = vmatprep.subr.mxu0 0.0
    %929 = vmatpush1.msra.mxu0 0.0
    %930 = vmatprep.subr.mxu0 0.0
    %931 = vmatpush1.msra.mxu0 0.0
    %932 = vmatprep.subr.mxu0 0.0
    %933 = vmatpush1.msra.mxu0 0.0
    %934 = vmatprep.subr.mxu0 0.0
    %935 = vmatpush1.msra.mxu0 0.0
    %936 = vmatprep.subr.mxu0 0.0
    %937 = vmatpush1.msra.mxu0 0.0
    %938 = vmatprep.subr.mxu0 0.0
    %939 = vmatpush1.msra.mxu0 0.0
    %940 = vmatprep.subr.mxu0 0.0
    %941 = vmatpush1.msra.mxu0 0.0
    %942 = vmatprep.subr.mxu0 0.0
    %943 = vmatpush1.msra.mxu0 0.0
    %944 = vmatprep.subr.mxu0 0.0
    %945 = vmatpush1.msra.mxu0 0.0
    %946 = vmatprep.subr.mxu0 0.0
    %947 = vmatpush1.msra.mxu0 0.0
    %948 = vmatprep.subr.mxu0 0.0
    %949 = vmatpush1.msra.mxu0 0.0
    %950 = vmatprep.subr.mxu0 0.0
    %951 = vmatpush1.msra.mxu0 0.0
    %952 = vmatprep.subr.mxu0 0.0
    %953 = vmatpush1.msra.mxu0 0.0
    %954 = vmatprep.subr.mxu0 0.0
    %955 = vmatpush1.msra.mxu0 0.0
    %956 = vmatprep.subr.mxu0 0.0
    %957 = vmatpush1.msra.mxu0 0.0
    %958 = vmatprep.subr.mxu0 0.0
    %959 = vmatpush1.msra.mxu0 0.0
    %960 = vmatprep.mubr.f32.mxu0 0.0
    %961 = vmatmul.mubr.f32.gmra.mrb[0].mxu0 %v319
    %v962 = vpop.f32.mrb[0].mxu0
    %v963 = vadd.f32 %v625, %v962
    %v964 = vpop.f32.mrb[0].mxu0
    %v965 = vadd.f32 %v629, %v964
    %966 = vdwg.mxu0
    %967 = vmatprep.subr.mxu0 %v329
    %968 = vmatpush1.msra.mxu0 %v328
    %969 = vmatprep.subr.mxu0 %v346
    %970 = vmatpush1.msra.mxu0 %v345
    %971 = vmatprep.subr.mxu0 %v363
    %972 = vmatpush1.msra.mxu0 %v362
    %973 = vmatprep.subr.mxu0 %v380
    %974 = vmatpush1.msra.mxu0 %v379
    %975 = vmatprep.subr.mxu0 %v397
    %976 = vmatpush1.msra.mxu0 %v396
    %977 = vmatprep.subr.mxu0 %v414
    %978 = vmatpush1.msra.mxu0 %v413
    %979 = vmatprep.subr.mxu0 %v431
    %980 = vmatpush1.msra.mxu0 %v430
    %981 = vmatprep.subr.mxu0 %v448
    %982 = vmatpush1.msra.mxu0 %v447
    %983 = vmatprep.subr.mxu0 %v465
    %984 = vmatpush1.msra.mxu0 %v464
    %985 = vmatprep.subr.mxu0 %v482
    %986 = vmatpush1.msra.mxu0 %v481
    %987 = vmatprep.subr.mxu0 %v499
    %988 = vmatpush1.msra.mxu0 %v498
    %989 = vmatprep.subr.mxu0 %v516
    %990 = vmatpush1.msra.mxu0 %v515
    %991 = vmatprep.subr.mxu0 %v533
    %992 = vmatpush1.msra.mxu0 %v532
    %993 = vmatprep.subr.mxu0 %v550
    %994 = vmatpush1.msra.mxu0 %v549
    %995 = vmatprep.subr.mxu0 %v567
    %996 = vmatpush1.msra.mxu0 %v566
    %997 = vmatprep.subr.mxu0 %v584
    %998 = vmatpush1.msra.mxu0 %v583
    %999 = vmatprep.subr.mxu0 0.0
    %1000 = vmatpush1.msra.mxu0 0.0
    %1001 = vmatprep.subr.mxu0 0.0
    %1002 = vmatpush1.msra.mxu0 0.0
    %1003 = vmatprep.subr.mxu0 0.0
    %1004 = vmatpush1.msra.mxu0 0.0
    %1005 = vmatprep.subr.mxu0 0.0
    %1006 = vmatpush1.msra.mxu0 0.0
    %1007 = vmatprep.subr.mxu0 0.0
    %1008 = vmatpush1.msra.mxu0 0.0
    %1009 = vmatprep.subr.mxu0 0.0
    %1010 = vmatpush1.msra.mxu0 0.0
    %1011 = vmatprep.subr.mxu0 0.0
    %1012 = vmatpush1.msra.mxu0 0.0
    %1013 = vmatprep.subr.mxu0 0.0
    %1014 = vmatpush1.msra.mxu0 0.0
    %1015 = vmatprep.subr.mxu0 0.0
    %1016 = vmatpush1.msra.mxu0 0.0
    %1017 = vmatprep.subr.mxu0 0.0
    %1018 = vmatpush1.msra.mxu0 0.0
    %1019 = vmatprep.subr.mxu0 0.0
    %1020 = vmatpush1.msra.mxu0 0.0
    %1021 = vmatprep.subr.mxu0 0.0
    %1022 = vmatpush1.msra.mxu0 0.0
    %1023 = vmatprep.subr.mxu0 0.0
    %1024 = vmatpush1.msra.mxu0 0.0
    %1025 = vmatprep.subr.mxu0 0.0
    %1026 = vmatpush1.msra.mxu0 0.0
    %1027 = vmatprep.subr.mxu0 0.0
    %1028 = vmatpush1.msra.mxu0 0.0
    %1029 = vmatprep.subr.mxu0 0.0
    %1030 = vmatpush1.msra.mxu0 0.0
    %1031 = vmatprep.mubr.f32.mxu0 0.0
    %1032 = vmatmul.mubr.f32.gmra.mrb[0].mxu0 %v319
    %v1033 = vpop.f32.mrb[0].mxu0
    %v1034 = vadd.f32 %v633, %v1033
    %v1035 = vpop.f32.mrb[0].mxu0
    %v1036 = vadd.f32 %v637, %v1035
    %1037 = vdwg.mxu0
    %1038 = vmatprep.subr.mxu0 %v331
    %1039 = vmatpush1.msra.mxu0 %v330
    %1040 = vmatprep.subr.mxu0 %v348
    %1041 = vmatpush1.msra.mxu0 %v347
    %1042 = vmatprep.subr.mxu0 %v365
    %1043 = vmatpush1.msra.mxu0 %v364
    %1044 = vmatprep.subr.mxu0 %v382
    %1045 = vmatpush1.msra.mxu0 %v381
    %1046 = vmatprep.subr.mxu0 %v399
    %1047 = vmatpush1.msra.mxu0 %v398
    %1048 = vmatprep.subr.mxu0 %v416
    %1049 = vmatpush1.msra.mxu0 %v415
    %1050 = vmatprep.subr.mxu0 %v433
    %1051 = vmatpush1.msra.mxu0 %v432
    %1052 = vmatprep.subr.mxu0 %v450
    %1053 = vmatpush1.msra.mxu0 %v449
    %1054 = vmatprep.subr.mxu0 %v467
    %1055 = vmatpush1.msra.mxu0 %v466
    %1056 = vmatprep.subr.mxu0 %v484
    %1057 = vmatpush1.msra.mxu0 %v483
    %1058 = vmatprep.subr.mxu0 %v501
    %1059 = vmatpush1.msra.mxu0 %v500
    %1060 = vmatprep.subr.mxu0 %v518
    %1061 = vmatpush1.msra.mxu0 %v517
    %1062 = vmatprep.subr.mxu0 %v535
    %1063 = vmatpush1.msra.mxu0 %v534
    %1064 = vmatprep.subr.mxu0 %v552
    %1065 = vmatpush1.msra.mxu0 %v551
    %1066 = vmatprep.subr.mxu0 %v569
    %1067 = vmatpush1.msra.mxu0 %v568
    %1068 = vmatprep.subr.mxu0 %v586
    %1069 = vmatpush1.msra.mxu0 %v585
    %1070 = vmatprep.subr.mxu0 0.0
    %1071 = vmatpush1.msra.mxu0 0.0
    %1072 = vmatprep.subr.mxu0 0.0
    %1073 = vmatpush1.msra.mxu0 0.0
    %1074 = vmatprep.subr.mxu0 0.0
    %1075 = vmatpush1.msra.mxu0 0.0
    %1076 = vmatprep.subr.mxu0 0.0
    %1077 = vmatpush1.msra.mxu0 0.0
    %1078 = vmatprep.subr.mxu0 0.0
    %1079 = vmatpush1.msra.mxu0 0.0
    %1080 = vmatprep.subr.mxu0 0.0
    %1081 = vmatpush1.msra.mxu0 0.0
    %1082 = vmatprep.subr.mxu0 0.0
    %1083 = vmatpush1.msra.mxu0 0.0
    %1084 = vmatprep.subr.mxu0 0.0
    %1085 = vmatpush1.msra.mxu0 0.0
    %1086 = vmatprep.subr.mxu0 0.0
    %1087 = vmatpush1.msra.mxu0 0.0
    %1088 = vmatprep.subr.mxu0 0.0
    %1089 = vmatpush1.msra.mxu0 0.0
    %1090 = vmatprep.subr.mxu0 0.0
    %1091 = vmatpush1.msra.mxu0 0.0
    %1092 = vmatprep.subr.mxu0 0.0
    %1093 = vmatpush1.msra.mxu0 0.0
    %1094 = vmatprep.subr.mxu0 0.0
    %1095 = vmatpush1.msra.mxu0 0.0
    %1096 = vmatprep.subr.mxu0 0.0
    %1097 = vmatpush1.msra.mxu0 0.0
    %1098 = vmatprep.subr.mxu0 0.0
    %1099 = vmatpush1.msra.mxu0 0.0
    %1100 = vmatprep.subr.mxu0 0.0
    %1101 = vmatpush1.msra.mxu0 0.0
    %1102 = vmatprep.mubr.f32.mxu0 0.0
    %1103 = vmatmul.mubr.f32.gmra.mrb[0].mxu0 %v319
    %v1104 = vpop.f32.mrb[0].mxu0
    %v1105 = vadd.f32 %v641, %v1104
    %v1106 = vpop.f32.mrb[0].mxu0
    %v1107 = vadd.f32 %v645, %v1106
    %1108 = vdwg.mxu0
    %1109 = vmatprep.subr.mxu0 %v333
    %1110 = vmatpush1.msra.mxu0 %v332
    %1111 = vmatprep.subr.mxu0 %v350
    %1112 = vmatpush1.msra.mxu0 %v349
    %1113 = vmatprep.subr.mxu0 %v367
    %1114 = vmatpush1.msra.mxu0 %v366
    %1115 = vmatprep.subr.mxu0 %v384
    %1116 = vmatpush1.msra.mxu0 %v383
    %1117 = vmatprep.subr.mxu0 %v401
    %1118 = vmatpush1.msra.mxu0 %v400
    %1119 = vmatprep.subr.mxu0 %v418
    %1120 = vmatpush1.msra.mxu0 %v417
    %1121 = vmatprep.subr.mxu0 %v435
    %1122 = vmatpush1.msra.mxu0 %v434
    %1123 = vmatprep.subr.mxu0 %v452
    %1124 = vmatpush1.msra.mxu0 %v451
    %1125 = vmatprep.subr.mxu0 %v469
    %1126 = vmatpush1.msra.mxu0 %v468
    %1127 = vmatprep.subr.mxu0 %v486
    %1128 = vmatpush1.msra.mxu0 %v485
    %1129 = vmatprep.subr.mxu0 %v503
    %1130 = vmatpush1.msra.mxu0 %v502
    %1131 = vmatprep.subr.mxu0 %v520
    %1132 = vmatpush1.msra.mxu0 %v519
    %1133 = vmatprep.subr.mxu0 %v537
    %1134 = vmatpush1.msra.mxu0 %v536
    %1135 = vmatprep.subr.mxu0 %v554
    %1136 = vmatpush1.msra.mxu0 %v553
    %1137 = vmatprep.subr.mxu0 %v571
    %1138 = vmatpush1.msra.mxu0 %v570
    %1139 = vmatprep.subr.mxu0 %v588
    %1140 = vmatpush1.msra.mxu0 %v587
    %1141 = vmatprep.subr.mxu0 0.0
    %1142 = vmatpush1.msra.mxu0 0.0
    %1143 = vmatprep.subr.mxu0 0.0
    %1144 = vmatpush1.msra.mxu0 0.0
    %1145 = vmatprep.subr.mxu0 0.0
    %1146 = vmatpush1.msra.mxu0 0.0
    %1147 = vmatprep.subr.mxu0 0.0
    %1148 = vmatpush1.msra.mxu0 0.0
    %1149 = vmatprep.subr.mxu0 0.0
    %1150 = vmatpush1.msra.mxu0 0.0
    %1151 = vmatprep.subr.mxu0 0.0
    %1152 = vmatpush1.msra.mxu0 0.0
    %1153 = vmatprep.subr.mxu0 0.0
    %1154 = vmatpush1.msra.mxu0 0.0
    %1155 = vmatprep.subr.mxu0 0.0
    %1156 = vmatpush1.msra.mxu0 0.0
    %1157 = vmatprep.subr.mxu0 0.0
    %1158 = vmatpush1.msra.mxu0 0.0
    %1159 = vmatprep.subr.mxu0 0.0
    %1160 = vmatpush1.msra.mxu0 0.0
    %1161 = vmatprep.subr.mxu0 0.0
    %1162 = vmatpush1.msra.mxu0 0.0
    %1163 = vmatprep.subr.mxu0 0.0
    %1164 = vmatpush1.msra.mxu0 0.0
    %1165 = vmatprep.subr.mxu0 0.0
    %1166 = vmatpush1.msra.mxu0 0.0
    %1167 = vmatprep.subr.mxu0 0.0
    %1168 = vmatpush1.msra.mxu0 0.0
    %1169 = vmatprep.subr.mxu0 0.0
    %1170 = vmatpush1.msra.mxu0 0.0
    %1171 = vmatprep.subr.mxu0 0.0
    %1172 = vmatpush1.msra.mxu0 0.0
    %1173 = vmatprep.mubr.f32.mxu0 0.0
    %1174 = vmatmul.mubr.f32.gmra.mrb[0].mxu0 %v319
    %v1175 = vpop.f32.mrb[0].mxu0
    %v1176 = vadd.f32 %v649, %v1175
    %v1177 = vpop.f32.mrb[0].mxu0
    %v1178 = vadd.f32 %v653, %v1177
    %1179 = vdwg.mxu0
    %1180 = vmatprep.subr.mxu0 %v335
    %1181 = vmatpush1.msra.mxu0 %v334
    %1182 = vmatprep.subr.mxu0 %v352
    %1183 = vmatpush1.msra.mxu0 %v351
    %1184 = vmatprep.subr.mxu0 %v369
    %1185 = vmatpush1.msra.mxu0 %v368
    %1186 = vmatprep.subr.mxu0 %v386
    %1187 = vmatpush1.msra.mxu0 %v385
    %1188 = vmatprep.subr.mxu0 %v403
    %1189 = vmatpush1.msra.mxu0 %v402
    %1190 = vmatprep.subr.mxu0 %v420
    %1191 = vmatpush1.msra.mxu0 %v419
    %1192 = vmatprep.subr.mxu0 %v437
    %1193 = vmatpush1.msra.mxu0 %v436
    %1194 = vmatprep.subr.mxu0 %v454
    %1195 = vmatpush1.msra.mxu0 %v453
    %1196 = vmatprep.subr.mxu0 %v471
    %1197 = vmatpush1.msra.mxu0 %v470
    %1198 = vmatprep.subr.mxu0 %v488
    %1199 = vmatpush1.msra.mxu0 %v487
    %1200 = vmatprep.subr.mxu0 %v505
    %1201 = vmatpush1.msra.mxu0 %v504
    %1202 = vmatprep.subr.mxu0 %v522
    %1203 = vmatpush1.msra.mxu0 %v521
    %1204 = vmatprep.subr.mxu0 %v539
    %1205 = vmatpush1.msra.mxu0 %v538
    %1206 = vmatprep.subr.mxu0 %v556
    %1207 = vmatpush1.msra.mxu0 %v555
    %1208 = vmatprep.subr.mxu0 %v573
    %1209 = vmatpush1.msra.mxu0 %v572
    %1210 = vmatprep.subr.mxu0 %v590
    %1211 = vmatpush1.msra.mxu0 %v589
    %1212 = vmatprep.subr.mxu0 0.0
    %1213 = vmatpush1.msra.mxu0 0.0
    %1214 = vmatprep.subr.mxu0 0.0
    %1215 = vmatpush1.msra.mxu0 0.0
    %1216 = vmatprep.subr.mxu0 0.0
    %1217 = vmatpush1.msra.mxu0 0.0
    %1218 = vmatprep.subr.mxu0 0.0
    %1219 = vmatpush1.msra.mxu0 0.0
    %1220 = vmatprep.subr.mxu0 0.0
    %1221 = vmatpush1.msra.mxu0 0.0
    %1222 = vmatprep.subr.mxu0 0.0
    %1223 = vmatpush1.msra.mxu0 0.0
    %1224 = vmatprep.subr.mxu0 0.0
    %1225 = vmatpush1.msra.mxu0 0.0
    %1226 = vmatprep.subr.mxu0 0.0
    %1227 = vmatpush1.msra.mxu0 0.0
    %1228 = vmatprep.subr.mxu0 0.0
    %1229 = vmatpush1.msra.mxu0 0.0
    %1230 = vmatprep.subr.mxu0 0.0
    %1231 = vmatpush1.msra.mxu0 0.0
    %1232 = vmatprep.subr.mxu0 0.0
    %1233 = vmatpush1.msra.mxu0 0.0
    %1234 = vmatprep.subr.mxu0 0.0
    %1235 = vmatpush1.msra.mxu0 0.0
    %1236 = vmatprep.subr.mxu0 0.0
    %1237 = vmatpush1.msra.mxu0 0.0
    %1238 = vmatprep.subr.mxu0 0.0
    %1239 = vmatpush1.msra.mxu0 0.0
    %1240 = vmatprep.subr.mxu0 0.0
    %1241 = vmatpush1.msra.mxu0 0.0
    %1242 = vmatprep.subr.mxu0 0.0
    %1243 = vmatpush1.msra.mxu0 0.0
    %1244 = vmatprep.mubr.f32.mxu0 0.0
    %1245 = vmatmul.mubr.f32.gmra.mrb[0].mxu0 %v319
    %v1246 = vpop.f32.mrb[0].mxu0
    %v1247 = vadd.f32 %v657, %v1246
    %v1248 = vpop.f32.mrb[0].mxu0
    %v1249 = vadd.f32 %v661, %v1248
    %1250 = vdwg.mxu0
    %1251 = vmatprep.subr.mxu0 0.0
    %1252 = vmatpush1.msra.mxu0 %v336
    %1253 = vmatprep.subr.mxu0 0.0
    %1254 = vmatpush1.msra.mxu0 %v353
    %1255 = vmatprep.subr.mxu0 0.0
    %1256 = vmatpush1.msra.mxu0 %v370
    %1257 = vmatprep.subr.mxu0 0.0
    %1258 = vmatpush1.msra.mxu0 %v387
    %1259 = vmatprep.subr.mxu0 0.0
    %1260 = vmatpush1.msra.mxu0 %v404
    %1261 = vmatprep.subr.mxu0 0.0
    %1262 = vmatpush1.msra.mxu0 %v421
    %1263 = vmatprep.subr.mxu0 0.0
    %1264 = vmatpush1.msra.mxu0 %v438
    %1265 = vmatprep.subr.mxu0 0.0
    %1266 = vmatpush1.msra.mxu0 %v455
    %1267 = vmatprep.subr.mxu0 0.0
    %1268 = vmatpush1.msra.mxu0 %v472
    %1269 = vmatprep.subr.mxu0 0.0
    %1270 = vmatpush1.msra.mxu0 %v489
    %1271 = vmatprep.subr.mxu0 0.0
    %1272 = vmatpush1.msra.mxu0 %v506
    %1273 = vmatprep.subr.mxu0 0.0
    %1274 = vmatpush1.msra.mxu0 %v523
    %1275 = vmatprep.subr.mxu0 0.0
    %1276 = vmatpush1.msra.mxu0 %v540
    %1277 = vmatprep.subr.mxu0 0.0
    %1278 = vmatpush1.msra.mxu0 %v557
    %1279 = vmatprep.subr.mxu0 0.0
    %1280 = vmatpush1.msra.mxu0 %v574
    %1281 = vmatprep.subr.mxu0 0.0
    %1282 = vmatpush1.msra.mxu0 %v591
    %1283 = vmatprep.subr.mxu0 0.0
    %1284 = vmatpush1.msra.mxu0 0.0
    %1285 = vmatprep.subr.mxu0 0.0
    %1286 = vmatpush1.msra.mxu0 0.0
    %1287 = vmatprep.subr.mxu0 0.0
    %1288 = vmatpush1.msra.mxu0 0.0
    %1289 = vmatprep.subr.mxu0 0.0
    %1290 = vmatpush1.msra.mxu0 0.0
    %1291 = vmatprep.subr.mxu0 0.0
    %1292 = vmatpush1.msra.mxu0 0.0
    %1293 = vmatprep.subr.mxu0 0.0
    %1294 = vmatpush1.msra.mxu0 0.0
    %1295 = vmatprep.subr.mxu0 0.0
    %1296 = vmatpush1.msra.mxu0 0.0
    %1297 = vmatprep.subr.mxu0 0.0
    %1298 = vmatpush1.msra.mxu0 0.0
    %1299 = vmatprep.subr.mxu0 0.0
    %1300 = vmatpush1.msra.mxu0 0.0
    %1301 = vmatprep.subr.mxu0 0.0
    %1302 = vmatpush1.msra.mxu0 0.0
    %1303 = vmatprep.subr.mxu0 0.0
    %1304 = vmatpush1.msra.mxu0 0.0
    %1305 = vmatprep.subr.mxu0 0.0
    %1306 = vmatpush1.msra.mxu0 0.0
    %1307 = vmatprep.subr.mxu0 0.0
    %1308 = vmatpush1.msra.mxu0 0.0
    %1309 = vmatprep.subr.mxu0 0.0
    %1310 = vmatpush1.msra.mxu0 0.0
    %1311 = vmatprep.subr.mxu0 0.0
    %1312 = vmatpush1.msra.mxu0 0.0
    %1313 = vmatprep.subr.mxu0 0.0
    %1314 = vmatpush1.msra.mxu0 0.0
    %1315 = vmatprep.mubr.f32.mxu0 0.0
    %1316 = vmatmul.mubr.f32.gmra.mrb[0].mxu0 %v319
    %v1317 = vpop.f32.mrb[0].mxu0
    %v1318 = vadd.f32 %v665, %v1317
    %v1319 = vpop.f32.mrb[0].mxu0
    %1320 = vdwg.mxu0
    %v1321 = vld [vmem:[#allocation13] sm:$0xff]
    %v1322 = vld [vmem:[#allocation13 + $0x8] sm:$0xff]
    %v1323 = vld [vmem:[#allocation13 + $0x10] sm:$0xff]
    %v1324 = vld [vmem:[#allocation13 + $0x18] sm:$0xff]
    %v1325 = vlaneseq
    %v1326 = vshrl.u32 %v1325, 7
    %v1327 = vsub.s32 0, %v1326
    %v1328 = vrot.slane %v752, %v1327
    %v1329 = vmul.f32 %v1328, %v1321
    %v1330 = vmul.f32 %v1328, %v1322
    %v1331 = vmul.f32 %v1328, %v1323
    %v1332 = vmul.f32 %v1328, %v1324
    %s1333 = scalar_lea.vmem [#allocation13], 32
    %v1334 = vld [vmem:[%s1333] sm:$0xff]
    %v1335 = vld [vmem:[%s1333 + $0x8] sm:$0xff]
    %v1336 = vld [vmem:[%s1333 + $0x10] sm:$0xff]
    %v1337 = vld [vmem:[%s1333 + $0x18] sm:$0xff]
    %v1338 = vlaneseq
    %v1339 = vshrl.u32 %v1338, 7
    %v1340 = vsub.s32 0, %v1339
    %v1341 = vrot.slane %v821, %v1340
    %v1342 = vmul.f32 %v1341, %v1334
    %v1343 = vmul.f32 %v1341, %v1335
    %v1344 = vmul.f32 %v1341, %v1336
    %v1345 = vmul.f32 %v1341, %v1337
    %v1346 = vadd.f32 %v1329, %v1342
    %v1347 = vadd.f32 %v1330, %v1343
    %v1348 = vadd.f32 %v1331, %v1344
    %v1349 = vadd.f32 %v1332, %v1345
    %s1350 = scalar_lea.vmem [#allocation13], 64
    %v1351 = vld [vmem:[%s1350] sm:$0xff]
    %v1352 = vld [vmem:[%s1350 + $0x8] sm:$0xff]
    %v1353 = vld [vmem:[%s1350 + $0x10] sm:$0xff]
    %v1354 = vld [vmem:[%s1350 + $0x18] sm:$0xff]
    %v1355 = vlaneseq
    %v1356 = vshrl.u32 %v1355, 7
    %v1357 = vsub.s32 0, %v1356
    %v1358 = vrot.slane %v823, %v1357
    %v1359 = vmul.f32 %v1358, %v1351
    %v1360 = vmul.f32 %v1358, %v1352
    %v1361 = vmul.f32 %v1358, %v1353
    %v1362 = vmul.f32 %v1358, %v1354
    %v1363 = vadd.f32 %v1346, %v1359
    %v1364 = vadd.f32 %v1347, %v1360
    %v1365 = vadd.f32 %v1348, %v1361
    %v1366 = vadd.f32 %v1349, %v1362
    %s1367 = scalar_lea.vmem [#allocation13], 96
    %v1368 = vld [vmem:[%s1367] sm:$0xff]
    %v1369 = vld [vmem:[%s1367 + $0x8] sm:$0xff]
    %v1370 = vld [vmem:[%s1367 + $0x10] sm:$0xff]
    %v1371 = vld [vmem:[%s1367 + $0x18] sm:$0xff]
    %v1372 = vlaneseq
    %v1373 = vshrl.u32 %v1372, 7
    %v1374 = vsub.s32 0, %v1373
    %v1375 = vrot.slane %v892, %v1374
    %v1376 = vmul.f32 %v1375, %v1368
    %v1377 = vmul.f32 %v1375, %v1369
    %v1378 = vmul.f32 %v1375, %v1370
    %v1379 = vmul.f32 %v1375, %v1371
    %v1380 = vadd.f32 %v1363, %v1376
    %v1381 = vadd.f32 %v1364, %v1377
    %v1382 = vadd.f32 %v1365, %v1378
    %v1383 = vadd.f32 %v1366, %v1379
    %s1384 = scalar_lea.vmem [#allocation13], 128
    %v1385 = vld [vmem:[%s1384] sm:$0xff]
    %v1386 = vld [vmem:[%s1384 + $0x8] sm:$0xff]
    %v1387 = vld [vmem:[%s1384 + $0x10] sm:$0xff]
    %v1388 = vld [vmem:[%s1384 + $0x18] sm:$0xff]
    %v1389 = vlaneseq
    %v1390 = vshrl.u32 %v1389, 7
    %v1391 = vsub.s32 0, %v1390
    %v1392 = vrot.slane %v894, %v1391
    %v1393 = vmul.f32 %v1392, %v1385
    %v1394 = vmul.f32 %v1392, %v1386
    %v1395 = vmul.f32 %v1392, %v1387
    %v1396 = vmul.f32 %v1392, %v1388
    %v1397 = vadd.f32 %v1380, %v1393
    %v1398 = vadd.f32 %v1381, %v1394
    %v1399 = vadd.f32 %v1382, %v1395
    %v1400 = vadd.f32 %v1383, %v1396
    %s1401 = scalar_lea.vmem [#allocation13], 160
    %v1402 = vld [vmem:[%s1401] sm:$0xff]
    %v1403 = vld [vmem:[%s1401 + $0x8] sm:$0xff]
    %v1404 = vld [vmem:[%s1401 + $0x10] sm:$0xff]
    %v1405 = vld [vmem:[%s1401 + $0x18] sm:$0xff]
    %v1406 = vlaneseq
    %v1407 = vshrl.u32 %v1406, 7
    %v1408 = vsub.s32 0, %v1407
    %v1409 = vrot.slane %v963, %v1408
    %v1410 = vmul.f32 %v1409, %v1402
    %v1411 = vmul.f32 %v1409, %v1403
    %v1412 = vmul.f32 %v1409, %v1404
    %v1413 = vmul.f32 %v1409, %v1405
    %v1414 = vadd.f32 %v1397, %v1410
    %v1415 = vadd.f32 %v1398, %v1411
    %v1416 = vadd.f32 %v1399, %v1412
    %v1417 = vadd.f32 %v1400, %v1413
    %s1418 = scalar_lea.vmem [#allocation13], 192
    %v1419 = vld [vmem:[%s1418] sm:$0xff]
    %v1420 = vld [vmem:[%s1418 + $0x8] sm:$0xff]
    %v1421 = vld [vmem:[%s1418 + $0x10] sm:$0xff]
    %v1422 = vld [vmem:[%s1418 + $0x18] sm:$0xff]
    %v1423 = vlaneseq
    %v1424 = vshrl.u32 %v1423, 7
    %v1425 = vsub.s32 0, %v1424
    %v1426 = vrot.slane %v965, %v1425
    %v1427 = vmul.f32 %v1426, %v1419
    %v1428 = vmul.f32 %v1426, %v1420
    %v1429 = vmul.f32 %v1426, %v1421
    %v1430 = vmul.f32 %v1426, %v1422
    %v1431 = vadd.f32 %v1414, %v1427
    %v1432 = vadd.f32 %v1415, %v1428
    %v1433 = vadd.f32 %v1416, %v1429
    %v1434 = vadd.f32 %v1417, %v1430
    %s1435 = scalar_lea.vmem [#allocation13], 224
    %v1436 = vld [vmem:[%s1435] sm:$0xff]
    %v1437 = vld [vmem:[%s1435 + $0x8] sm:$0xff]
    %v1438 = vld [vmem:[%s1435 + $0x10] sm:$0xff]
    %v1439 = vld [vmem:[%s1435 + $0x18] sm:$0xff]
    %v1440 = vlaneseq
    %v1441 = vshrl.u32 %v1440, 7
    %v1442 = vsub.s32 0, %v1441
    %v1443 = vrot.slane %v1034, %v1442
    %v1444 = vmul.f32 %v1443, %v1436
    %v1445 = vmul.f32 %v1443, %v1437
    %v1446 = vmul.f32 %v1443, %v1438
    %v1447 = vmul.f32 %v1443, %v1439
    %v1448 = vadd.f32 %v1431, %v1444
    %v1449 = vadd.f32 %v1432, %v1445
    %v1450 = vadd.f32 %v1433, %v1446
    %v1451 = vadd.f32 %v1434, %v1447
    %s1452 = scalar_lea.vmem [#allocation13], 256
    %v1453 = vld [vmem:[%s1452] sm:$0xff]
    %v1454 = vld [vmem:[%s1452 + $0x8] sm:$0xff]
    %v1455 = vld [vmem:[%s1452 + $0x10] sm:$0xff]
    %v1456 = vld [vmem:[%s1452 + $0x18] sm:$0xff]
    %v1457 = vlaneseq
    %v1458 = vshrl.u32 %v1457, 7
    %v1459 = vsub.s32 0, %v1458
    %v1460 = vrot.slane %v1036, %v1459
    %v1461 = vmul.f32 %v1460, %v1453
    %v1462 = vmul.f32 %v1460, %v1454
    %v1463 = vmul.f32 %v1460, %v1455
    %v1464 = vmul.f32 %v1460, %v1456
    %v1465 = vadd.f32 %v1448, %v1461
    %v1466 = vadd.f32 %v1449, %v1462
    %v1467 = vadd.f32 %v1450, %v1463
    %v1468 = vadd.f32 %v1451, %v1464
    %s1469 = scalar_lea.vmem [#allocation13], 288
    %v1470 = vld [vmem:[%s1469] sm:$0xff]
    %v1471 = vld [vmem:[%s1469 + $0x8] sm:$0xff]
    %v1472 = vld [vmem:[%s1469 + $0x10] sm:$0xff]
    %v1473 = vld [vmem:[%s1469 + $0x18] sm:$0xff]
    %v1474 = vlaneseq
    %v1475 = vshrl.u32 %v1474, 7
    %v1476 = vsub.s32 0, %v1475
    %v1477 = vrot.slane %v1105, %v1476
    %v1478 = vmul.f32 %v1477, %v1470
    %v1479 = vmul.f32 %v1477, %v1471
    %v1480 = vmul.f32 %v1477, %v1472
    %v1481 = vmul.f32 %v1477, %v1473
    %v1482 = vadd.f32 %v1465, %v1478
    %v1483 = vadd.f32 %v1466, %v1479
    %v1484 = vadd.f32 %v1467, %v1480
    %v1485 = vadd.f32 %v1468, %v1481
    %s1486 = scalar_lea.vmem [#allocation13], 320
    %v1487 = vld [vmem:[%s1486] sm:$0xff]
    %v1488 = vld [vmem:[%s1486 + $0x8] sm:$0xff]
    %v1489 = vld [vmem:[%s1486 + $0x10] sm:$0xff]
    %v1490 = vld [vmem:[%s1486 + $0x18] sm:$0xff]
    %v1491 = vlaneseq
    %v1492 = vshrl.u32 %v1491, 7
    %v1493 = vsub.s32 0, %v1492
    %v1494 = vrot.slane %v1107, %v1493
    %v1495 = vmul.f32 %v1494, %v1487
    %v1496 = vmul.f32 %v1494, %v1488
    %v1497 = vmul.f32 %v1494, %v1489
    %v1498 = vmul.f32 %v1494, %v1490
    %v1499 = vadd.f32 %v1482, %v1495
    %v1500 = vadd.f32 %v1483, %v1496
    %v1501 = vadd.f32 %v1484, %v1497
    %v1502 = vadd.f32 %v1485, %v1498
    %s1503 = scalar_lea.vmem [#allocation13], 352
    %v1504 = vld [vmem:[%s1503] sm:$0xff]
    %v1505 = vld [vmem:[%s1503 + $0x8] sm:$0xff]
    %v1506 = vld [vmem:[%s1503 + $0x10] sm:$0xff]
    %v1507 = vld [vmem:[%s1503 + $0x18] sm:$0xff]
    %v1508 = vlaneseq
    %v1509 = vshrl.u32 %v1508, 7
    %v1510 = vsub.s32 0, %v1509
    %v1511 = vrot.slane %v1176, %v1510
    %v1512 = vmul.f32 %v1511, %v1504
    %v1513 = vmul.f32 %v1511, %v1505
    %v1514 = vmul.f32 %v1511, %v1506
    %v1515 = vmul.f32 %v1511, %v1507
    %v1516 = vadd.f32 %v1499, %v1512
    %v1517 = vadd.f32 %v1500, %v1513
    %v1518 = vadd.f32 %v1501, %v1514
    %v1519 = vadd.f32 %v1502, %v1515
    %s1520 = scalar_lea.vmem [#allocation13], 384
    %v1521 = vld [vmem:[%s1520] sm:$0xff]
    %v1522 = vld [vmem:[%s1520 + $0x8] sm:$0xff]
    %v1523 = vld [vmem:[%s1520 + $0x10] sm:$0xff]
    %v1524 = vld [vmem:[%s1520 + $0x18] sm:$0xff]
    %v1525 = vlaneseq
    %v1526 = vshrl.u32 %v1525, 7
    %v1527 = vsub.s32 0, %v1526
    %v1528 = vrot.slane %v1178, %v1527
    %v1529 = vmul.f32 %v1528, %v1521
    %v1530 = vmul.f32 %v1528, %v1522
    %v1531 = vmul.f32 %v1528, %v1523
    %v1532 = vmul.f32 %v1528, %v1524
    %v1533 = vadd.f32 %v1516, %v1529
    %v1534 = vadd.f32 %v1517, %v1530
    %v1535 = vadd.f32 %v1518, %v1531
    %v1536 = vadd.f32 %v1519, %v1532
    %s1537 = scalar_lea.vmem [#allocation13], 416
    %v1538 = vld [vmem:[%s1537] sm:$0xff]
    %v1539 = vld [vmem:[%s1537 + $0x8] sm:$0xff]
    %v1540 = vld [vmem:[%s1537 + $0x10] sm:$0xff]
    %v1541 = vld [vmem:[%s1537 + $0x18] sm:$0xff]
    %v1542 = vlaneseq
    %v1543 = vshrl.u32 %v1542, 7
    %v1544 = vsub.s32 0, %v1543
    %v1545 = vrot.slane %v1247, %v1544
    %v1546 = vmul.f32 %v1545, %v1538
    %v1547 = vmul.f32 %v1545, %v1539
    %v1548 = vmul.f32 %v1545, %v1540
    %v1549 = vmul.f32 %v1545, %v1541
    %v1550 = vadd.f32 %v1533, %v1546
    %v1551 = vadd.f32 %v1534, %v1547
    %v1552 = vadd.f32 %v1535, %v1548
    %v1553 = vadd.f32 %v1536, %v1549
    %s1554 = scalar_lea.vmem [#allocation13], 448
    %v1555 = vld [vmem:[%s1554] sm:$0xff]
    %v1556 = vld [vmem:[%s1554 + $0x8] sm:$0xff]
    %v1557 = vld [vmem:[%s1554 + $0x10] sm:$0xff]
    %v1558 = vld [vmem:[%s1554 + $0x18] sm:$0xff]
    %v1559 = vlaneseq
    %v1560 = vshrl.u32 %v1559, 7
    %v1561 = vsub.s32 0, %v1560
    %v1562 = vrot.slane %v1249, %v1561
    %v1563 = vmul.f32 %v1562, %v1555
    %v1564 = vmul.f32 %v1562, %v1556
    %v1565 = vmul.f32 %v1562, %v1557
    %v1566 = vmul.f32 %v1562, %v1558
    %v1567 = vadd.f32 %v1550, %v1563
    %v1568 = vadd.f32 %v1551, %v1564
    %v1569 = vadd.f32 %v1552, %v1565
    %v1570 = vadd.f32 %v1553, %v1566
    %s1571 = scalar_lea.vmem [#allocation13], 480
    %v1572 = vld [vmem:[%s1571] sm:$0xff]
    %v1573 = vld [vmem:[%s1571 + $0x8] sm:$0xff]
    %v1574 = vld [vmem:[%s1571 + $0x10] sm:$0xff]
    %v1575 = vld [vmem:[%s1571 + $0x18] sm:$0xff]
    %v1576 = vlaneseq
    %v1577 = vshrl.u32 %v1576, 7
    %v1578 = vsub.s32 0, %v1577
    %v1579 = vrot.slane %v1318, %v1578
    %v1580 = vmul.f32 %v1579, %v1572
    %v1581 = vmul.f32 %v1579, %v1573
    %v1582 = vmul.f32 %v1579, %v1574
    %v1583 = vmul.f32 %v1579, %v1575
    %v1584 = vadd.f32 %v1567, %v1580
    %v1585 = vadd.f32 %v1568, %v1581
    %v1586 = vadd.f32 %v1569, %v1582
    %v1587 = vadd.f32 %v1570, %v1583
    %v1588 = vld [vmem:[#allocation5] sm:$0xff]
    %v1589 = vlaneseq
    %v1590 = vshrl.u32 %v1589, 7
    %v1591 = vsub.s32 0, %v1590
    %v1592 = vrot.slane %v750, %v1591
    %vm1593 = vcmask 261120
    %v1595 = vsel %vm1593, %v1588, 0
    %1597 = vmatprep.subr.mxu0 0.0
    %1598 = vmatpush1.msra.mxu0 %v1584
    %1599 = vmatprep.subr.mxu0 0.0
    %1600 = vmatpush1.msra.mxu0 %v1585
    %1601 = vmatprep.subr.mxu0 0.0
    %1602 = vmatpush1.msra.mxu0 %v1586
    %1603 = vmatprep.subr.mxu0 0.0
    %1604 = vmatpush1.msra.mxu0 %v1587
    %1605 = vmatprep.subr.mxu0 0.0
    %1606 = vmatpush1.msra.mxu0 0.0
    %1607 = vmatprep.subr.mxu0 0.0
    %1608 = vmatpush1.msra.mxu0 0.0
    %1609 = vmatprep.subr.mxu0 0.0
    %1610 = vmatpush1.msra.mxu0 0.0
    %1611 = vmatprep.subr.mxu0 0.0
    %1612 = vmatpush1.msra.mxu0 0.0
    %1613 = vmatprep.subr.mxu0 0.0
    %1614 = vmatpush1.msra.mxu0 0.0
    %1615 = vmatprep.subr.mxu0 0.0
    %1616 = vmatpush1.msra.mxu0 0.0
    %1617 = vmatprep.subr.mxu0 0.0
    %1618 = vmatpush1.msra.mxu0 0.0
    %1619 = vmatprep.subr.mxu0 0.0
    %1620 = vmatpush1.msra.mxu0 0.0
    %1621 = vmatprep.subr.mxu0 0.0
    %1622 = vmatpush1.msra.mxu0 0.0
    %1623 = vmatprep.subr.mxu0 0.0
    %1624 = vmatpush1.msra.mxu0 0.0
    %1625 = vmatprep.subr.mxu0 0.0
    %1626 = vmatpush1.msra.mxu0 0.0
    %1627 = vmatprep.subr.mxu0 0.0
    %1628 = vmatpush1.msra.mxu0 0.0
    %1629 = vmatprep.subr.mxu0 0.0
    %1630 = vmatpush1.msra.mxu0 0.0
    %1631 = vmatprep.subr.mxu0 0.0
    %1632 = vmatpush1.msra.mxu0 0.0
    %1633 = vmatprep.subr.mxu0 0.0
    %1634 = vmatpush1.msra.mxu0 0.0
    %1635 = vmatprep.subr.mxu0 0.0
    %1636 = vmatpush1.msra.mxu0 0.0
    %1637 = vmatprep.subr.mxu0 0.0
    %1638 = vmatpush1.msra.mxu0 0.0
    %1639 = vmatprep.subr.mxu0 0.0
    %1640 = vmatpush1.msra.mxu0 0.0
    %1641 = vmatprep.subr.mxu0 0.0
    %1642 = vmatpush1.msra.mxu0 0.0
    %1643 = vmatprep.subr.mxu0 0.0
    %1644 = vmatpush1.msra.mxu0 0.0
    %1645 = vmatprep.subr.mxu0 0.0
    %1646 = vmatpush1.msra.mxu0 0.0
    %1647 = vmatprep.subr.mxu0 0.0
    %1648 = vmatpush1.msra.mxu0 0.0
    %1649 = vmatprep.subr.mxu0 0.0
    %1650 = vmatpush1.msra.mxu0 0.0
    %1651 = vmatprep.subr.mxu0 0.0
    %1652 = vmatpush1.msra.mxu0 0.0
    %1653 = vmatprep.subr.mxu0 0.0
    %1654 = vmatpush1.msra.mxu0 0.0
    %1655 = vmatprep.subr.mxu0 0.0
    %1656 = vmatpush1.msra.mxu0 0.0
    %1657 = vmatprep.subr.mxu0 0.0
    %1658 = vmatpush1.msra.mxu0 0.0
    %1659 = vmatprep.subr.mxu0 0.0
    %1660 = vmatpush1.msra.mxu0 0.0
    %1661 = vmatprep.mubr.f32.mxu0 0.0
    %1662 = vmatmul.mubr.f32.gmra.mrb[0].mxu0 %v1595
    %v1663 = vpop.f32.mrb[0].mxu0
    %v1664 = vadd.f32 %v1592, %v1663
    %v1665 = vpop.f32.mrb[0].mxu0
    %1666 = vdwg.mxu0
    %1668 = vrot.lane.b32.xlu0 %v1664, 96
    %v1669 = vpop.permute.xlu0 %1668
    %vm1670 = vcmask 64512
    %v1671 = vsel %vm1670, %v1664, 0
    %v1673 = vsel %vm1670, %v1669, 0
    %1675 = vmatprep.subr.mxu0 0.0
    %1676 = vmatpush1.xpose.msra.mxu0 %v1673
    %1677 = vmatprep.subr.mxu0 0.0
    %1678 = vmatpush1.xpose.msra.mxu0 0.0
    %1679 = vmatprep.subr.mxu0 0.0
    %1680 = vmatpush1.xpose.msra.mxu0 0.0
    %1681 = vmatprep.subr.mxu0 0.0
    %1682 = vmatpush1.xpose.msra.mxu0 0.0
    %1683 = vmatprep.subr.mxu0 0.0
    %1684 = vmatpush1.xpose.msra.mxu0 0.0
    %1685 = vmatprep.subr.mxu0 0.0
    %1686 = vmatpush1.xpose.msra.mxu0 0.0
    %1687 = vmatprep.subr.mxu0 0.0
    %1688 = vmatpush1.xpose.msra.mxu0 0.0
    %1689 = vmatprep.subr.mxu0 0.0
    %1690 = vmatpush1.xpose.msra.mxu0 0.0
    %1691 = vmatprep.subr.mxu0 0.0
    %1692 = vmatpush1.xpose.msra.mxu0 0.0
    %1693 = vmatprep.subr.mxu0 0.0
    %1694 = vmatpush1.xpose.msra.mxu0 0.0
    %1695 = vmatprep.subr.mxu0 0.0
    %1696 = vmatpush1.xpose.msra.mxu0 0.0
    %1697 = vmatprep.subr.mxu0 0.0
    %1698 = vmatpush1.xpose.msra.mxu0 0.0
    %1699 = vmatprep.subr.mxu0 0.0
    %1700 = vmatpush1.xpose.msra.mxu0 0.0
    %1701 = vmatprep.subr.mxu0 0.0
    %1702 = vmatpush1.xpose.msra.mxu0 0.0
    %1703 = vmatprep.subr.mxu0 0.0
    %1704 = vmatpush1.xpose.msra.mxu0 0.0
    %1705 = vmatprep.subr.mxu0 0.0
    %1706 = vmatpush1.xpose.msra.mxu0 0.0
    %1707 = vmatprep.subr.mxu0 0.0
    %1708 = vmatpush1.xpose.msra.mxu0 0.0
    %1709 = vmatprep.subr.mxu0 0.0
    %1710 = vmatpush1.xpose.msra.mxu0 0.0
    %1711 = vmatprep.subr.mxu0 0.0
    %1712 = vmatpush1.xpose.msra.mxu0 0.0
    %1713 = vmatprep.subr.mxu0 0.0
    %1714 = vmatpush1.xpose.msra.mxu0 0.0
    %1715 = vmatprep.subr.mxu0 0.0
    %1716 = vmatpush1.xpose.msra.mxu0 0.0
    %1717 = vmatprep.subr.mxu0 0.0
    %1718 = vmatpush1.xpose.msra.mxu0 0.0
    %1719 = vmatprep.subr.mxu0 0.0
    %1720 = vmatpush1.xpose.msra.mxu0 0.0
    %1721 = vmatprep.subr.mxu0 0.0
    %1722 = vmatpush1.xpose.msra.mxu0 0.0
    %1723 = vmatprep.subr.mxu0 0.0
    %1724 = vmatpush1.xpose.msra.mxu0 0.0
    %1725 = vmatprep.subr.mxu0 0.0
    %1726 = vmatpush1.xpose.msra.mxu0 0.0
    %1727 = vmatprep.subr.mxu0 0.0
    %1728 = vmatpush1.xpose.msra.mxu0 0.0
    %1729 = vmatprep.subr.mxu0 0.0
    %1730 = vmatpush1.xpose.msra.mxu0 0.0
    %1731 = vmatprep.subr.mxu0 0.0
    %1732 = vmatpush1.xpose.msra.mxu0 0.0
    %1733 = vmatprep.subr.mxu0 0.0
    %1734 = vmatpush1.xpose.msra.mxu0 0.0
    %1735 = vmatprep.subr.mxu0 0.0
    %1736 = vmatpush1.xpose.msra.mxu0 0.0
    %1737 = vmatprep.subr.mxu0 0.0
    %1738 = vmatpush1.xpose.msra.mxu0 0.0
    %1739 = vmatprep.mubr.f32.mxu0 0.0
    %1740 = vmatmul.mubr.f32.gmra.mrb[0].mxu0 %v1671
    %v1741 = vpop.f32.mrb[0].mxu0
    %v1742 = vadd.f32 0.0, %v1741
    %v1743 = vpop.f32.mrb[0].mxu0
    %1744 = vdwg.mxu0
    %v1745 = vmul.f32 %v1742, 0.35355338
    %v1746 = vsel %vm1670, %v1745, -inf
    %1747 = vmax.xlane.f32.xlu0 %v1746
    %v1748 = vpop.xlane.xlu0 %1747
    %v1749 = vsub.f32 %v1745, %v1748
    %v1750 = vmul.f32 %v1749, 1.442695
    %v1751 = vpow.pop %v1750
    %v1752 = vsel %vm1670, %v1751, 0.0
    %1753 = vadd.xlane.f32.xlu0 %v1752
    %v1754 = vpop.xlane.xlu0 %1753
    %v1755 = vrcp.pop %v1754
    %v1756 = vmul.f32 %v1751, %v1755
    %1757 = vrot.lane.b32.xlu0 %v1664, 64
    %v1758 = vpop.permute.xlu0 %1757
    %v1761 = vsel %vm1670, %v1756, 0
    %1763 = vmatprep.subr.mxu0 0.0
    %1764 = vmatpush1.msra.mxu0 %v1758
    %1765 = vmatprep.subr.mxu0 0.0
    %1766 = vmatpush1.msra.mxu0 0.0
    %1767 = vmatprep.subr.mxu0 0.0
    %1768 = vmatpush1.msra.mxu0 0.0
    %1769 = vmatprep.subr.mxu0 0.0
    %1770 = vmatpush1.msra.mxu0 0.0
    %1771 = vmatprep.subr.mxu0 0.0
    %1772 = vmatpush1.msra.mxu0 0.0
    %1773 = vmatprep.subr.mxu0 0.0
    %1774 = vmatpush1.msra.mxu0 0.0
    %1775 = vmatprep.subr.mxu0 0.0
    %1776 = vmatpush1.msra.mxu0 0.0
    %1777 = vmatprep.subr.mxu0 0.0
    %1778 = vmatpush1.msra.mxu0 0.0
    %1779 = vmatprep.subr.mxu0 0.0
    %1780 = vmatpush1.msra.mxu0 0.0
    %1781 = vmatprep.subr.mxu0 0.0
    %1782 = vmatpush1.msra.mxu0 0.0
    %1783 = vmatprep.subr.mxu0 0.0
    %1784 = vmatpush1.msra.mxu0 0.0
    %1785 = vmatprep.subr.mxu0 0.0
    %1786 = vmatpush1.msra.mxu0 0.0
    %1787 = vmatprep.subr.mxu0 0.0
    %1788 = vmatpush1.msra.mxu0 0.0
    %1789 = vmatprep.subr.mxu0 0.0
    %1790 = vmatpush1.msra.mxu0 0.0
    %1791 = vmatprep.subr.mxu0 0.0
    %1792 = vmatpush1.msra.mxu0 0.0
    %1793 = vmatprep.subr.mxu0 0.0
    %1794 = vmatpush1.msra.mxu0 0.0
    %1795 = vmatprep.subr.mxu0 0.0
    %1796 = vmatpush1.msra.mxu0 0.0
    %1797 = vmatprep.subr.mxu0 0.0
    %1798 = vmatpush1.msra.mxu0 0.0
    %1799 = vmatprep.subr.mxu0 0.0
    %1800 = vmatpush1.msra.mxu0 0.0
    %1801 = vmatprep.subr.mxu0 0.0
    %1802 = vmatpush1.msra.mxu0 0.0
    %1803 = vmatprep.subr.mxu0 0.0
    %1804 = vmatpush1.msra.mxu0 0.0
    %1805 = vmatprep.subr.mxu0 0.0
    %1806 = vmatpush1.msra.mxu0 0.0
    %1807 = vmatprep.subr.mxu0 0.0
    %1808 = vmatpush1.msra.mxu0 0.0
    %1809 = vmatprep.subr.mxu0 0.0
    %1810 = vmatpush1.msra.mxu0 0.0
    %1811 = vmatprep.subr.mxu0 0.0
    %1812 = vmatpush1.msra.mxu0 0.0
    %1813 = vmatprep.subr.mxu0 0.0
    %1814 = vmatpush1.msra.mxu0 0.0
    %1815 = vmatprep.subr.mxu0 0.0
    %1816 = vmatpush1.msra.mxu0 0.0
    %1817 = vmatprep.subr.mxu0 0.0
    %1818 = vmatpush1.msra.mxu0 0.0
    %1819 = vmatprep.subr.mxu0 0.0
    %1820 = vmatpush1.msra.mxu0 0.0
    %1821 = vmatprep.subr.mxu0 0.0
    %1822 = vmatpush1.msra.mxu0 0.0
    %1823 = vmatprep.subr.mxu0 0.0
    %1824 = vmatpush1.msra.mxu0 0.0
    %1825 = vmatprep.subr.mxu0 0.0
    %1826 = vmatpush1.msra.mxu0 0.0
    %1827 = vmatprep.mubr.f32.mxu0 0.0
    %1828 = vmatmul.mubr.f32.gmra.mrb[0].mxu0 %v1761
    %v1829 = vpop.f32.mrb[0].mxu0
    %v1830 = vadd.f32 0.0, %v1829
    %v1831 = vpop.f32.mrb[0].mxu0
    %1832 = vdwg.mxu0
    %1833 = vrot.lane.b32.xlu0 %v1664, 120
    %v1834 = vpop.permute.xlu0 %1833
    %1835 = vrot.lane.b32.xlu0 %v1664, 88
    %v1836 = vpop.permute.xlu0 %1835
    %v1837 = vsel %vm1670, %v1834, 0
    %v1839 = vsel %vm1670, %v1836, 0
    %1841 = vmatprep.subr.mxu0 0.0
    %1842 = vmatpush1.xpose.msra.mxu0 %v1839
    %1843 = vmatprep.subr.mxu0 0.0
    %1844 = vmatpush1.xpose.msra.mxu0 0.0
    %1845 = vmatprep.subr.mxu0 0.0
    %1846 = vmatpush1.xpose.msra.mxu0 0.0
    %1847 = vmatprep.subr.mxu0 0.0
    %1848 = vmatpush1.xpose.msra.mxu0 0.0
    %1849 = vmatprep.subr.mxu0 0.0
    %1850 = vmatpush1.xpose.msra.mxu0 0.0
    %1851 = vmatprep.subr.mxu0 0.0
    %1852 = vmatpush1.xpose.msra.mxu0 0.0
    %1853 = vmatprep.subr.mxu0 0.0
    %1854 = vmatpush1.xpose.msra.mxu0 0.0
    %1855 = vmatprep.subr.mxu0 0.0
    %1856 = vmatpush1.xpose.msra.mxu0 0.0
    %1857 = vmatprep.subr.mxu0 0.0
    %1858 = vmatpush1.xpose.msra.mxu0 0.0
    %1859 = vmatprep.subr.mxu0 0.0
    %1860 = vmatpush1.xpose.msra.mxu0 0.0
    %1861 = vmatprep.subr.mxu0 0.0
    %1862 = vmatpush1.xpose.msra.mxu0 0.0
    %1863 = vmatprep.subr.mxu0 0.0
    %1864 = vmatpush1.xpose.msra.mxu0 0.0
    %1865 = vmatprep.subr.mxu0 0.0
    %1866 = vmatpush1.xpose.msra.mxu0 0.0
    %1867 = vmatprep.subr.mxu0 0.0
    %1868 = vmatpush1.xpose.msra.mxu0 0.0
    %1869 = vmatprep.subr.mxu0 0.0
    %1870 = vmatpush1.xpose.msra.mxu0 0.0
    %1871 = vmatprep.subr.mxu0 0.0
    %1872 = vmatpush1.xpose.msra.mxu0 0.0
    %1873 = vmatprep.subr.mxu0 0.0
    %1874 = vmatpush1.xpose.msra.mxu0 0.0
    %1875 = vmatprep.subr.mxu0 0.0
    %1876 = vmatpush1.xpose.msra.mxu0 0.0
    %1877 = vmatprep.subr.mxu0 0.0
    %1878 = vmatpush1.xpose.msra.mxu0 0.0
    %1879 = vmatprep.subr.mxu0 0.0
    %1880 = vmatpush1.xpose.msra.mxu0 0.0
    %1881 = vmatprep.subr.mxu0 0.0
    %1882 = vmatpush1.xpose.msra.mxu0 0.0
    %1883 = vmatprep.subr.mxu0 0.0
    %1884 = vmatpush1.xpose.msra.mxu0 0.0
    %1885 = vmatprep.subr.mxu0 0.0
    %1886 = vmatpush1.xpose.msra.mxu0 0.0
    %1887 = vmatprep.subr.mxu0 0.0
    %1888 = vmatpush1.xpose.msra.mxu0 0.0
    %1889 = vmatprep.subr.mxu0 0.0
    %1890 = vmatpush1.xpose.msra.mxu0 0.0
    %1891 = vmatprep.subr.mxu0 0.0
    %1892 = vmatpush1.xpose.msra.mxu0 0.0
    %1893 = vmatprep.subr.mxu0 0.0
    %1894 = vmatpush1.xpose.msra.mxu0 0.0
    %1895 = vmatprep.subr.mxu0 0.0
    %1896 = vmatpush1.xpose.msra.mxu0 0.0
    %1897 = vmatprep.subr.mxu0 0.0
    %1898 = vmatpush1.xpose.msra.mxu0 0.0
    %1899 = vmatprep.subr.mxu0 0.0
    %1900 = vmatpush1.xpose.msra.mxu0 0.0
    %1901 = vmatprep.subr.mxu0 0.0
    %1902 = vmatpush1.xpose.msra.mxu0 0.0
    %1903 = vmatprep.subr.mxu0 0.0
    %1904 = vmatpush1.xpose.msra.mxu0 0.0
    %1905 = vmatprep.mubr.f32.mxu0 0.0
    %1906 = vmatmul.mubr.f32.gmra.mrb[0].mxu0 %v1837
    %v1907 = vpop.f32.mrb[0].mxu0
    %v1908 = vadd.f32 0.0, %v1907
    %v1909 = vpop.f32.mrb[0].mxu0
    %1910 = vdwg.mxu0
    %v1911 = vmul.f32 %v1908, 0.35355338
    %v1912 = vsel %vm1670, %v1911, -inf
    %1913 = vmax.xlane.f32.xlu0 %v1912
    %v1914 = vpop.xlane.xlu0 %1913
    %v1915 = vsub.f32 %v1911, %v1914
    %v1916 = vmul.f32 %v1915, 1.442695
    %v1917 = vpow.pop %v1916
    %v1918 = vsel %vm1670, %v1917, 0.0
    %1919 = vadd.xlane.f32.xlu0 %v1918
    %v1920 = vpop.xlane.xlu0 %1919
    %v1921 = vrcp.pop %v1920
    %v1922 = vmul.f32 %v1917, %v1921
    %1923 = vrot.lane.b32.xlu0 %v1664, 56
    %v1924 = vpop.permute.xlu0 %1923
    %v1927 = vsel %vm1670, %v1922, 0
    %1929 = vmatprep.subr.mxu0 0.0
    %1930 = vmatpush1.msra.mxu0 %v1924
    %1931 = vmatprep.subr.mxu0 0.0
    %1932 = vmatpush1.msra.mxu0 0.0
    %1933 = vmatprep.subr.mxu0 0.0
    %1934 = vmatpush1.msra.mxu0 0.0
    %1935 = vmatprep.subr.mxu0 0.0
    %1936 = vmatpush1.msra.mxu0 0.0
    %1937 = vmatprep.subr.mxu0 0.0
    %1938 = vmatpush1.msra.mxu0 0.0
    %1939 = vmatprep.subr.mxu0 0.0
    %1940 = vmatpush1.msra.mxu0 0.0
    %1941 = vmatprep.subr.mxu0 0.0
    %1942 = vmatpush1.msra.mxu0 0.0
    %1943 = vmatprep.subr.mxu0 0.0
    %1944 = vmatpush1.msra.mxu0 0.0
    %1945 = vmatprep.subr.mxu0 0.0
    %1946 = vmatpush1.msra.mxu0 0.0
    %1947 = vmatprep.subr.mxu0 0.0
    %1948 = vmatpush1.msra.mxu0 0.0
    %1949 = vmatprep.subr.mxu0 0.0
    %1950 = vmatpush1.msra.mxu0 0.0
    %1951 = vmatprep.subr.mxu0 0.0
    %1952 = vmatpush1.msra.mxu0 0.0
    %1953 = vmatprep.subr.mxu0 0.0
    %1954 = vmatpush1.msra.mxu0 0.0
    %1955 = vmatprep.subr.mxu0 0.0
    %1956 = vmatpush1.msra.mxu0 0.0
    %1957 = vmatprep.subr.mxu0 0.0
    %1958 = vmatpush1.msra.mxu0 0.0
    %1959 = vmatprep.subr.mxu0 0.0
    %1960 = vmatpush1.msra.mxu0 0.0
    %1961 = vmatprep.subr.mxu0 0.0
    %1962 = vmatpush1.msra.mxu0 0.0
    %1963 = vmatprep.subr.mxu0 0.0
    %1964 = vmatpush1.msra.mxu0 0.0
    %1965 = vmatprep.subr.mxu0 0.0
    %1966 = vmatpush1.msra.mxu0 0.0
    %1967 = vmatprep.subr.mxu0 0.0
    %1968 = vmatpush1.msra.mxu0 0.0
    %1969 = vmatprep.subr.mxu0 0.0
    %1970 = vmatpush1.msra.mxu0 0.0
    %1971 = vmatprep.subr.mxu0 0.0
    %1972 = vmatpush1.msra.mxu0 0.0
    %1973 = vmatprep.subr.mxu0 0.0
    %1974 = vmatpush1.msra.mxu0 0.0
    %1975 = vmatprep.subr.mxu0 0.0
    %1976 = vmatpush1.msra.mxu0 0.0
    %1977 = vmatprep.subr.mxu0 0.0
    %1978 = vmatpush1.msra.mxu0 0.0
    %1979 = vmatprep.subr.mxu0 0.0
    %1980 = vmatpush1.msra.mxu0 0.0
    %1981 = vmatprep.subr.mxu0 0.0
    %1982 = vmatpush1.msra.mxu0 0.0
    %1983 = vmatprep.subr.mxu0 0.0
    %1984 = vmatpush1.msra.mxu0 0.0
    %1985 = vmatprep.subr.mxu0 0.0
    %1986 = vmatpush1.msra.mxu0 0.0
    %1987 = vmatprep.subr.mxu0 0.0
    %1988 = vmatpush1.msra.mxu0 0.0
    %1989 = vmatprep.subr.mxu0 0.0
    %1990 = vmatpush1.msra.mxu0 0.0
    %1991 = vmatprep.subr.mxu0 0.0
    %1992 = vmatpush1.msra.mxu0 0.0
    %1993 = vmatprep.mubr.f32.mxu0 0.0
    %1994 = vmatmul.mubr.f32.gmra.mrb[0].mxu0 %v1927
    %v1995 = vpop.f32.mrb[0].mxu0
    %v1996 = vadd.f32 0.0, %v1995
    %v1997 = vpop.f32.mrb[0].mxu0
    %1998 = vdwg.mxu0
    %1999 = vrot.lane.b32.xlu0 %v1664, 112
    %v2000 = vpop.permute.xlu0 %1999
    %2001 = vrot.lane.b32.xlu0 %v1664, 80
    %v2002 = vpop.permute.xlu0 %2001
    %v2003 = vsel %vm1670, %v2000, 0
    %v2005 = vsel %vm1670, %v2002, 0
    %2007 = vmatprep.subr.mxu0 0.0
    %2008 = vmatpush1.xpose.msra.mxu0 %v2005
    %2009 = vmatprep.subr.mxu0 0.0
    %2010 = vmatpush1.xpose.msra.mxu0 0.0
    %2011 = vmatprep.subr.mxu0 0.0
    %2012 = vmatpush1.xpose.msra.mxu0 0.0
    %2013 = vmatprep.subr.mxu0 0.0
    %2014 = vmatpush1.xpose.msra.mxu0 0.0
    %2015 = vmatprep.subr.mxu0 0.0
    %2016 = vmatpush1.xpose.msra.mxu0 0.0
    %2017 = vmatprep.subr.mxu0 0.0
    %2018 = vmatpush1.xpose.msra.mxu0 0.0
    %2019 = vmatprep.subr.mxu0 0.0
    %2020 = vmatpush1.xpose.msra.mxu0 0.0
    %2021 = vmatprep.subr.mxu0 0.0
    %2022 = vmatpush1.xpose.msra.mxu0 0.0
    %2023 = vmatprep.subr.mxu0 0.0
    %2024 = vmatpush1.xpose.msra.mxu0 0.0
    %2025 = vmatprep.subr.mxu0 0.0
    %2026 = vmatpush1.xpose.msra.mxu0 0.0
    %2027 = vmatprep.subr.mxu0 0.0
    %2028 = vmatpush1.xpose.msra.mxu0 0.0
    %2029 = vmatprep.subr.mxu0 0.0
    %2030 = vmatpush1.xpose.msra.mxu0 0.0
    %2031 = vmatprep.subr.mxu0 0.0
    %2032 = vmatpush1.xpose.msra.mxu0 0.0
    %2033 = vmatprep.subr.mxu0 0.0
    %2034 = vmatpush1.xpose.msra.mxu0 0.0
    %2035 = vmatprep.subr.mxu0 0.0
    %2036 = vmatpush1.xpose.msra.mxu0 0.0
    %2037 = vmatprep.subr.mxu0 0.0
    %2038 = vmatpush1.xpose.msra.mxu0 0.0
    %2039 = vmatprep.subr.mxu0 0.0
    %2040 = vmatpush1.xpose.msra.mxu0 0.0
    %2041 = vmatprep.subr.mxu0 0.0
    %2042 = vmatpush1.xpose.msra.mxu0 0.0
    %2043 = vmatprep.subr.mxu0 0.0
    %2044 = vmatpush1.xpose.msra.mxu0 0.0
    %2045 = vmatprep.subr.mxu0 0.0
    %2046 = vmatpush1.xpose.msra.mxu0 0.0
    %2047 = vmatprep.subr.mxu0 0.0
    %2048 = vmatpush1.xpose.msra.mxu0 0.0
    %2049 = vmatprep.subr.mxu0 0.0
    %2050 = vmatpush1.xpose.msra.mxu0 0.0
    %2051 = vmatprep.subr.mxu0 0.0
    %2052 = vmatpush1.xpose.msra.mxu0 0.0
    %2053 = vmatprep.subr.mxu0 0.0
    %2054 = vmatpush1.xpose.msra.mxu0 0.0
    %2055 = vmatprep.subr.mxu0 0.0
    %2056 = vmatpush1.xpose.msra.mxu0 0.0
    %2057 = vmatprep.subr.mxu0 0.0
    %2058 = vmatpush1.xpose.msra.mxu0 0.0
    %2059 = vmatprep.subr.mxu0 0.0
    %2060 = vmatpush1.xpose.msra.mxu0 0.0
    %2061 = vmatprep.subr.mxu0 0.0
    %2062 = vmatpush1.xpose.msra.mxu0 0.0
    %2063 = vmatprep.subr.mxu0 0.0
    %2064 = vmatpush1.xpose.msra.mxu0 0.0
    %2065 = vmatprep.subr.mxu0 0.0
    %2066 = vmatpush1.xpose.msra.mxu0 0.0
    %2067 = vmatprep.subr.mxu0 0.0
    %2068 = vmatpush1.xpose.msra.mxu0 0.0
    %2069 = vmatprep.subr.mxu0 0.0
    %2070 = vmatpush1.xpose.msra.mxu0 0.0
    %2071 = vmatprep.mubr.f32.mxu0 0.0
    %2072 = vmatmul.mubr.f32.gmra.mrb[0].mxu0 %v2003
    %v2073 = vpop.f32.mrb[0].mxu0
    %v2074 = vadd.f32 0.0, %v2073
    %v2075 = vpop.f32.mrb[0].mxu0
    %2076 = vdwg.mxu0
    %v2077 = vmul.f32 %v2074, 0.35355338
    %v2078 = vsel %vm1670, %v2077, -inf
    %2079 = vmax.xlane.f32.xlu0 %v2078
    %v2080 = vpop.xlane.xlu0 %2079
    %v2081 = vsub.f32 %v2077, %v2080
    %v2082 = vmul.f32 %v2081, 1.442695
    %v2083 = vpow.pop %v2082
    %v2084 = vsel %vm1670, %v2083, 0.0
    %2085 = vadd.xlane.f32.xlu0 %v2084
    %v2086 = vpop.xlane.xlu0 %2085
    %v2087 = vrcp.pop %v2086
    %v2088 = vmul.f32 %v2083, %v2087
    %2089 = vrot.lane.b32.xlu0 %v1664, 48
    %v2090 = vpop.permute.xlu0 %2089
    %v2093 = vsel %vm1670, %v2088, 0
    %2095 = vmatprep.subr.mxu0 0.0
    %2096 = vmatpush1.msra.mxu0 %v2090
    %2097 = vmatprep.subr.mxu0 0.0
    %2098 = vmatpush1.msra.mxu0 0.0
    %2099 = vmatprep.subr.mxu0 0.0
    %2100 = vmatpush1.msra.mxu0 0.0
    %2101 = vmatprep.subr.mxu0 0.0
    %2102 = vmatpush1.msra.mxu0 0.0
    %2103 = vmatprep.subr.mxu0 0.0
    %2104 = vmatpush1.msra.mxu0 0.0
    %2105 = vmatprep.subr.mxu0 0.0
    %2106 = vmatpush1.msra.mxu0 0.0
    %2107 = vmatprep.subr.mxu0 0.0
    %2108 = vmatpush1.msra.mxu0 0.0
    %2109 = vmatprep.subr.mxu0 0.0
    %2110 = vmatpush1.msra.mxu0 0.0
    %2111 = vmatprep.subr.mxu0 0.0
    %2112 = vmatpush1.msra.mxu0 0.0
    %2113 = vmatprep.subr.mxu0 0.0
    %2114 = vmatpush1.msra.mxu0 0.0
    %2115 = vmatprep.subr.mxu0 0.0
    %2116 = vmatpush1.msra.mxu0 0.0
    %2117 = vmatprep.subr.mxu0 0.0
    %2118 = vmatpush1.msra.mxu0 0.0
    %2119 = vmatprep.subr.mxu0 0.0
    %2120 = vmatpush1.msra.mxu0 0.0
    %2121 = vmatprep.subr.mxu0 0.0
    %2122 = vmatpush1.msra.mxu0 0.0
    %2123 = vmatprep.subr.mxu0 0.0
    %2124 = vmatpush1.msra.mxu0 0.0
    %2125 = vmatprep.subr.mxu0 0.0
    %2126 = vmatpush1.msra.mxu0 0.0
    %2127 = vmatprep.subr.mxu0 0.0
    %2128 = vmatpush1.msra.mxu0 0.0
    %2129 = vmatprep.subr.mxu0 0.0
    %2130 = vmatpush1.msra.mxu0 0.0
    %2131 = vmatprep.subr.mxu0 0.0
    %2132 = vmatpush1.msra.mxu0 0.0
    %2133 = vmatprep.subr.mxu0 0.0
    %2134 = vmatpush1.msra.mxu0 0.0
    %2135 = vmatprep.subr.mxu0 0.0
    %2136 = vmatpush1.msra.mxu0 0.0
    %2137 = vmatprep.subr.mxu0 0.0
    %2138 = vmatpush1.msra.mxu0 0.0
    %2139 = vmatprep.subr.mxu0 0.0
    %2140 = vmatpush1.msra.mxu0 0.0
    %2141 = vmatprep.subr.mxu0 0.0
    %2142 = vmatpush1.msra.mxu0 0.0
    %2143 = vmatprep.subr.mxu0 0.0
    %2144 = vmatpush1.msra.mxu0 0.0
    %2145 = vmatprep.subr.mxu0 0.0
    %2146 = vmatpush1.msra.mxu0 0.0
    %2147 = vmatprep.subr.mxu0 0.0
    %2148 = vmatpush1.msra.mxu0 0.0
    %2149 = vmatprep.subr.mxu0 0.0
    %2150 = vmatpush1.msra.mxu0 0.0
    %2151 = vmatprep.subr.mxu0 0.0
    %2152 = vmatpush1.msra.mxu0 0.0
    %2153 = vmatprep.subr.mxu0 0.0
    %2154 = vmatpush1.msra.mxu0 0.0
    %2155 = vmatprep.subr.mxu0 0.0
    %2156 = vmatpush1.msra.mxu0 0.0
    %2157 = vmatprep.subr.mxu0 0.0
    %2158 = vmatpush1.msra.mxu0 0.0
    %2159 = vmatprep.mubr.f32.mxu0 0.0
    %2160 = vmatmul.mubr.f32.gmra.mrb[0].mxu0 %v2093
    %v2161 = vpop.f32.mrb[0].mxu0
    %v2162 = vadd.f32 0.0, %v2161
    %v2163 = vpop.f32.mrb[0].mxu0
    %2164 = vdwg.mxu0
    %2165 = vrot.lane.b32.xlu0 %v1664, 104
    %v2166 = vpop.permute.xlu0 %2165
    %2167 = vrot.lane.b32.xlu0 %v1664, 72
    %v2168 = vpop.permute.xlu0 %2167
    %v2169 = vsel %vm1670, %v2166, 0
    %v2171 = vsel %vm1670, %v2168, 0
    %2173 = vmatprep.subr.mxu0 0.0
    %2174 = vmatpush1.xpose.msra.mxu0 %v2171
    %2175 = vmatprep.subr.mxu0 0.0
    %2176 = vmatpush1.xpose.msra.mxu0 0.0
    %2177 = vmatprep.subr.mxu0 0.0
    %2178 = vmatpush1.xpose.msra.mxu0 0.0
    %2179 = vmatprep.subr.mxu0 0.0
    %2180 = vmatpush1.xpose.msra.mxu0 0.0
    %2181 = vmatprep.subr.mxu0 0.0
    %2182 = vmatpush1.xpose.msra.mxu0 0.0
    %2183 = vmatprep.subr.mxu0 0.0
    %2184 = vmatpush1.xpose.msra.mxu0 0.0
    %2185 = vmatprep.subr.mxu0 0.0
    %2186 = vmatpush1.xpose.msra.mxu0 0.0
    %2187 = vmatprep.subr.mxu0 0.0
    %2188 = vmatpush1.xpose.msra.mxu0 0.0
    %2189 = vmatprep.subr.mxu0 0.0
    %2190 = vmatpush1.xpose.msra.mxu0 0.0
    %2191 = vmatprep.subr.mxu0 0.0
    %2192 = vmatpush1.xpose.msra.mxu0 0.0
    %2193 = vmatprep.subr.mxu0 0.0
    %2194 = vmatpush1.xpose.msra.mxu0 0.0
    %2195 = vmatprep.subr.mxu0 0.0
    %2196 = vmatpush1.xpose.msra.mxu0 0.0
    %2197 = vmatprep.subr.mxu0 0.0
    %2198 = vmatpush1.xpose.msra.mxu0 0.0
    %2199 = vmatprep.subr.mxu0 0.0
    %2200 = vmatpush1.xpose.msra.mxu0 0.0
    %2201 = vmatprep.subr.mxu0 0.0
    %2202 = vmatpush1.xpose.msra.mxu0 0.0
    %2203 = vmatprep.subr.mxu0 0.0
    %2204 = vmatpush1.xpose.msra.mxu0 0.0
    %2205 = vmatprep.subr.mxu0 0.0
    %2206 = vmatpush1.xpose.msra.mxu0 0.0
    %2207 = vmatprep.subr.mxu0 0.0
    %2208 = vmatpush1.xpose.msra.mxu0 0.0
    %2209 = vmatprep.subr.mxu0 0.0
    %2210 = vmatpush1.xpose.msra.mxu0 0.0
    %2211 = vmatprep.subr.mxu0 0.0
    %2212 = vmatpush1.xpose.msra.mxu0 0.0
    %2213 = vmatprep.subr.mxu0 0.0
    %2214 = vmatpush1.xpose.msra.mxu0 0.0
    %2215 = vmatprep.subr.mxu0 0.0
    %2216 = vmatpush1.xpose.msra.mxu0 0.0
    %2217 = vmatprep.subr.mxu0 0.0
    %2218 = vmatpush1.xpose.msra.mxu0 0.0
    %2219 = vmatprep.subr.mxu0 0.0
    %2220 = vmatpush1.xpose.msra.mxu0 0.0
    %2221 = vmatprep.subr.mxu0 0.0
    %2222 = vmatpush1.xpose.msra.mxu0 0.0
    %2223 = vmatprep.subr.mxu0 0.0
    %2224 = vmatpush1.xpose.msra.mxu0 0.0
    %2225 = vmatprep.subr.mxu0 0.0
    %2226 = vmatpush1.xpose.msra.mxu0 0.0
    %2227 = vmatprep.subr.mxu0 0.0
    %2228 = vmatpush1.xpose.msra.mxu0 0.0
    %2229 = vmatprep.subr.mxu0 0.0
    %2230 = vmatpush1.xpose.msra.mxu0 0.0
    %2231 = vmatprep.subr.mxu0 0.0
    %2232 = vmatpush1.xpose.msra.mxu0 0.0
    %2233 = vmatprep.subr.mxu0 0.0
    %2234 = vmatpush1.xpose.msra.mxu0 0.0
    %2235 = vmatprep.subr.mxu0 0.0
    %2236 = vmatpush1.xpose.msra.mxu0 0.0
    %2237 = vmatprep.mubr.f32.mxu0 0.0
    %2238 = vmatmul.mubr.f32.gmra.mrb[0].mxu0 %v2169
    %v2239 = vpop.f32.mrb[0].mxu0
    %v2240 = vadd.f32 0.0, %v2239
    %v2241 = vpop.f32.mrb[0].mxu0
    %2242 = vdwg.mxu0
    %v2243 = vmul.f32 %v2240, 0.35355338
    %v2244 = vsel %vm1670, %v2243, -inf
    %2245 = vmax.xlane.f32.xlu0 %v2244
    %v2246 = vpop.xlane.xlu0 %2245
    %v2247 = vsub.f32 %v2243, %v2246
    %v2248 = vmul.f32 %v2247, 1.442695
    %v2249 = vpow.pop %v2248
    %v2250 = vsel %vm1670, %v2249, 0.0
    %2251 = vadd.xlane.f32.xlu0 %v2250
    %v2252 = vpop.xlane.xlu0 %2251
    %v2253 = vrcp.pop %v2252
    %v2254 = vmul.f32 %v2249, %v2253
    %2255 = vrot.lane.b32.xlu0 %v1664, 40
    %v2256 = vpop.permute.xlu0 %2255
    %v2259 = vsel %vm1670, %v2254, 0
    %2261 = vmatprep.subr.mxu0 0.0
    %2262 = vmatpush1.msra.mxu0 %v2256
    %2263 = vmatprep.subr.mxu0 0.0
    %2264 = vmatpush1.msra.mxu0 0.0
    %2265 = vmatprep.subr.mxu0 0.0
    %2266 = vmatpush1.msra.mxu0 0.0
    %2267 = vmatprep.subr.mxu0 0.0
    %2268 = vmatpush1.msra.mxu0 0.0
    %2269 = vmatprep.subr.mxu0 0.0
    %2270 = vmatpush1.msra.mxu0 0.0
    %2271 = vmatprep.subr.mxu0 0.0
    %2272 = vmatpush1.msra.mxu0 0.0
    %2273 = vmatprep.subr.mxu0 0.0
    %2274 = vmatpush1.msra.mxu0 0.0
    %2275 = vmatprep.subr.mxu0 0.0
    %2276 = vmatpush1.msra.mxu0 0.0
    %2277 = vmatprep.subr.mxu0 0.0
    %2278 = vmatpush1.msra.mxu0 0.0
    %2279 = vmatprep.subr.mxu0 0.0
    %2280 = vmatpush1.msra.mxu0 0.0
    %2281 = vmatprep.subr.mxu0 0.0
    %2282 = vmatpush1.msra.mxu0 0.0
    %2283 = vmatprep.subr.mxu0 0.0
    %2284 = vmatpush1.msra.mxu0 0.0
    %2285 = vmatprep.subr.mxu0 0.0
    %2286 = vmatpush1.msra.mxu0 0.0
    %2287 = vmatprep.subr.mxu0 0.0
    %2288 = vmatpush1.msra.mxu0 0.0
    %2289 = vmatprep.subr.mxu0 0.0
    %2290 = vmatpush1.msra.mxu0 0.0
    %2291 = vmatprep.subr.mxu0 0.0
    %2292 = vmatpush1.msra.mxu0 0.0
    %2293 = vmatprep.subr.mxu0 0.0
    %2294 = vmatpush1.msra.mxu0 0.0
    %2295 = vmatprep.subr.mxu0 0.0
    %2296 = vmatpush1.msra.mxu0 0.0
    %2297 = vmatprep.subr.mxu0 0.0
    %2298 = vmatpush1.msra.mxu0 0.0
    %2299 = vmatprep.subr.mxu0 0.0
    %2300 = vmatpush1.msra.mxu0 0.0
    %2301 = vmatprep.subr.mxu0 0.0
    %2302 = vmatpush1.msra.mxu0 0.0
    %2303 = vmatprep.subr.mxu0 0.0
    %2304 = vmatpush1.msra.mxu0 0.0
    %2305 = vmatprep.subr.mxu0 0.0
    %2306 = vmatpush1.msra.mxu0 0.0
    %2307 = vmatprep.subr.mxu0 0.0
    %2308 = vmatpush1.msra.mxu0 0.0
    %2309 = vmatprep.subr.mxu0 0.0
    %2310 = vmatpush1.msra.mxu0 0.0
    %2311 = vmatprep.subr.mxu0 0.0
    %2312 = vmatpush1.msra.mxu0 0.0
    %2313 = vmatprep.subr.mxu0 0.0
    %2314 = vmatpush1.msra.mxu0 0.0
    %2315 = vmatprep.subr.mxu0 0.0
    %2316 = vmatpush1.msra.mxu0 0.0
    %2317 = vmatprep.subr.mxu0 0.0
    %2318 = vmatpush1.msra.mxu0 0.0
    %2319 = vmatprep.subr.mxu0 0.0
    %2320 = vmatpush1.msra.mxu0 0.0
    %2321 = vmatprep.subr.mxu0 0.0
    %2322 = vmatpush1.msra.mxu0 0.0
    %2323 = vmatprep.subr.mxu0 0.0
    %2324 = vmatpush1.msra.mxu0 0.0
    %2325 = vmatprep.mubr.f32.mxu0 0.0
    %2326 = vmatmul.mubr.f32.gmra.mrb[0].mxu0 %v2259
    %v2327 = vpop.f32.mrb[0].mxu0
    %v2328 = vadd.f32 0.0, %v2327
    %v2329 = vpop.f32.mrb[0].mxu0
    %2330 = vdwg.mxu0
    %2332 = vrot.lane.b32.xlu0 %v1996, 8
    %v2333 = vpop.permute.xlu0 %2332
    %2336 = vrot.lane.b32.xlu0 %v2162, 16
    %v2337 = vpop.permute.xlu0 %2336
    %2340 = vrot.lane.b32.xlu0 %v2328, 24
    %v2341 = vpop.permute.xlu0 %2340
    %v2343 = vsel %vm1670, %v1830, %v2333
    %v2344 = vsel %vm245, %v2343, %v2337
    %vm2345 = vcmask 195584
    %v2346 = vsel %vm2345, %v2344, %v2341
    %2351 = vrot.lane.b32.xlu0 %v1584, 32
    %v2352 = vpop.permute.xlu0 %2351
    %2353 = vrot.lane.b32.xlu0 %v1585, 32
    %v2354 = vpop.permute.xlu0 %2353
    %2355 = vrot.lane.b32.xlu0 %v1586, 32
    %v2356 = vpop.permute.xlu0 %2355
    %2357 = vrot.lane.b32.xlu0 %v1587, 32
    %v2358 = vpop.permute.xlu0 %2357
    %2364 = vrot.lane.b32.xlu0 %v1592, 32
    %v2365 = vpop.permute.xlu0 %2364
    %v2368 = vsel %vm1593, %v2346, 0
    %2370 = vmatprep.subr.mxu0 0.0
    %2371 = vmatpush1.msra.mxu0 %v2352
    %2372 = vmatprep.subr.mxu0 0.0
    %2373 = vmatpush1.msra.mxu0 %v2354
    %2374 = vmatprep.subr.mxu0 0.0
    %2375 = vmatpush1.msra.mxu0 %v2356
    %2376 = vmatprep.subr.mxu0 0.0
    %2377 = vmatpush1.msra.mxu0 %v2358
    %2378 = vmatprep.subr.mxu0 0.0
    %2379 = vmatpush1.msra.mxu0 0.0
    %2380 = vmatprep.subr.mxu0 0.0
    %2381 = vmatpush1.msra.mxu0 0.0
    %2382 = vmatprep.subr.mxu0 0.0
    %2383 = vmatpush1.msra.mxu0 0.0
    %2384 = vmatprep.subr.mxu0 0.0
    %2385 = vmatpush1.msra.mxu0 0.0
    %2386 = vmatprep.subr.mxu0 0.0
    %2387 = vmatpush1.msra.mxu0 0.0
    %2388 = vmatprep.subr.mxu0 0.0
    %2389 = vmatpush1.msra.mxu0 0.0
    %2390 = vmatprep.subr.mxu0 0.0
    %2391 = vmatpush1.msra.mxu0 0.0
    %2392 = vmatprep.subr.mxu0 0.0
    %2393 = vmatpush1.msra.mxu0 0.0
    %2394 = vmatprep.subr.mxu0 0.0
    %2395 = vmatpush1.msra.mxu0 0.0
    %2396 = vmatprep.subr.mxu0 0.0
    %2397 = vmatpush1.msra.mxu0 0.0
    %2398 = vmatprep.subr.mxu0 0.0
    %2399 = vmatpush1.msra.mxu0 0.0
    %2400 = vmatprep.subr.mxu0 0.0
    %2401 = vmatpush1.msra.mxu0 0.0
    %2402 = vmatprep.subr.mxu0 0.0
    %2403 = vmatpush1.msra.mxu0 0.0
    %2404 = vmatprep.subr.mxu0 0.0
    %2405 = vmatpush1.msra.mxu0 0.0
    %2406 = vmatprep.subr.mxu0 0.0
    %2407 = vmatpush1.msra.mxu0 0.0
    %2408 = vmatprep.subr.mxu0 0.0
    %2409 = vmatpush1.msra.mxu0 0.0
    %2410 = vmatprep.subr.mxu0 0.0
    %2411 = vmatpush1.msra.mxu0 0.0
    %2412 = vmatprep.subr.mxu0 0.0
    %2413 = vmatpush1.msra.mxu0 0.0
    %2414 = vmatprep.subr.mxu0 0.0
    %2415 = vmatpush1.msra.mxu0 0.0
    %2416 = vmatprep.subr.mxu0 0.0
    %2417 = vmatpush1.msra.mxu0 0.0
    %2418 = vmatprep.subr.mxu0 0.0
    %2419 = vmatpush1.msra.mxu0 0.0
    %2420 = vmatprep.subr.mxu0 0.0
    %2421 = vmatpush1.msra.mxu0 0.0
    %2422 = vmatprep.subr.mxu0 0.0
    %2423 = vmatpush1.msra.mxu0 0.0
    %2424 = vmatprep.subr.mxu0 0.0
    %2425 = vmatpush1.msra.mxu0 0.0
    %2426 = vmatprep.subr.mxu0 0.0
    %2427 = vmatpush1.msra.mxu0 0.0
    %2428 = vmatprep.subr.mxu0 0.0
    %2429 = vmatpush1.msra.mxu0 0.0
    %2430 = vmatprep.subr.mxu0 0.0
    %2431 = vmatpush1.msra.mxu0 0.0
    %2432 = vmatprep.subr.mxu0 0.0
    %2433 = vmatpush1.msra.mxu0 0.0
    %2434 = vmatprep.mubr.f32.mxu0 0.0
    %2435 = vmatmul.mubr.f32.gmra.mrb[0].mxu0 %v2368
    %v2436 = vpop.f32.mrb[0].mxu0
    %v2437 = vadd.f32 %v2365, %v2436
    %v2438 = vpop.f32.mrb[0].mxu0
    %2439 = vdwg.mxu0
    %v2440 = vadd.f32 %v1588, %v2437
    %v2441 = vlaneseq
    %v2442 = vshrl.u32 %v2441, 7
    %v2443 = vsub.s32 1, %v2442
    %v2444 = vrot.slane %v752, %v2443
    %v2445 = vmul.f32 %v2444, %v1321
    %v2446 = vmul.f32 %v2444, %v1322
    %v2447 = vmul.f32 %v2444, %v1323
    %v2448 = vmul.f32 %v2444, %v1324
    %v2449 = vlaneseq
    %v2450 = vshrl.u32 %v2449, 7
    %v2451 = vsub.s32 1, %v2450
    %v2452 = vrot.slane %v821, %v2451
    %v2453 = vmul.f32 %v2452, %v1334
    %v2454 = vmul.f32 %v2452, %v1335
    %v2455 = vmul.f32 %v2452, %v1336
    %v2456 = vmul.f32 %v2452, %v1337
    %v2457 = vadd.f32 %v2445, %v2453
    %v2458 = vadd.f32 %v2446, %v2454
    %v2459 = vadd.f32 %v2447, %v2455
    %v2460 = vadd.f32 %v2448, %v2456
    %v2461 = vlaneseq
    %v2462 = vshrl.u32 %v2461, 7
    %v2463 = vsub.s32 1, %v2462
    %v2464 = vrot.slane %v823, %v2463
    %v2465 = vmul.f32 %v2464, %v1351
    %v2466 = vmul.f32 %v2464, %v1352
    %v2467 = vmul.f32 %v2464, %v1353
    %v2468 = vmul.f32 %v2464, %v1354
    %v2469 = vadd.f32 %v2457, %v2465
    %v2470 = vadd.f32 %v2458, %v2466
    %v2471 = vadd.f32 %v2459, %v2467
    %v2472 = vadd.f32 %v2460, %v2468
    %v2473 = vlaneseq
    %v2474 = vshrl.u32 %v2473, 7
    %v2475 = vsub.s32 1, %v2474
    %v2476 = vrot.slane %v892, %v2475
    %v2477 = vmul.f32 %v2476, %v1368
    %v2478 = vmul.f32 %v2476, %v1369
    %v2479 = vmul.f32 %v2476, %v1370
    %v2480 = vmul.f32 %v2476, %v1371
    %v2481 = vadd.f32 %v2469, %v2477
    %v2482 = vadd.f32 %v2470, %v2478
    %v2483 = vadd.f32 %v2471, %v2479
    %v2484 = vadd.f32 %v2472, %v2480
    %v2485 = vlaneseq
    %v2486 = vshrl.u32 %v2485, 7
    %v2487 = vsub.s32 1, %v2486
    %v2488 = vrot.slane %v894, %v2487
    %v2489 = vmul.f32 %v2488, %v1385
    %v2490 = vmul.f32 %v2488, %v1386
    %v2491 = vmul.f32 %v2488, %v1387
    %v2492 = vmul.f32 %v2488, %v1388
    %v2493 = vadd.f32 %v2481, %v2489
    %v2494 = vadd.f32 %v2482, %v2490
    %v2495 = vadd.f32 %v2483, %v2491
    %v2496 = vadd.f32 %v2484, %v2492
    %v2497 = vlaneseq
    %v2498 = vshrl.u32 %v2497, 7
    %v2499 = vsub.s32 1, %v2498
    %v2500 = vrot.slane %v963, %v2499
    %v2501 = vmul.f32 %v2500, %v1402
    %v2502 = vmul.f32 %v2500, %v1403
    %v2503 = vmul.f32 %v2500, %v1404
    %v2504 = vmul.f32 %v2500, %v1405
    %v2505 = vadd.f32 %v2493, %v2501
    %v2506 = vadd.f32 %v2494, %v2502
    %v2507 = vadd.f32 %v2495, %v2503
    %v2508 = vadd.f32 %v2496, %v2504
    %v2509 = vlaneseq
    %v2510 = vshrl.u32 %v2509, 7
    %v2511 = vsub.s32 1, %v2510
    %v2512 = vrot.slane %v965, %v2511
    %v2513 = vmul.f32 %v2512, %v1419
    %v2514 = vmul.f32 %v2512, %v1420
    %v2515 = vmul.f32 %v2512, %v1421
    %v2516 = vmul.f32 %v2512, %v1422
    %v2517 = vadd.f32 %v2505, %v2513
    %v2518 = vadd.f32 %v2506, %v2514
    %v2519 = vadd.f32 %v2507, %v2515
    %v2520 = vadd.f32 %v2508, %v2516
    %v2521 = vlaneseq
    %v2522 = vshrl.u32 %v2521, 7
    %v2523 = vsub.s32 1, %v2522
    %v2524 = vrot.slane %v1034, %v2523
    %v2525 = vmul.f32 %v2524, %v1436
    %v2526 = vmul.f32 %v2524, %v1437
    %v2527 = vmul.f32 %v2524, %v1438
    %v2528 = vmul.f32 %v2524, %v1439
    %v2529 = vadd.f32 %v2517, %v2525
    %v2530 = vadd.f32 %v2518, %v2526
    %v2531 = vadd.f32 %v2519, %v2527
    %v2532 = vadd.f32 %v2520, %v2528
    %v2533 = vlaneseq
    %v2534 = vshrl.u32 %v2533, 7
    %v2535 = vsub.s32 1, %v2534
    %v2536 = vrot.slane %v1036, %v2535
    %v2537 = vmul.f32 %v2536, %v1453
    %v2538 = vmul.f32 %v2536, %v1454
    %v2539 = vmul.f32 %v2536, %v1455
    %v2540 = vmul.f32 %v2536, %v1456
    %v2541 = vadd.f32 %v2529, %v2537
    %v2542 = vadd.f32 %v2530, %v2538
    %v2543 = vadd.f32 %v2531, %v2539
    %v2544 = vadd.f32 %v2532, %v2540
    %v2545 = vlaneseq
    %v2546 = vshrl.u32 %v2545, 7
    %v2547 = vsub.s32 1, %v2546
    %v2548 = vrot.slane %v1105, %v2547
    %v2549 = vmul.f32 %v2548, %v1470
    %v2550 = vmul.f32 %v2548, %v1471
    %v2551 = vmul.f32 %v2548, %v1472
    %v2552 = vmul.f32 %v2548, %v1473
    %v2553 = vadd.f32 %v2541, %v2549
    %v2554 = vadd.f32 %v2542, %v2550
    %v2555 = vadd.f32 %v2543, %v2551
    %v2556 = vadd.f32 %v2544, %v2552
    %v2557 = vlaneseq
    %v2558 = vshrl.u32 %v2557, 7
    %v2559 = vsub.s32 1, %v2558
    %v2560 = vrot.slane %v1107, %v2559
    %v2561 = vmul.f32 %v2560, %v1487
    %v2562 = vmul.f32 %v2560, %v1488
    %v2563 = vmul.f32 %v2560, %v1489
    %v2564 = vmul.f32 %v2560, %v1490
    %v2565 = vadd.f32 %v2553, %v2561
    %v2566 = vadd.f32 %v2554, %v2562
    %v2567 = vadd.f32 %v2555, %v2563
    %v2568 = vadd.f32 %v2556, %v2564
    %v2569 = vlaneseq
    %v2570 = vshrl.u32 %v2569, 7
    %v2571 = vsub.s32 1, %v2570
    %v2572 = vrot.slane %v1176, %v2571
    %v2573 = vmul.f32 %v2572, %v1504
    %v2574 = vmul.f32 %v2572, %v1505
    %v2575 = vmul.f32 %v2572, %v1506
    %v2576 = vmul.f32 %v2572, %v1507
    %v2577 = vadd.f32 %v2565, %v2573
    %v2578 = vadd.f32 %v2566, %v2574
    %v2579 = vadd.f32 %v2567, %v2575
    %v2580 = vadd.f32 %v2568, %v2576
    %v2581 = vlaneseq
    %v2582 = vshrl.u32 %v2581, 7
    %v2583 = vsub.s32 1, %v2582
    %v2584 = vrot.slane %v1178, %v2583
    %v2585 = vmul.f32 %v2584, %v1521
    %v2586 = vmul.f32 %v2584, %v1522
    %v2587 = vmul.f32 %v2584, %v1523
    %v2588 = vmul.f32 %v2584, %v1524
    %v2589 = vadd.f32 %v2577, %v2585
    %v2590 = vadd.f32 %v2578, %v2586
    %v2591 = vadd.f32 %v2579, %v2587
    %v2592 = vadd.f32 %v2580, %v2588
    %v2593 = vlaneseq
    %v2594 = vshrl.u32 %v2593, 7
    %v2595 = vsub.s32 1, %v2594
    %v2596 = vrot.slane %v1247, %v2595
    %v2597 = vmul.f32 %v2596, %v1538
    %v2598 = vmul.f32 %v2596, %v1539
    %v2599 = vmul.f32 %v2596, %v1540
    %v2600 = vmul.f32 %v2596, %v1541
    %v2601 = vadd.f32 %v2589, %v2597
    %v2602 = vadd.f32 %v2590, %v2598
    %v2603 = vadd.f32 %v2591, %v2599
    %v2604 = vadd.f32 %v2592, %v2600
    %v2605 = vlaneseq
    %v2606 = vshrl.u32 %v2605, 7
    %v2607 = vsub.s32 1, %v2606
    %v2608 = vrot.slane %v1249, %v2607
    %v2609 = vmul.f32 %v2608, %v1555
    %v2610 = vmul.f32 %v2608, %v1556
    %v2611 = vmul.f32 %v2608, %v1557
    %v2612 = vmul.f32 %v2608, %v1558
    %v2613 = vadd.f32 %v2601, %v2609
    %v2614 = vadd.f32 %v2602, %v2610
    %v2615 = vadd.f32 %v2603, %v2611
    %v2616 = vadd.f32 %v2604, %v2612
    %v2617 = vlaneseq
    %v2618 = vshrl.u32 %v2617, 7
    %v2619 = vsub.s32 1, %v2618
    %v2620 = vrot.slane %v1318, %v2619
    %v2621 = vmul.f32 %v2620, %v1572
    %v2622 = vmul.f32 %v2620, %v1573
    %v2623 = vmul.f32 %v2620, %v1574
    %v2624 = vmul.f32 %v2620, %v1575
    %v2625 = vadd.f32 %v2613, %v2621
    %v2626 = vadd.f32 %v2614, %v2622
    %v2627 = vadd.f32 %v2615, %v2623
    %v2628 = vadd.f32 %v2616, %v2624
    %s2629 = scalar_lea.vmem [#allocation5], 8
    %v2630 = vld [vmem:[%s2629] sm:$0xff]
    %v2631 = vlaneseq
    %v2632 = vshrl.u32 %v2631, 7
    %v2633 = vsub.s32 1, %v2632
    %v2634 = vrot.slane %v750, %v2633
    %v2636 = vsel %vm1593, %v2630, 0
    %2638 = vmatprep.subr.mxu0 0.0
    %2639 = vmatpush1.msra.mxu0 %v2625
    %2640 = vmatprep.subr.mxu0 0.0
    %2641 = vmatpush1.msra.mxu0 %v2626
    %2642 = vmatprep.subr.mxu0 0.0
    %2643 = vmatpush1.msra.mxu0 %v2627
    %2644 = vmatprep.subr.mxu0 0.0
    %2645 = vmatpush1.msra.mxu0 %v2628
    %2646 = vmatprep.subr.mxu0 0.0
    %2647 = vmatpush1.msra.mxu0 0.0
    %2648 = vmatprep.subr.mxu0 0.0
    %2649 = vmatpush1.msra.mxu0 0.0
    %2650 = vmatprep.subr.mxu0 0.0
    %2651 = vmatpush1.msra.mxu0 0.0
    %2652 = vmatprep.subr.mxu0 0.0
    %2653 = vmatpush1.msra.mxu0 0.0
    %2654 = vmatprep.subr.mxu0 0.0
    %2655 = vmatpush1.msra.mxu0 0.0
    %2656 = vmatprep.subr.mxu0 0.0
    %2657 = vmatpush1.msra.mxu0 0.0
    %2658 = vmatprep.subr.mxu0 0.0
    %2659 = vmatpush1.msra.mxu0 0.0
    %2660 = vmatprep.subr.mxu0 0.0
    %2661 = vmatpush1.msra.mxu0 0.0
    %2662 = vmatprep.subr.mxu0 0.0
    %2663 = vmatpush1.msra.mxu0 0.0
    %2664 = vmatprep.subr.mxu0 0.0
    %2665 = vmatpush1.msra.mxu0 0.0
    %2666 = vmatprep.subr.mxu0 0.0
    %2667 = vmatpush1.msra.mxu0 0.0
    %2668 = vmatprep.subr.mxu0 0.0
    %2669 = vmatpush1.msra.mxu0 0.0
    %2670 = vmatprep.subr.mxu0 0.0
    %2671 = vmatpush1.msra.mxu0 0.0
    %2672 = vmatprep.subr.mxu0 0.0
    %2673 = vmatpush1.msra.mxu0 0.0
    %2674 = vmatprep.subr.mxu0 0.0
    %2675 = vmatpush1.msra.mxu0 0.0
    %2676 = vmatprep.subr.mxu0 0.0
    %2677 = vmatpush1.msra.mxu0 0.0
    %2678 = vmatprep.subr.mxu0 0.0
    %2679 = vmatpush1.msra.mxu0 0.0
    %2680 = vmatprep.subr.mxu0 0.0
    %2681 = vmatpush1.msra.mxu0 0.0
    %2682 = vmatprep.subr.mxu0 0.0
    %2683 = vmatpush1.msra.mxu0 0.0
    %2684 = vmatprep.subr.mxu0 0.0
    %2685 = vmatpush1.msra.mxu0 0.0
    %2686 = vmatprep.subr.mxu0 0.0
    %2687 = vmatpush1.msra.mxu0 0.0
    %2688 = vmatprep.subr.mxu0 0.0
    %2689 = vmatpush1.msra.mxu0 0.0
    %2690 = vmatprep.subr.mxu0 0.0
    %2691 = vmatpush1.msra.mxu0 0.0
    %2692 = vmatprep.subr.mxu0 0.0
    %2693 = vmatpush1.msra.mxu0 0.0
    %2694 = vmatprep.subr.mxu0 0.0
    %2695 = vmatpush1.msra.mxu0 0.0
    %2696 = vmatprep.subr.mxu0 0.0
    %2697 = vmatpush1.msra.mxu0 0.0
    %2698 = vmatprep.subr.mxu0 0.0
    %2699 = vmatpush1.msra.mxu0 0.0
    %2700 = vmatprep.subr.mxu0 0.0
    %2701 = vmatpush1.msra.mxu0 0.0
    %2702 = vmatprep.mubr.f32.mxu0 0.0
    %2703 = vmatmul.mubr.f32.gmra.mrb[0].mxu0 %v2636
    %v2704 = vpop.f32.mrb[0].mxu0
    %v2705 = vadd.f32 %v2634, %v2704
    %v2706 = vpop.f32.mrb[0].mxu0
    %2707 = vdwg.mxu0
    %2709 = vrot.lane.b32.xlu0 %v2705, 96
    %v2710 = vpop.permute.xlu0 %2709
    %v2711 = vsel %vm1670, %v2705, 0
    %v2713 = vsel %vm1670, %v2710, 0
    %2715 = vmatprep.subr.mxu0 0.0
    %2716 = vmatpush1.xpose.msra.mxu0 %v2713
    %2717 = vmatprep.subr.mxu0 0.0
    %2718 = vmatpush1.xpose.msra.mxu0 0.0
    %2719 = vmatprep.subr.mxu0 0.0
    %2720 = vmatpush1.xpose.msra.mxu0 0.0
    %2721 = vmatprep.subr.mxu0 0.0
    %2722 = vmatpush1.xpose.msra.mxu0 0.0
    %2723 = vmatprep.subr.mxu0 0.0
    %2724 = vmatpush1.xpose.msra.mxu0 0.0
    %2725 = vmatprep.subr.mxu0 0.0
    %2726 = vmatpush1.xpose.msra.mxu0 0.0
    %2727 = vmatprep.subr.mxu0 0.0
    %2728 = vmatpush1.xpose.msra.mxu0 0.0
    %2729 = vmatprep.subr.mxu0 0.0
    %2730 = vmatpush1.xpose.msra.mxu0 0.0
    %2731 = vmatprep.subr.mxu0 0.0
    %2732 = vmatpush1.xpose.msra.mxu0 0.0
    %2733 = vmatprep.subr.mxu0 0.0
    %2734 = vmatpush1.xpose.msra.mxu0 0.0
    %2735 = vmatprep.subr.mxu0 0.0
    %2736 = vmatpush1.xpose.msra.mxu0 0.0
    %2737 = vmatprep.subr.mxu0 0.0
    %2738 = vmatpush1.xpose.msra.mxu0 0.0
    %2739 = vmatprep.subr.mxu0 0.0
    %2740 = vmatpush1.xpose.msra.mxu0 0.0
    %2741 = vmatprep.subr.mxu0 0.0
    %2742 = vmatpush1.xpose.msra.mxu0 0.0
    %2743 = vmatprep.subr.mxu0 0.0
    %2744 = vmatpush1.xpose.msra.mxu0 0.0
    %2745 = vmatprep.subr.mxu0 0.0
    %2746 = vmatpush1.xpose.msra.mxu0 0.0
    %2747 = vmatprep.subr.mxu0 0.0
    %2748 = vmatpush1.xpose.msra.mxu0 0.0
    %2749 = vmatprep.subr.mxu0 0.0
    %2750 = vmatpush1.xpose.msra.mxu0 0.0
    %2751 = vmatprep.subr.mxu0 0.0
    %2752 = vmatpush1.xpose.msra.mxu0 0.0
    %2753 = vmatprep.subr.mxu0 0.0
    %2754 = vmatpush1.xpose.msra.mxu0 0.0
    %2755 = vmatprep.subr.mxu0 0.0
    %2756 = vmatpush1.xpose.msra.mxu0 0.0
    %2757 = vmatprep.subr.mxu0 0.0
    %2758 = vmatpush1.xpose.msra.mxu0 0.0
    %2759 = vmatprep.subr.mxu0 0.0
    %2760 = vmatpush1.xpose.msra.mxu0 0.0
    %2761 = vmatprep.subr.mxu0 0.0
    %2762 = vmatpush1.xpose.msra.mxu0 0.0
    %2763 = vmatprep.subr.mxu0 0.0
    %2764 = vmatpush1.xpose.msra.mxu0 0.0
    %2765 = vmatprep.subr.mxu0 0.0
    %2766 = vmatpush1.xpose.msra.mxu0 0.0
    %2767 = vmatprep.subr.mxu0 0.0
    %2768 = vmatpush1.xpose.msra.mxu0 0.0
    %2769 = vmatprep.subr.mxu0 0.0
    %2770 = vmatpush1.xpose.msra.mxu0 0.0
    %2771 = vmatprep.subr.mxu0 0.0
    %2772 = vmatpush1.xpose.msra.mxu0 0.0
    %2773 = vmatprep.subr.mxu0 0.0
    %2774 = vmatpush1.xpose.msra.mxu0 0.0
    %2775 = vmatprep.subr.mxu0 0.0
    %2776 = vmatpush1.xpose.msra.mxu0 0.0
    %2777 = vmatprep.subr.mxu0 0.0
    %2778 = vmatpush1.xpose.msra.mxu0 0.0
    %2779 = vmatprep.mubr.f32.mxu0 0.0
    %2780 = vmatmul.mubr.f32.gmra.mrb[0].mxu0 %v2711
    %v2781 = vpop.f32.mrb[0].mxu0
    %v2782 = vadd.f32 0.0, %v2781
    %v2783 = vpop.f32.mrb[0].mxu0
    %2784 = vdwg.mxu0
    %v2785 = vmul.f32 %v2782, 0.35355338
    %v2786 = vsel %vm1670, %v2785, -inf
    %2787 = vmax.xlane.f32.xlu0 %v2786
    %v2788 = vpop.xlane.xlu0 %2787
    %v2789 = vsub.f32 %v2785, %v2788
    %v2790 = vmul.f32 %v2789, 1.442695
    %v2791 = vpow.pop %v2790
    %v2792 = vsel %vm1670, %v2791, 0.0
    %2793 = vadd.xlane.f32.xlu0 %v2792
    %v2794 = vpop.xlane.xlu0 %2793
    %v2795 = vrcp.pop %v2794
    %v2796 = vmul.f32 %v2791, %v2795
    %2797 = vrot.lane.b32.xlu0 %v2705, 64
    %v2798 = vpop.permute.xlu0 %2797
    %v2801 = vsel %vm1670, %v2796, 0
    %2803 = vmatprep.subr.mxu0 0.0
    %2804 = vmatpush1.msra.mxu0 %v2798
    %2805 = vmatprep.subr.mxu0 0.0
    %2806 = vmatpush1.msra.mxu0 0.0
    %2807 = vmatprep.subr.mxu0 0.0
    %2808 = vmatpush1.msra.mxu0 0.0
    %2809 = vmatprep.subr.mxu0 0.0
    %2810 = vmatpush1.msra.mxu0 0.0
    %2811 = vmatprep.subr.mxu0 0.0
    %2812 = vmatpush1.msra.mxu0 0.0
    %2813 = vmatprep.subr.mxu0 0.0
    %2814 = vmatpush1.msra.mxu0 0.0
    %2815 = vmatprep.subr.mxu0 0.0
    %2816 = vmatpush1.msra.mxu0 0.0
    %2817 = vmatprep.subr.mxu0 0.0
    %2818 = vmatpush1.msra.mxu0 0.0
    %2819 = vmatprep.subr.mxu0 0.0
    %2820 = vmatpush1.msra.mxu0 0.0
    %2821 = vmatprep.subr.mxu0 0.0
    %2822 = vmatpush1.msra.mxu0 0.0
    %2823 = vmatprep.subr.mxu0 0.0
    %2824 = vmatpush1.msra.mxu0 0.0
    %2825 = vmatprep.subr.mxu0 0.0
    %2826 = vmatpush1.msra.mxu0 0.0
    %2827 = vmatprep.subr.mxu0 0.0
    %2828 = vmatpush1.msra.mxu0 0.0
    %2829 = vmatprep.subr.mxu0 0.0
    %2830 = vmatpush1.msra.mxu0 0.0
    %2831 = vmatprep.subr.mxu0 0.0
    %2832 = vmatpush1.msra.mxu0 0.0
    %2833 = vmatprep.subr.mxu0 0.0
    %2834 = vmatpush1.msra.mxu0 0.0
    %2835 = vmatprep.subr.mxu0 0.0
    %2836 = vmatpush1.msra.mxu0 0.0
    %2837 = vmatprep.subr.mxu0 0.0
    %2838 = vmatpush1.msra.mxu0 0.0
    %2839 = vmatprep.subr.mxu0 0.0
    %2840 = vmatpush1.msra.mxu0 0.0
    %2841 = vmatprep.subr.mxu0 0.0
    %2842 = vmatpush1.msra.mxu0 0.0
    %2843 = vmatprep.subr.mxu0 0.0
    %2844 = vmatpush1.msra.mxu0 0.0
    %2845 = vmatprep.subr.mxu0 0.0
    %2846 = vmatpush1.msra.mxu0 0.0
    %2847 = vmatprep.subr.mxu0 0.0
    %2848 = vmatpush1.msra.mxu0 0.0
    %2849 = vmatprep.subr.mxu0 0.0
    %2850 = vmatpush1.msra.mxu0 0.0
    %2851 = vmatprep.subr.mxu0 0.0
    %2852 = vmatpush1.msra.mxu0 0.0
    %2853 = vmatprep.subr.mxu0 0.0
    %2854 = vmatpush1.msra.mxu0 0.0
    %2855 = vmatprep.subr.mxu0 0.0
    %2856 = vmatpush1.msra.mxu0 0.0
    %2857 = vmatprep.subr.mxu0 0.0
    %2858 = vmatpush1.msra.mxu0 0.0
    %2859 = vmatprep.subr.mxu0 0.0
    %2860 = vmatpush1.msra.mxu0 0.0
    %2861 = vmatprep.subr.mxu0 0.0
    %2862 = vmatpush1.msra.mxu0 0.0
    %2863 = vmatprep.subr.mxu0 0.0
    %2864 = vmatpush1.msra.mxu0 0.0
    %2865 = vmatprep.subr.mxu0 0.0
    %2866 = vmatpush1.msra.mxu0 0.0
    %2867 = vmatprep.mubr.f32.mxu0 0.0
    %2868 = vmatmul.mubr.f32.gmra.mrb[0].mxu0 %v2801
    %v2869 = vpop.f32.mrb[0].mxu0
    %v2870 = vadd.f32 0.0, %v2869
    %v2871 = vpop.f32.mrb[0].mxu0
    %2872 = vdwg.mxu0
    %2873 = vrot.lane.b32.xlu0 %v2705, 120
    %v2874 = vpop.permute.xlu0 %2873
    %2875 = vrot.lane.b32.xlu0 %v2705, 88
    %v2876 = vpop.permute.xlu0 %2875
    %v2877 = vsel %vm1670, %v2874, 0
    %v2879 = vsel %vm1670, %v2876, 0
    %2881 = vmatprep.subr.mxu0 0.0
    %2882 = vmatpush1.xpose.msra.mxu0 %v2879
    %2883 = vmatprep.subr.mxu0 0.0
    %2884 = vmatpush1.xpose.msra.mxu0 0.0
    %2885 = vmatprep.subr.mxu0 0.0
    %2886 = vmatpush1.xpose.msra.mxu0 0.0
    %2887 = vmatprep.subr.mxu0 0.0
    %2888 = vmatpush1.xpose.msra.mxu0 0.0
    %2889 = vmatprep.subr.mxu0 0.0
    %2890 = vmatpush1.xpose.msra.mxu0 0.0
    %2891 = vmatprep.subr.mxu0 0.0
    %2892 = vmatpush1.xpose.msra.mxu0 0.0
    %2893 = vmatprep.subr.mxu0 0.0
    %2894 = vmatpush1.xpose.msra.mxu0 0.0
    %2895 = vmatprep.subr.mxu0 0.0
    %2896 = vmatpush1.xpose.msra.mxu0 0.0
    %2897 = vmatprep.subr.mxu0 0.0
    %2898 = vmatpush1.xpose.msra.mxu0 0.0
    %2899 = vmatprep.subr.mxu0 0.0
    %2900 = vmatpush1.xpose.msra.mxu0 0.0
    %2901 = vmatprep.subr.mxu0 0.0
    %2902 = vmatpush1.xpose.msra.mxu0 0.0
    %2903 = vmatprep.subr.mxu0 0.0
    %2904 = vmatpush1.xpose.msra.mxu0 0.0
    %2905 = vmatprep.subr.mxu0 0.0
    %2906 = vmatpush1.xpose.msra.mxu0 0.0
    %2907 = vmatprep.subr.mxu0 0.0
    %2908 = vmatpush1.xpose.msra.mxu0 0.0
    %2909 = vmatprep.subr.mxu0 0.0
    %2910 = vmatpush1.xpose.msra.mxu0 0.0
    %2911 = vmatprep.subr.mxu0 0.0
    %2912 = vmatpush1.xpose.msra.mxu0 0.0
    %2913 = vmatprep.subr.mxu0 0.0
    %2914 = vmatpush1.xpose.msra.mxu0 0.0
    %2915 = vmatprep.subr.mxu0 0.0
    %2916 = vmatpush1.xpose.msra.mxu0 0.0
    %2917 = vmatprep.subr.mxu0 0.0
    %2918 = vmatpush1.xpose.msra.mxu0 0.0
    %2919 = vmatprep.subr.mxu0 0.0
    %2920 = vmatpush1.xpose.msra.mxu0 0.0
    %2921 = vmatprep.subr.mxu0 0.0
    %2922 = vmatpush1.xpose.msra.mxu0 0.0
    %2923 = vmatprep.subr.mxu0 0.0
    %2924 = vmatpush1.xpose.msra.mxu0 0.0
    %2925 = vmatprep.subr.mxu0 0.0
    %2926 = vmatpush1.xpose.msra.mxu0 0.0
    %2927 = vmatprep.subr.mxu0 0.0
    %2928 = vmatpush1.xpose.msra.mxu0 0.0
    %2929 = vmatprep.subr.mxu0 0.0
    %2930 = vmatpush1.xpose.msra.mxu0 0.0
    %2931 = vmatprep.subr.mxu0 0.0
    %2932 = vmatpush1.xpose.msra.mxu0 0.0
    %2933 = vmatprep.subr.mxu0 0.0
    %2934 = vmatpush1.xpose.msra.mxu0 0.0
    %2935 = vmatprep.subr.mxu0 0.0
    %2936 = vmatpush1.xpose.msra.mxu0 0.0
    %2937 = vmatprep.subr.mxu0 0.0
    %2938 = vmatpush1.xpose.msra.mxu0 0.0
    %2939 = vmatprep.subr.mxu0 0.0
    %2940 = vmatpush1.xpose.msra.mxu0 0.0
    %2941 = vmatprep.subr.mxu0 0.0
    %2942 = vmatpush1.xpose.msra.mxu0 0.0
    %2943 = vmatprep.subr.mxu0 0.0
    %2944 = vmatpush1.xpose.msra.mxu0 0.0
    %2945 = vmatprep.mubr.f32.mxu0 0.0
    %2946 = vmatmul.mubr.f32.gmra.mrb[0].mxu0 %v2877
    %v2947 = vpop.f32.mrb[0].mxu0
    %v2948 = vadd.f32 0.0, %v2947
    %v2949 = vpop.f32.mrb[0].mxu0
    %2950 = vdwg.mxu0
    %v2951 = vmul.f32 %v2948, 0.35355338
    %v2952 = vsel %vm1670, %v2951, -inf
    %2953 = vmax.xlane.f32.xlu0 %v2952
    %v2954 = vpop.xlane.xlu0 %2953
    %v2955 = vsub.f32 %v2951, %v2954
    %v2956 = vmul.f32 %v2955, 1.442695
    %v2957 = vpow.pop %v2956
    %v2958 = vsel %vm1670, %v2957, 0.0
    %2959 = vadd.xlane.f32.xlu0 %v2958
    %v2960 = vpop.xlane.xlu0 %2959
    %v2961 = vrcp.pop %v2960
    %v2962 = vmul.f32 %v2957, %v2961
    %2963 = vrot.lane.b32.xlu0 %v2705, 56
    %v2964 = vpop.permute.xlu0 %2963
    %v2967 = vsel %vm1670, %v2962, 0
    %2969 = vmatprep.subr.mxu0 0.0
    %2970 = vmatpush1.msra.mxu0 %v2964
    %2971 = vmatprep.subr.mxu0 0.0
    %2972 = vmatpush1.msra.mxu0 0.0
    %2973 = vmatprep.subr.mxu0 0.0
    %2974 = vmatpush1.msra.mxu0 0.0
    %2975 = vmatprep.subr.mxu0 0.0
    %2976 = vmatpush1.msra.mxu0 0.0
    %2977 = vmatprep.subr.mxu0 0.0
    %2978 = vmatpush1.msra.mxu0 0.0
    %2979 = vmatprep.subr.mxu0 0.0
    %2980 = vmatpush1.msra.mxu0 0.0
    %2981 = vmatprep.subr.mxu0 0.0
    %2982 = vmatpush1.msra.mxu0 0.0
    %2983 = vmatprep.subr.mxu0 0.0
    %2984 = vmatpush1.msra.mxu0 0.0
    %2985 = vmatprep.subr.mxu0 0.0
    %2986 = vmatpush1.msra.mxu0 0.0
    %2987 = vmatprep.subr.mxu0 0.0
    %2988 = vmatpush1.msra.mxu0 0.0
    %2989 = vmatprep.subr.mxu0 0.0
    %2990 = vmatpush1.msra.mxu0 0.0
    %2991 = vmatprep.subr.mxu0 0.0
    %2992 = vmatpush1.msra.mxu0 0.0
    %2993 = vmatprep.subr.mxu0 0.0
    %2994 = vmatpush1.msra.mxu0 0.0
    %2995 = vmatprep.subr.mxu0 0.0
    %2996 = vmatpush1.msra.mxu0 0.0
    %2997 = vmatprep.subr.mxu0 0.0
    %2998 = vmatpush1.msra.mxu0 0.0
    %2999 = vmatprep.subr.mxu0 0.0
    %3000 = vmatpush1.msra.mxu0 0.0
    %3001 = vmatprep.subr.mxu0 0.0
    %3002 = vmatpush1.msra.mxu0 0.0
    %3003 = vmatprep.subr.mxu0 0.0
    %3004 = vmatpush1.msra.mxu0 0.0
    %3005 = vmatprep.subr.mxu0 0.0
    %3006 = vmatpush1.msra.mxu0 0.0
    %3007 = vmatprep.subr.mxu0 0.0
    %3008 = vmatpush1.msra.mxu0 0.0
    %3009 = vmatprep.subr.mxu0 0.0
    %3010 = vmatpush1.msra.mxu0 0.0
    %3011 = vmatprep.subr.mxu0 0.0
    %3012 = vmatpush1.msra.mxu0 0.0
    %3013 = vmatprep.subr.mxu0 0.0
    %3014 = vmatpush1.msra.mxu0 0.0
    %3015 = vmatprep.subr.mxu0 0.0
    %3016 = vmatpush1.msra.mxu0 0.0
    %3017 = vmatprep.subr.mxu0 0.0
    %3018 = vmatpush1.msra.mxu0 0.0
    %3019 = vmatprep.subr.mxu0 0.0
    %3020 = vmatpush1.msra.mxu0 0.0
    %3021 = vmatprep.subr.mxu0 0.0
    %3022 = vmatpush1.msra.mxu0 0.0
    %3023 = vmatprep.subr.mxu0 0.0
    %3024 = vmatpush1.msra.mxu0 0.0
    %3025 = vmatprep.subr.mxu0 0.0
    %3026 = vmatpush1.msra.mxu0 0.0
    %3027 = vmatprep.subr.mxu0 0.0
    %3028 = vmatpush1.msra.mxu0 0.0
    %3029 = vmatprep.subr.mxu0 0.0
    %3030 = vmatpush1.msra.mxu0 0.0
    %3031 = vmatprep.subr.mxu0 0.0
    %3032 = vmatpush1.msra.mxu0 0.0
    %3033 = vmatprep.mubr.f32.mxu0 0.0
    %3034 = vmatmul.mubr.f32.gmra.mrb[0].mxu0 %v2967
    %v3035 = vpop.f32.mrb[0].mxu0
    %v3036 = vadd.f32 0.0, %v3035
    %v3037 = vpop.f32.mrb[0].mxu0
    %3038 = vdwg.mxu0
    %3039 = vrot.lane.b32.xlu0 %v2705, 112
    %v3040 = vpop.permute.xlu0 %3039
    %3041 = vrot.lane.b32.xlu0 %v2705, 80
    %v3042 = vpop.permute.xlu0 %3041
    %v3043 = vsel %vm1670, %v3040, 0
    %v3045 = vsel %vm1670, %v3042, 0
    %3047 = vmatprep.subr.mxu0 0.0
    %3048 = vmatpush1.xpose.msra.mxu0 %v3045
    %3049 = vmatprep.subr.mxu0 0.0
    %3050 = vmatpush1.xpose.msra.mxu0 0.0
    %3051 = vmatprep.subr.mxu0 0.0
    %3052 = vmatpush1.xpose.msra.mxu0 0.0
    %3053 = vmatprep.subr.mxu0 0.0
    %3054 = vmatpush1.xpose.msra.mxu0 0.0
    %3055 = vmatprep.subr.mxu0 0.0
    %3056 = vmatpush1.xpose.msra.mxu0 0.0
    %3057 = vmatprep.subr.mxu0 0.0
    %3058 = vmatpush1.xpose.msra.mxu0 0.0
    %3059 = vmatprep.subr.mxu0 0.0
    %3060 = vmatpush1.xpose.msra.mxu0 0.0
    %3061 = vmatprep.subr.mxu0 0.0
    %3062 = vmatpush1.xpose.msra.mxu0 0.0
    %3063 = vmatprep.subr.mxu0 0.0
    %3064 = vmatpush1.xpose.msra.mxu0 0.0
    %3065 = vmatprep.subr.mxu0 0.0
    %3066 = vmatpush1.xpose.msra.mxu0 0.0
    %3067 = vmatprep.subr.mxu0 0.0
    %3068 = vmatpush1.xpose.msra.mxu0 0.0
    %3069 = vmatprep.subr.mxu0 0.0
    %3070 = vmatpush1.xpose.msra.mxu0 0.0
    %3071 = vmatprep.subr.mxu0 0.0
    %3072 = vmatpush1.xpose.msra.mxu0 0.0
    %3073 = vmatprep.subr.mxu0 0.0
    %3074 = vmatpush1.xpose.msra.mxu0 0.0
    %3075 = vmatprep.subr.mxu0 0.0
    %3076 = vmatpush1.xpose.msra.mxu0 0.0
    %3077 = vmatprep.subr.mxu0 0.0
    %3078 = vmatpush1.xpose.msra.mxu0 0.0
    %3079 = vmatprep.subr.mxu0 0.0
    %3080 = vmatpush1.xpose.msra.mxu0 0.0
    %3081 = vmatprep.subr.mxu0 0.0
    %3082 = vmatpush1.xpose.msra.mxu0 0.0
    %3083 = vmatprep.subr.mxu0 0.0
    %3084 = vmatpush1.xpose.msra.mxu0 0.0
    %3085 = vmatprep.subr.mxu0 0.0
    %3086 = vmatpush1.xpose.msra.mxu0 0.0
    %3087 = vmatprep.subr.mxu0 0.0
    %3088 = vmatpush1.xpose.msra.mxu0 0.0
    %3089 = vmatprep.subr.mxu0 0.0
    %3090 = vmatpush1.xpose.msra.mxu0 0.0
    %3091 = vmatprep.subr.mxu0 0.0
    %3092 = vmatpush1.xpose.msra.mxu0 0.0
    %3093 = vmatprep.subr.mxu0 0.0
    %3094 = vmatpush1.xpose.msra.mxu0 0.0
    %3095 = vmatprep.subr.mxu0 0.0
    %3096 = vmatpush1.xpose.msra.mxu0 0.0
    %3097 = vmatprep.subr.mxu0 0.0
    %3098 = vmatpush1.xpose.msra.mxu0 0.0
    %3099 = vmatprep.subr.mxu0 0.0
    %3100 = vmatpush1.xpose.msra.mxu0 0.0
    %3101 = vmatprep.subr.mxu0 0.0
    %3102 = vmatpush1.xpose.msra.mxu0 0.0
    %3103 = vmatprep.subr.mxu0 0.0
    %3104 = vmatpush1.xpose.msra.mxu0 0.0
    %3105 = vmatprep.subr.mxu0 0.0
    %3106 = vmatpush1.xpose.msra.mxu0 0.0
    %3107 = vmatprep.subr.mxu0 0.0
    %3108 = vmatpush1.xpose.msra.mxu0 0.0
    %3109 = vmatprep.subr.mxu0 0.0
    %3110 = vmatpush1.xpose.msra.mxu0 0.0
    %3111 = vmatprep.mubr.f32.mxu0 0.0
    %3112 = vmatmul.mubr.f32.gmra.mrb[0].mxu0 %v3043
    %v3113 = vpop.f32.mrb[0].mxu0
    %v3114 = vadd.f32 0.0, %v3113
    %v3115 = vpop.f32.mrb[0].mxu0
    %3116 = vdwg.mxu0
    %v3117 = vmul.f32 %v3114, 0.35355338
    %v3118 = vsel %vm1670, %v3117, -inf
    %3119 = vmax.xlane.f32.xlu0 %v3118
    %v3120 = vpop.xlane.xlu0 %3119
    %v3121 = vsub.f32 %v3117, %v3120
    %v3122 = vmul.f32 %v3121, 1.442695
    %v3123 = vpow.pop %v3122
    %v3124 = vsel %vm1670, %v3123, 0.0
    %3125 = vadd.xlane.f32.xlu0 %v3124
    %v3126 = vpop.xlane.xlu0 %3125
    %v3127 = vrcp.pop %v3126
    %v3128 = vmul.f32 %v3123, %v3127
    %3129 = vrot.lane.b32.xlu0 %v2705, 48
    %v3130 = vpop.permute.xlu0 %3129
    %v3133 = vsel %vm1670, %v3128, 0
    %3135 = vmatprep.subr.mxu0 0.0
    %3136 = vmatpush1.msra.mxu0 %v3130
    %3137 = vmatprep.subr.mxu0 0.0
    %3138 = vmatpush1.msra.mxu0 0.0
    %3139 = vmatprep.subr.mxu0 0.0
    %3140 = vmatpush1.msra.mxu0 0.0
    %3141 = vmatprep.subr.mxu0 0.0
    %3142 = vmatpush1.msra.mxu0 0.0
    %3143 = vmatprep.subr.mxu0 0.0
    %3144 = vmatpush1.msra.mxu0 0.0
    %3145 = vmatprep.subr.mxu0 0.0
    %3146 = vmatpush1.msra.mxu0 0.0
    %3147 = vmatprep.subr.mxu0 0.0
    %3148 = vmatpush1.msra.mxu0 0.0
    %3149 = vmatprep.subr.mxu0 0.0
    %3150 = vmatpush1.msra.mxu0 0.0
    %3151 = vmatprep.subr.mxu0 0.0
    %3152 = vmatpush1.msra.mxu0 0.0
    %3153 = vmatprep.subr.mxu0 0.0
    %3154 = vmatpush1.msra.mxu0 0.0
    %3155 = vmatprep.subr.mxu0 0.0
    %3156 = vmatpush1.msra.mxu0 0.0
    %3157 = vmatprep.subr.mxu0 0.0
    %3158 = vmatpush1.msra.mxu0 0.0
    %3159 = vmatprep.subr.mxu0 0.0
    %3160 = vmatpush1.msra.mxu0 0.0
    %3161 = vmatprep.subr.mxu0 0.0
    %3162 = vmatpush1.msra.mxu0 0.0
    %3163 = vmatprep.subr.mxu0 0.0
    %3164 = vmatpush1.msra.mxu0 0.0
    %3165 = vmatprep.subr.mxu0 0.0
    %3166 = vmatpush1.msra.mxu0 0.0
    %3167 = vmatprep.subr.mxu0 0.0
    %3168 = vmatpush1.msra.mxu0 0.0
    %3169 = vmatprep.subr.mxu0 0.0
    %3170 = vmatpush1.msra.mxu0 0.0
    %3171 = vmatprep.subr.mxu0 0.0
    %3172 = vmatpush1.msra.mxu0 0.0
    %3173 = vmatprep.subr.mxu0 0.0
    %3174 = vmatpush1.msra.mxu0 0.0
    %3175 = vmatprep.subr.mxu0 0.0
    %3176 = vmatpush1.msra.mxu0 0.0
    %3177 = vmatprep.subr.mxu0 0.0
    %3178 = vmatpush1.msra.mxu0 0.0
    %3179 = vmatprep.subr.mxu0 0.0
    %3180 = vmatpush1.msra.mxu0 0.0
    %3181 = vmatprep.subr.mxu0 0.0
    %3182 = vmatpush1.msra.mxu0 0.0
    %3183 = vmatprep.subr.mxu0 0.0
    %3184 = vmatpush1.msra.mxu0 0.0
    %3185 = vmatprep.subr.mxu0 0.0
    %3186 = vmatpush1.msra.mxu0 0.0
    %3187 = vmatprep.subr.mxu0 0.0
    %3188 = vmatpush1.msra.mxu0 0.0
    %3189 = vmatprep.subr.mxu0 0.0
    %3190 = vmatpush1.msra.mxu0 0.0
    %3191 = vmatprep.subr.mxu0 0.0
    %3192 = vmatpush1.msra.mxu0 0.0
    %3193 = vmatprep.subr.mxu0 0.0
    %3194 = vmatpush1.msra.mxu0 0.0
    %3195 = vmatprep.subr.mxu0 0.0
    %3196 = vmatpush1.msra.mxu0 0.0
    %3197 = vmatprep.subr.mxu0 0.0
    %3198 = vmatpush1.msra.mxu0 0.0
    %3199 = vmatprep.mubr.f32.mxu0 0.0
    %3200 = vmatmul.mubr.f32.gmra.mrb[0].mxu0 %v3133
    %v3201 = vpop.f32.mrb[0].mxu0
    %v3202 = vadd.f32 0.0, %v3201
    %v3203 = vpop.f32.mrb[0].mxu0
    %3204 = vdwg.mxu0
    %3205 = vrot.lane.b32.xlu0 %v2705, 104
    %v3206 = vpop.permute.xlu0 %3205
    %3207 = vrot.lane.b32.xlu0 %v2705, 72
    %v3208 = vpop.permute.xlu0 %3207
    %v3209 = vsel %vm1670, %v3206, 0
    %v3211 = vsel %vm1670, %v3208, 0
    %3213 = vmatprep.subr.mxu0 0.0
    %3214 = vmatpush1.xpose.msra.mxu0 %v3211
    %3215 = vmatprep.subr.mxu0 0.0
    %3216 = vmatpush1.xpose.msra.mxu0 0.0
    %3217 = vmatprep.subr.mxu0 0.0
    %3218 = vmatpush1.xpose.msra.mxu0 0.0
    %3219 = vmatprep.subr.mxu0 0.0
    %3220 = vmatpush1.xpose.msra.mxu0 0.0
    %3221 = vmatprep.subr.mxu0 0.0
    %3222 = vmatpush1.xpose.msra.mxu0 0.0
    %3223 = vmatprep.subr.mxu0 0.0
    %3224 = vmatpush1.xpose.msra.mxu0 0.0
    %3225 = vmatprep.subr.mxu0 0.0
    %3226 = vmatpush1.xpose.msra.mxu0 0.0
    %3227 = vmatprep.subr.mxu0 0.0
    %3228 = vmatpush1.xpose.msra.mxu0 0.0
    %3229 = vmatprep.subr.mxu0 0.0
    %3230 = vmatpush1.xpose.msra.mxu0 0.0
    %3231 = vmatprep.subr.mxu0 0.0
    %3232 = vmatpush1.xpose.msra.mxu0 0.0
    %3233 = vmatprep.subr.mxu0 0.0
    %3234 = vmatpush1.xpose.msra.mxu0 0.0
    %3235 = vmatprep.subr.mxu0 0.0
    %3236 = vmatpush1.xpose.msra.mxu0 0.0
    %3237 = vmatprep.subr.mxu0 0.0
    %3238 = vmatpush1.xpose.msra.mxu0 0.0
    %3239 = vmatprep.subr.mxu0 0.0
    %3240 = vmatpush1.xpose.msra.mxu0 0.0
    %3241 = vmatprep.subr.mxu0 0.0
    %3242 = vmatpush1.xpose.msra.mxu0 0.0
    %3243 = vmatprep.subr.mxu0 0.0
    %3244 = vmatpush1.xpose.msra.mxu0 0.0
    %3245 = vmatprep.subr.mxu0 0.0
    %3246 = vmatpush1.xpose.msra.mxu0 0.0
    %3247 = vmatprep.subr.mxu0 0.0
    %3248 = vmatpush1.xpose.msra.mxu0 0.0
    %3249 = vmatprep.subr.mxu0 0.0
    %3250 = vmatpush1.xpose.msra.mxu0 0.0
    %3251 = vmatprep.subr.mxu0 0.0
    %3252 = vmatpush1.xpose.msra.mxu0 0.0
    %3253 = vmatprep.subr.mxu0 0.0
    %3254 = vmatpush1.xpose.msra.mxu0 0.0
    %3255 = vmatprep.subr.mxu0 0.0
    %3256 = vmatpush1.xpose.msra.mxu0 0.0
    %3257 = vmatprep.subr.mxu0 0.0
    %3258 = vmatpush1.xpose.msra.mxu0 0.0
    %3259 = vmatprep.subr.mxu0 0.0
    %3260 = vmatpush1.xpose.msra.mxu0 0.0
    %3261 = vmatprep.subr.mxu0 0.0
    %3262 = vmatpush1.xpose.msra.mxu0 0.0
    %3263 = vmatprep.subr.mxu0 0.0
    %3264 = vmatpush1.xpose.msra.mxu0 0.0
    %3265 = vmatprep.subr.mxu0 0.0
    %3266 = vmatpush1.xpose.msra.mxu0 0.0
    %3267 = vmatprep.subr.mxu0 0.0
    %3268 = vmatpush1.xpose.msra.mxu0 0.0
    %3269 = vmatprep.subr.mxu0 0.0
    %3270 = vmatpush1.xpose.msra.mxu0 0.0
    %3271 = vmatprep.subr.mxu0 0.0
    %3272 = vmatpush1.xpose.msra.mxu0 0.0
    %3273 = vmatprep.subr.mxu0 0.0
    %3274 = vmatpush1.xpose.msra.mxu0 0.0
    %3275 = vmatprep.subr.mxu0 0.0
    %3276 = vmatpush1.xpose.msra.mxu0 0.0
    %3277 = vmatprep.mubr.f32.mxu0 0.0
    %3278 = vmatmul.mubr.f32.gmra.mrb[0].mxu0 %v3209
    %v3279 = vpop.f32.mrb[0].mxu0
    %v3280 = vadd.f32 0.0, %v3279
    %v3281 = vpop.f32.mrb[0].mxu0
    %3282 = vdwg.mxu0
    %v3283 = vmul.f32 %v3280, 0.35355338
    %v3284 = vsel %vm1670, %v3283, -inf
    %3285 = vmax.xlane.f32.xlu0 %v3284
    %v3286 = vpop.xlane.xlu0 %3285
    %v3287 = vsub.f32 %v3283, %v3286
    %v3288 = vmul.f32 %v3287, 1.442695
    %v3289 = vpow.pop %v3288
    %v3290 = vsel %vm1670, %v3289, 0.0
    %3291 = vadd.xlane.f32.xlu0 %v3290
    %v3292 = vpop.xlane.xlu0 %3291
    %v3293 = vrcp.pop %v3292
    %v3294 = vmul.f32 %v3289, %v3293
    %3295 = vrot.lane.b32.xlu0 %v2705, 40
    %v3296 = vpop.permute.xlu0 %3295
    %v3299 = vsel %vm1670, %v3294, 0
    %3301 = vmatprep.subr.mxu0 0.0
    %3302 = vmatpush1.msra.mxu0 %v3296
    %3303 = vmatprep.subr.mxu0 0.0
    %3304 = vmatpush1.msra.mxu0 0.0
    %3305 = vmatprep.subr.mxu0 0.0
    %3306 = vmatpush1.msra.mxu0 0.0
    %3307 = vmatprep.subr.mxu0 0.0
    %3308 = vmatpush1.msra.mxu0 0.0
    %3309 = vmatprep.subr.mxu0 0.0
    %3310 = vmatpush1.msra.mxu0 0.0
    %3311 = vmatprep.subr.mxu0 0.0
    %3312 = vmatpush1.msra.mxu0 0.0
    %3313 = vmatprep.subr.mxu0 0.0
    %3314 = vmatpush1.msra.mxu0 0.0
    %3315 = vmatprep.subr.mxu0 0.0
    %3316 = vmatpush1.msra.mxu0 0.0
    %3317 = vmatprep.subr.mxu0 0.0
    %3318 = vmatpush1.msra.mxu0 0.0
    %3319 = vmatprep.subr.mxu0 0.0
    %3320 = vmatpush1.msra.mxu0 0.0
    %3321 = vmatprep.subr.mxu0 0.0
    %3322 = vmatpush1.msra.mxu0 0.0
    %3323 = vmatprep.subr.mxu0 0.0
    %3324 = vmatpush1.msra.mxu0 0.0
    %3325 = vmatprep.subr.mxu0 0.0
    %3326 = vmatpush1.msra.mxu0 0.0
    %3327 = vmatprep.subr.mxu0 0.0
    %3328 = vmatpush1.msra.mxu0 0.0
    %3329 = vmatprep.subr.mxu0 0.0
    %3330 = vmatpush1.msra.mxu0 0.0
    %3331 = vmatprep.subr.mxu0 0.0
    %3332 = vmatpush1.msra.mxu0 0.0
    %3333 = vmatprep.subr.mxu0 0.0
    %3334 = vmatpush1.msra.mxu0 0.0
    %3335 = vmatprep.subr.mxu0 0.0
    %3336 = vmatpush1.msra.mxu0 0.0
    %3337 = vmatprep.subr.mxu0 0.0
    %3338 = vmatpush1.msra.mxu0 0.0
    %3339 = vmatprep.subr.mxu0 0.0
    %3340 = vmatpush1.msra.mxu0 0.0
    %3341 = vmatprep.subr.mxu0 0.0
    %3342 = vmatpush1.msra.mxu0 0.0
    %3343 = vmatprep.subr.mxu0 0.0
    %3344 = vmatpush1.msra.mxu0 0.0
    %3345 = vmatprep.subr.mxu0 0.0
    %3346 = vmatpush1.msra.mxu0 0.0
    %3347 = vmatprep.subr.mxu0 0.0
    %3348 = vmatpush1.msra.mxu0 0.0
    %3349 = vmatprep.subr.mxu0 0.0
    %3350 = vmatpush1.msra.mxu0 0.0
    %3351 = vmatprep.subr.mxu0 0.0
    %3352 = vmatpush1.msra.mxu0 0.0
    %3353 = vmatprep.subr.mxu0 0.0
    %3354 = vmatpush1.msra.mxu0 0.0
    %3355 = vmatprep.subr.mxu0 0.0
    %3356 = vmatpush1.msra.mxu0 0.0
    %3357 = vmatprep.subr.mxu0 0.0
    %3358 = vmatpush1.msra.mxu0 0.0
    %3359 = vmatprep.subr.mxu0 0.0
    %3360 = vmatpush1.msra.mxu0 0.0
    %3361 = vmatprep.subr.mxu0 0.0
    %3362 = vmatpush1.msra.mxu0 0.0
    %3363 = vmatprep.subr.mxu0 0.0
    %3364 = vmatpush1.msra.mxu0 0.0
    %3365 = vmatprep.mubr.f32.mxu0 0.0
    %3366 = vmatmul.mubr.f32.gmra.mrb[0].mxu0 %v3299
    %v3367 = vpop.f32.mrb[0].mxu0
    %v3368 = vadd.f32 0.0, %v3367
    %v3369 = vpop.f32.mrb[0].mxu0
    %3370 = vdwg.mxu0
    %3372 = vrot.lane.b32.xlu0 %v3036, 8
    %v3373 = vpop.permute.xlu0 %3372
    %3376 = vrot.lane.b32.xlu0 %v3202, 16
    %v3377 = vpop.permute.xlu0 %3376
    %3380 = vrot.lane.b32.xlu0 %v3368, 24
    %v3381 = vpop.permute.xlu0 %3380
    %v3383 = vsel %vm1670, %v2870, %v3373
    %v3384 = vsel %vm245, %v3383, %v3377
    %v3385 = vsel %vm2345, %v3384, %v3381
    %3390 = vrot.lane.b32.xlu0 %v2625, 32
    %v3391 = vpop.permute.xlu0 %3390
    %3392 = vrot.lane.b32.xlu0 %v2626, 32
    %v3393 = vpop.permute.xlu0 %3392
    %3394 = vrot.lane.b32.xlu0 %v2627, 32
    %v3395 = vpop.permute.xlu0 %3394
    %3396 = vrot.lane.b32.xlu0 %v2628, 32
    %v3397 = vpop.permute.xlu0 %3396
    %3403 = vrot.lane.b32.xlu0 %v2634, 32
    %v3404 = vpop.permute.xlu0 %3403
    %v3407 = vsel %vm1593, %v3385, 0
    %3409 = vmatprep.subr.mxu0 0.0
    %3410 = vmatpush1.msra.mxu0 %v3391
    %3411 = vmatprep.subr.mxu0 0.0
    %3412 = vmatpush1.msra.mxu0 %v3393
    %3413 = vmatprep.subr.mxu0 0.0
    %3414 = vmatpush1.msra.mxu0 %v3395
    %3415 = vmatprep.subr.mxu0 0.0
    %3416 = vmatpush1.msra.mxu0 %v3397
    %3417 = vmatprep.subr.mxu0 0.0
    %3418 = vmatpush1.msra.mxu0 0.0
    %3419 = vmatprep.subr.mxu0 0.0
    %3420 = vmatpush1.msra.mxu0 0.0
    %3421 = vmatprep.subr.mxu0 0.0
    %3422 = vmatpush1.msra.mxu0 0.0
    %3423 = vmatprep.subr.mxu0 0.0
    %3424 = vmatpush1.msra.mxu0 0.0
    %3425 = vmatprep.subr.mxu0 0.0
    %3426 = vmatpush1.msra.mxu0 0.0
    %3427 = vmatprep.subr.mxu0 0.0
    %3428 = vmatpush1.msra.mxu0 0.0
    %3429 = vmatprep.subr.mxu0 0.0
    %3430 = vmatpush1.msra.mxu0 0.0
    %3431 = vmatprep.subr.mxu0 0.0
    %3432 = vmatpush1.msra.mxu0 0.0
    %3433 = vmatprep.subr.mxu0 0.0
    %3434 = vmatpush1.msra.mxu0 0.0
    %3435 = vmatprep.subr.mxu0 0.0
    %3436 = vmatpush1.msra.mxu0 0.0
    %3437 = vmatprep.subr.mxu0 0.0
    %3438 = vmatpush1.msra.mxu0 0.0
    %3439 = vmatprep.subr.mxu0 0.0
    %3440 = vmatpush1.msra.mxu0 0.0
    %3441 = vmatprep.subr.mxu0 0.0
    %3442 = vmatpush1.msra.mxu0 0.0
    %3443 = vmatprep.subr.mxu0 0.0
    %3444 = vmatpush1.msra.mxu0 0.0
    %3445 = vmatprep.subr.mxu0 0.0
    %3446 = vmatpush1.msra.mxu0 0.0
    %3447 = vmatprep.subr.mxu0 0.0
    %3448 = vmatpush1.msra.mxu0 0.0
    %3449 = vmatprep.subr.mxu0 0.0
    %3450 = vmatpush1.msra.mxu0 0.0
    %3451 = vmatprep.subr.mxu0 0.0
    %3452 = vmatpush1.msra.mxu0 0.0
    %3453 = vmatprep.subr.mxu0 0.0
    %3454 = vmatpush1.msra.mxu0 0.0
    %3455 = vmatprep.subr.mxu0 0.0
    %3456 = vmatpush1.msra.mxu0 0.0
    %3457 = vmatprep.subr.mxu0 0.0
    %3458 = vmatpush1.msra.mxu0 0.0
    %3459 = vmatprep.subr.mxu0 0.0
    %3460 = vmatpush1.msra.mxu0 0.0
    %3461 = vmatprep.subr.mxu0 0.0
    %3462 = vmatpush1.msra.mxu0 0.0
    %3463 = vmatprep.subr.mxu0 0.0
    %3464 = vmatpush1.msra.mxu0 0.0
    %3465 = vmatprep.subr.mxu0 0.0
    %3466 = vmatpush1.msra.mxu0 0.0
    %3467 = vmatprep.subr.mxu0 0.0
    %3468 = vmatpush1.msra.mxu0 0.0
    %3469 = vmatprep.subr.mxu0 0.0
    %3470 = vmatpush1.msra.mxu0 0.0
    %3471 = vmatprep.subr.mxu0 0.0
    %3472 = vmatpush1.msra.mxu0 0.0
    %3473 = vmatprep.mubr.f32.mxu0 0.0
    %3474 = vmatmul.mubr.f32.gmra.mrb[0].mxu0 %v3407
    %v3475 = vpop.f32.mrb[0].mxu0
    %v3476 = vadd.f32 %v3404, %v3475
    %v3477 = vpop.f32.mrb[0].mxu0
    %3478 = vdwg.mxu0
    %v3479 = vadd.f32 %v2630, %v3476
    %v3480 = vld [vmem:[#allocation19] sm:$0x1]
    %v3481 = vld [vmem:[#allocation20] sm:$0x1]
    %v3482 = vsel %vm1593, %v2440, 0.0
    %3483 = vadd.xlane.f32.xlu0 %v3482
    %v3484 = vpop.xlane.xlu0 %3483
    %v3485 = vsel %vm1593, %v3479, 0.0
    %3486 = vadd.xlane.f32.xlu0 %v3485
    %v3487 = vpop.xlane.xlu0 %3486
    %v3488 = vrcp.pop 32.0
    %v3489 = vmul.f32 %v3484, %v3488
    %v3490 = vmul.f32 %v3487, %v3488
    %v3491 = vsub.f32 %v2440, %v3489
    %v3492 = vsub.f32 %v3479, %v3490
    %v3493 = vmul.f32 %v3491, %v3491
    %v3494 = vmul.f32 %v3492, %v3492
    %v3495 = vsel %vm1593, %v3493, 0.0
    %3496 = vadd.xlane.f32.xlu0 %v3495
    %v3497 = vpop.xlane.xlu0 %3496
    %v3498 = vsel %vm1593, %v3494, 0.0
    %3499 = vadd.xlane.f32.xlu0 %v3498
    %v3500 = vpop.xlane.xlu0 %3499
    %v3501 = vmul.f32 %v3497, %v3488
    %v3502 = vmul.f32 %v3500, %v3488
    %v3503 = vadd.f32 %v3501, 1e-05
    %v3504 = vadd.f32 %v3502, 1e-05
    %v3505 = vrsqrt.pop %v3503
    %v3506 = vrsqrt.pop %v3504
    %v3507 = vmul.f32 %v3491, %v3505
    %v3508 = vmul.f32 %v3492, %v3506
    %v3510 = vlaneseq
    %v3511 = vshrl.u32 %v3510, 7
    %v3512 = vsub.s32 0, %v3511
    %v3513 = vrot.slane %v3480, %v3512
    %v3515 = vmul.f32 %v3507, %v3513
    %v3516 = vmul.f32 %v3508, %v3513
    %v3518 = vlaneseq
    %v3519 = vshrl.u32 %v3518, 7
    %v3520 = vsub.s32 0, %v3519
    %v3521 = vrot.slane %v3481, %v3520
    %v3523 = vadd.f32 %v3515, %v3521
    %v3524 = vadd.f32 %v3516, %v3521
    %v3525 = vld [vmem:[#allocation14] sm:$0xff]
    %v3526 = vld [vmem:[#allocation14 + $0x8] sm:$0xff]
    %v3527 = vld [vmem:[#allocation14 + $0x10] sm:$0xff]
    %v3528 = vld [vmem:[#allocation14 + $0x18] sm:$0xff]
    %v3529 = vld [vmem:[#allocation16] sm:$0x1]
    %v3531 = vlaneseq
    %v3532 = vshrl.u32 %v3531, 7
    %v3533 = vsub.s32 0, %v3532
    %v3534 = vrot.slane %v3529, %v3533
    %v3537 = vsel %vm1593, %v3523, 0
    %v3540 = vsel %vm1593, %v3524, 0
    %3542 = vmatprep.subr.mxu0 0.0
    %3543 = vmatpush1.msra.mxu0 %v3525
    %3544 = vmatprep.subr.mxu0 0.0
    %3545 = vmatpush1.msra.mxu0 %v3526
    %3546 = vmatprep.subr.mxu0 0.0
    %3547 = vmatpush1.msra.mxu0 %v3527
    %3548 = vmatprep.subr.mxu0 0.0
    %3549 = vmatpush1.msra.mxu0 %v3528
    %3550 = vmatprep.subr.mxu0 0.0
    %3551 = vmatpush1.msra.mxu0 0.0
    %3552 = vmatprep.subr.mxu0 0.0
    %3553 = vmatpush1.msra.mxu0 0.0
    %3554 = vmatprep.subr.mxu0 0.0
    %3555 = vmatpush1.msra.mxu0 0.0
    %3556 = vmatprep.subr.mxu0 0.0
    %3557 = vmatpush1.msra.mxu0 0.0
    %3558 = vmatprep.subr.mxu0 0.0
    %3559 = vmatpush1.msra.mxu0 0.0
    %3560 = vmatprep.subr.mxu0 0.0
    %3561 = vmatpush1.msra.mxu0 0.0
    %3562 = vmatprep.subr.mxu0 0.0
    %3563 = vmatpush1.msra.mxu0 0.0
    %3564 = vmatprep.subr.mxu0 0.0
    %3565 = vmatpush1.msra.mxu0 0.0
    %3566 = vmatprep.subr.mxu0 0.0
    %3567 = vmatpush1.msra.mxu0 0.0
    %3568 = vmatprep.subr.mxu0 0.0
    %3569 = vmatpush1.msra.mxu0 0.0
    %3570 = vmatprep.subr.mxu0 0.0
    %3571 = vmatpush1.msra.mxu0 0.0
    %3572 = vmatprep.subr.mxu0 0.0
    %3573 = vmatpush1.msra.mxu0 0.0
    %3574 = vmatprep.subr.mxu0 0.0
    %3575 = vmatpush1.msra.mxu0 0.0
    %3576 = vmatprep.subr.mxu0 0.0
    %3577 = vmatpush1.msra.mxu0 0.0
    %3578 = vmatprep.subr.mxu0 0.0
    %3579 = vmatpush1.msra.mxu0 0.0
    %3580 = vmatprep.subr.mxu0 0.0
    %3581 = vmatpush1.msra.mxu0 0.0
    %3582 = vmatprep.subr.mxu0 0.0
    %3583 = vmatpush1.msra.mxu0 0.0
    %3584 = vmatprep.subr.mxu0 0.0
    %3585 = vmatpush1.msra.mxu0 0.0
    %3586 = vmatprep.subr.mxu0 0.0
    %3587 = vmatpush1.msra.mxu0 0.0
    %3588 = vmatprep.subr.mxu0 0.0
    %3589 = vmatpush1.msra.mxu0 0.0
    %3590 = vmatprep.subr.mxu0 0.0
    %3591 = vmatpush1.msra.mxu0 0.0
    %3592 = vmatprep.subr.mxu0 0.0
    %3593 = vmatpush1.msra.mxu0 0.0
    %3594 = vmatprep.subr.mxu0 0.0
    %3595 = vmatpush1.msra.mxu0 0.0
    %3596 = vmatprep.subr.mxu0 0.0
    %3597 = vmatpush1.msra.mxu0 0.0
    %3598 = vmatprep.subr.mxu0 0.0
    %3599 = vmatpush1.msra.mxu0 0.0
    %3600 = vmatprep.subr.mxu0 0.0
    %3601 = vmatpush1.msra.mxu0 0.0
    %3602 = vmatprep.subr.mxu0 0.0
    %3603 = vmatpush1.msra.mxu0 0.0
    %3604 = vmatprep.subr.mxu0 0.0
    %3605 = vmatpush1.msra.mxu0 0.0
    %3606 = vmatprep.mubr.f32.mxu0 0.0
    %3607 = vmatmul.mubr.f32.gmra.mrb[0].mxu0 %v3537
    %v3608 = vpop.f32.mrb[0].mxu0
    %v3609 = vadd.f32 %v3534, %v3608
    %v3610 = vpop.f32.mrb[0].mxu0
    %3611 = vmatprep.mubr.f32.mxu0 0.0
    %3612 = vmatmul.mubr.f32.gmra.mrb[0].mxu0 %v3540
    %v3613 = vpop.f32.mrb[0].mxu0
    %v3614 = vadd.f32 %v3534, %v3613
    %v3615 = vpop.f32.mrb[0].mxu0
    %3616 = vdwg.mxu0
    %v3617 = vmul.f32 %v3609, 0.5
    %v3618 = vmul.f32 %v3614, 0.5
    %v3619 = vmul.f32 %v3609, 0.70710677
    %v3620 = vmul.f32 %v3614, 0.70710677
    %v3621 = vand.u32 2147483647, %v3619
    %v3622 = vand.u32 2147483647, %v3620
    %v3623 = vmul.f32 %v3621, 0.3275911
    %v3624 = vmul.f32 %v3622, 0.3275911
    %v3625 = vadd.f32 %v3623, 1.0
    %v3626 = vadd.f32 %v3624, 1.0
    %v3627 = vrcp.pop %v3625
    %v3628 = vmul.f32 1.0, %v3627
    %v3629 = vrcp.pop %v3626
    %v3630 = vmul.f32 1.0, %v3629
    %v3631 = vmul.f32 %v3628, 1.0614054
    %v3632 = vmul.f32 %v3630, 1.0614054
    %v3633 = vadd.f32 %v3631, -1.4531521
    %v3634 = vadd.f32 %v3632, -1.4531521
    %v3635 = vmul.f32 %v3633, %v3628
    %v3636 = vmul.f32 %v3634, %v3630
    %v3637 = vadd.f32 %v3635, 1.4214138
    %v3638 = vadd.f32 %v3636, 1.4214138
    %v3639 = vmul.f32 %v3637, %v3628
    %v3640 = vmul.f32 %v3638, %v3630
    %v3641 = vadd.f32 %v3639, -0.28449672
    %v3642 = vadd.f32 %v3640, -0.28449672
    %v3643 = vmul.f32 %v3641, %v3628
    %v3644 = vmul.f32 %v3642, %v3630
    %v3645 = vadd.f32 %v3643, 0.2548296
    %v3646 = vadd.f32 %v3644, 0.2548296
    %v3647 = vmul.f32 %v3645, %v3628
    %v3648 = vmul.f32 %v3646, %v3630
    %v3649 = vsub.f32 0.0, %v3621
    %v3650 = vsub.f32 0.0, %v3622
    %v3651 = vmul.f32 %v3649, %v3621
    %v3652 = vmul.f32 %v3650, %v3622
    %v3653 = vmul.f32 %v3651, 1.442695
    %v3654 = vpow.pop %v3653
    %v3655 = vmul.f32 %v3652, 1.442695
    %v3656 = vpow.pop %v3655
    %v3657 = vmul.f32 %v3647, %v3654
    %v3658 = vmul.f32 %v3648, %v3656
    %v3659 = vsub.f32 1.0, %v3657
    %v3660 = vsub.f32 1.0, %v3658
    %vm3661 = vcmp.ge.f32.partialorder %v3619, 0.0
    %vm3662 = vcmp.ge.f32.partialorder %v3620, 0.0
    %v3663 = vsub.f32 0.0, %v3659
    %v3664 = vsub.f32 0.0, %v3660
    %v3665 = vsel %vm3661, %v3659, %v3663
    %v3666 = vsel %vm3662, %v3660, %v3664
    %v3667 = vadd.f32 %v3665, 1.0
    %v3668 = vadd.f32 %v3666, 1.0
    %v3669 = vmul.f32 %v3617, %v3667
    %v3670 = vmul.f32 %v3618, %v3668
    %v3671 = vld [vmem:[%s9] sm:$0xff]
    %v3672 = vld [vmem:[%s9 + $0x8] sm:$0xff]
    %v3673 = vld [vmem:[%s9 + $0x10] sm:$0xff]
    %v3674 = vld [vmem:[%s9 + $0x18] sm:$0xff]
    %v3675 = vld [vmem:[%s9 + $0x20] sm:$0xff]
    %v3676 = vld [vmem:[%s9 + $0x28] sm:$0xff]
    %v3677 = vld [vmem:[%s9 + $0x30] sm:$0xff]
    %v3678 = vld [vmem:[%s9 + $0x38] sm:$0xff]
    %v3679 = vld [vmem:[%s9 + $0x40] sm:$0xff]
    %v3680 = vld [vmem:[%s9 + $0x48] sm:$0xff]
    %v3681 = vld [vmem:[%s9 + $0x50] sm:$0xff]
    %v3682 = vld [vmem:[%s9 + $0x58] sm:$0xff]
    %v3683 = vld [vmem:[%s9 + $0x60] sm:$0xff]
    %v3684 = vld [vmem:[%s9 + $0x68] sm:$0xff]
    %v3685 = vld [vmem:[%s9 + $0x70] sm:$0xff]
    %v3686 = vld [vmem:[%s9 + $0x78] sm:$0xff]
    %v3687 = vld [vmem:[#allocation17] sm:$0x1]
    %v3689 = vlaneseq
    %v3690 = vshrl.u32 %v3689, 7
    %v3691 = vsub.s32 0, %v3690
    %v3692 = vrot.slane %v3687, %v3691
    %3694 = vmatprep.subr.mxu0 0.0
    %3695 = vmatpush1.msra.mxu0 %v3671
    %3696 = vmatprep.subr.mxu0 0.0
    %3697 = vmatpush1.msra.mxu0 %v3672
    %3698 = vmatprep.subr.mxu0 0.0
    %3699 = vmatpush1.msra.mxu0 %v3673
    %3700 = vmatprep.subr.mxu0 0.0
    %3701 = vmatpush1.msra.mxu0 %v3674
    %3702 = vmatprep.subr.mxu0 0.0
    %3703 = vmatpush1.msra.mxu0 %v3675
    %3704 = vmatprep.subr.mxu0 0.0
    %3705 = vmatpush1.msra.mxu0 %v3676
    %3706 = vmatprep.subr.mxu0 0.0
    %3707 = vmatpush1.msra.mxu0 %v3677
    %3708 = vmatprep.subr.mxu0 0.0
    %3709 = vmatpush1.msra.mxu0 %v3678
    %3710 = vmatprep.subr.mxu0 0.0
    %3711 = vmatpush1.msra.mxu0 %v3679
    %3712 = vmatprep.subr.mxu0 0.0
    %3713 = vmatpush1.msra.mxu0 %v3680
    %3714 = vmatprep.subr.mxu0 0.0
    %3715 = vmatpush1.msra.mxu0 %v3681
    %3716 = vmatprep.subr.mxu0 0.0
    %3717 = vmatpush1.msra.mxu0 %v3682
    %3718 = vmatprep.subr.mxu0 0.0
    %3719 = vmatpush1.msra.mxu0 %v3683
    %3720 = vmatprep.subr.mxu0 0.0
    %3721 = vmatpush1.msra.mxu0 %v3684
    %3722 = vmatprep.subr.mxu0 0.0
    %3723 = vmatpush1.msra.mxu0 %v3685
    %3724 = vmatprep.subr.mxu0 0.0
    %3725 = vmatpush1.msra.mxu0 %v3686
    %3726 = vmatprep.subr.mxu0 0.0
    %3727 = vmatpush1.msra.mxu0 0.0
    %3728 = vmatprep.subr.mxu0 0.0
    %3729 = vmatpush1.msra.mxu0 0.0
    %3730 = vmatprep.subr.mxu0 0.0
    %3731 = vmatpush1.msra.mxu0 0.0
    %3732 = vmatprep.subr.mxu0 0.0
    %3733 = vmatpush1.msra.mxu0 0.0
    %3734 = vmatprep.subr.mxu0 0.0
    %3735 = vmatpush1.msra.mxu0 0.0
    %3736 = vmatprep.subr.mxu0 0.0
    %3737 = vmatpush1.msra.mxu0 0.0
    %3738 = vmatprep.subr.mxu0 0.0
    %3739 = vmatpush1.msra.mxu0 0.0
    %3740 = vmatprep.subr.mxu0 0.0
    %3741 = vmatpush1.msra.mxu0 0.0
    %3742 = vmatprep.subr.mxu0 0.0
    %3743 = vmatpush1.msra.mxu0 0.0
    %3744 = vmatprep.subr.mxu0 0.0
    %3745 = vmatpush1.msra.mxu0 0.0
    %3746 = vmatprep.subr.mxu0 0.0
    %3747 = vmatpush1.msra.mxu0 0.0
    %3748 = vmatprep.subr.mxu0 0.0
    %3749 = vmatpush1.msra.mxu0 0.0
    %3750 = vmatprep.subr.mxu0 0.0
    %3751 = vmatpush1.msra.mxu0 0.0
    %3752 = vmatprep.subr.mxu0 0.0
    %3753 = vmatpush1.msra.mxu0 0.0
    %3754 = vmatprep.subr.mxu0 0.0
    %3755 = vmatpush1.msra.mxu0 0.0
    %3756 = vmatprep.subr.mxu0 0.0
    %3757 = vmatpush1.msra.mxu0 0.0
    %3758 = vmatprep.mubr.f32.mxu0 0.0
    %3759 = vmatmul.mubr.f32.gmra.mrb[0].mxu0 %v3669
    %v3760 = vpop.f32.mrb[0].mxu0
    %v3761 = vadd.f32 %v3692, %v3760
    %v3762 = vpop.f32.mrb[0].mxu0
    %3763 = vmatprep.mubr.f32.mxu0 0.0
    %3764 = vmatmul.mubr.f32.gmra.mrb[0].mxu0 %v3670
    %v3765 = vpop.f32.mrb[0].mxu0
    %v3766 = vadd.f32 %v3692, %v3765
    %v3767 = vpop.f32.mrb[0].mxu0
    %3768 = vdwg.mxu0
    %v3769 = vadd.f32 %v3523, %v3761
    %v3770 = vadd.f32 %v3524, %v3766
    %v3771 = vld [vmem:[#allocation22] sm:$0x1]
    %v3772 = vld [vmem:[#allocation23] sm:$0x1]
    %v3773 = vsel %vm1593, %v3769, 0.0
    %3774 = vadd.xlane.f32.xlu0 %v3773
    %v3775 = vpop.xlane.xlu0 %3774
    %v3776 = vsel %vm1593, %v3770, 0.0
    %3777 = vadd.xlane.f32.xlu0 %v3776
    %v3778 = vpop.xlane.xlu0 %3777
    %v3779 = vmul.f32 %v3775, %v3488
    %v3780 = vmul.f32 %v3778, %v3488
    %v3781 = vsub.f32 %v3769, %v3779
    %v3782 = vsub.f32 %v3770, %v3780
    %v3783 = vmul.f32 %v3781, %v3781
    %v3784 = vmul.f32 %v3782, %v3782
    %v3785 = vsel %vm1593, %v3783, 0.0
    %3786 = vadd.xlane.f32.xlu0 %v3785
    %v3787 = vpop.xlane.xlu0 %3786
    %v3788 = vsel %vm1593, %v3784, 0.0
    %3789 = vadd.xlane.f32.xlu0 %v3788
    %v3790 = vpop.xlane.xlu0 %3789
    %v3791 = vmul.f32 %v3787, %v3488
    %v3792 = vmul.f32 %v3790, %v3488
    %v3793 = vadd.f32 %v3791, 1e-05
    %v3794 = vadd.f32 %v3792, 1e-05
    %v3795 = vrsqrt.pop %v3793
    %v3796 = vrsqrt.pop %v3794
    %v3797 = vmul.f32 %v3781, %v3795
    %v3798 = vmul.f32 %v3782, %v3796
    %v3800 = vlaneseq
    %v3801 = vshrl.u32 %v3800, 7
    %v3802 = vsub.s32 0, %v3801
    %v3803 = vrot.slane %v3771, %v3802
    %v3805 = vmul.f32 %v3797, %v3803
    %v3806 = vmul.f32 %v3798, %v3803
    %v3808 = vlaneseq
    %v3809 = vshrl.u32 %v3808, 7
    %v3810 = vsub.s32 0, %v3809
    %v3811 = vrot.slane %v3772, %v3810
    %v3813 = vadd.f32 %v3805, %v3811
    %v3814 = vadd.f32 %v3806, %v3811
    %3815 = vst.msk [vmem:[#allocation25] sm:$0xff] %vm1593, %v3813
    %s3816 = scalar_lea.vmem [#allocation25], 8
    %3817 = vst.msk [vmem:[%s3816] sm:$0xff] %vm1593, %v3814
    // Predicated region
    $region118: #{tpu_custom_call.1} parent=1 // pred_check
      _
    $region119: #{tpu_custom_call.1} parent=1 // pred_check_branch
      %3819 = sbr.rel (0) target = $region121
    $region120: #{tpu_custom_call.1} parent=1 // pred_region
      %s3821 = ssub.s32 256, 256
      %3822 = vsyncadd [#allocation4], %s3821
      %s3823 = sshll.u32 [#allocation25], 4
      %s3824 = int_to_ptr.vmem [resolvable:$true] %s3823
      %3829 = dma.vmem_to_hbm [thread:$0]  %s3824, 256, %s15, [#allocation4], 128, 128, 8
    $region121: #{tpu_custom_call.1} parent=1 // pred_fallthru
      _
    // Predicated region
    $region122: #{tpu_custom_call.1} parent=1 // pred_check
      _
    $region123: #{tpu_custom_call.1} parent=1 // pred_check_branch
      %3831 = sbr.rel (0) target = $region125
    $region124: #{tpu_custom_call.1} parent=1 // pred_region
      %3832 = dma.done [#allocation4], 256
    $region125: #{tpu_custom_call.1} parent=1 // pred_fallthru
      _
    %3833 = vsyncpa [#allocation3], 1
    %3834 = vsyncpa [#allocation6], 1
    %3835 = vsyncpa [#allocation9], 1
    %3836 = vsyncpa [#allocation12], 1
    %3837 = vsyncpa [#allocation15], 1
    %3838 = vsyncpa [#allocation18], 1
    %3839 = vsyncpa [#allocation21], 1
    %3840 = vsyncpa [#allocation24], 1
    %3841 = vsyncpa [#allocation4], 1

</llo_original>
